<compile_context>
chip_gen: v6e
topology: v6e:2x2x1
jax: 0.10.0
libtpu: 0.0.40
codegen_flags: <defaults>
</compile_context>

<pallas_src>
import jax
import jax.numpy as jnp
import numpy as np
from jax.experimental import pallas as pl
from jax.experimental.pallas import tpu as pltpu

# ----- model hyper-parameters (small, consistent with Fourier.__init__) -----
FOURIER_ORDER = 4
HIDDEN = 32
NUM_HIDDEN_LAYERS = 3
INIT_SIZE = FOURIER_ORDER * 4 + 2          # 18 fourier features fed to SkipConn
CONCAT = 2 * HIDDEN + INIT_SIZE            # 82 = cur ++ prev ++ fourier
LEAKY_SLOPE = 0.01                         # torch.nn.LeakyReLU default


def _leaky_relu(v):
    # max(v, 0.01*v) == LeakyReLU(v) for slope < 1
    return jnp.maximum(v, LEAKY_SLOPE * v)


def _fourier_features(x):
    """x: (B, 2) -> (B, INIT_SIZE), same feature ordering as the torch module."""
    orders = jnp.arange(1, FOURIER_ORDER + 1, dtype=x.dtype)     # (order,)
    xe = x[:, :, None]                                           # (B, 2, 1)
    ff = jnp.concatenate(
        [jnp.sin(orders * xe), jnp.cos(orders * xe), xe], axis=-1)  # (B, 2, 9)
    return ff.reshape(x.shape[0], -1)                            # (B, 18)


# --------------------------------- kernel ----------------------------------
def fourier_kernel(t_ref, w_in_ref, b_in_ref, w_h_ref, b_h_ref,
                   w_out_ref, b_out_ref, o_ref):
    # t_ref: (INIT_SIZE, tb) fourier features, batch on the lane axis.
    t = t_ref[...]

    # inLayer + LeakyReLU:  (H, INIT) @ (INIT, tb) -> (H, tb)
    cur = _leaky_relu(
        jnp.dot(w_in_ref[...], t, preferred_element_type=jnp.float32)
        + b_in_ref[...])
    prev = jnp.zeros_like(cur)        # torch's empty `prev` (unused at layer 0)

    # hidden stack with skip connections, concat-free (split matmuls).
    for l in range(NUM_HIDDEN_LAYERS):
        w = w_h_ref[l]                                           # (H, CONCAT)
        z = jnp.dot(w[:, :HIDDEN], cur, preferred_element_type=jnp.float32)
        if l > 0:                     # layer 0 has no `prev` input in torch
            z = z + jnp.dot(w[:, HIDDEN:2 * HIDDEN], prev,
                            preferred_element_type=jnp.float32)
        z = z + jnp.dot(w[:, 2 * HIDDEN:], t,
                        preferred_element_type=jnp.float32)
        z = z + b_h_ref[l]
        prev, cur = cur, _leaky_relu(z)

    # outLayer -> (tanh + 1)/2 ; output is a lane-dense (1, tb) slab.
    wo = w_out_ref[...]                                          # (1, CONCAT)
    y = (jnp.dot(wo[:, :HIDDEN], cur, preferred_element_type=jnp.float32)
         + jnp.dot(wo[:, HIDDEN:2 * HIDDEN], prev,
                   preferred_element_type=jnp.float32)
         + jnp.dot(wo[:, 2 * HIDDEN:], t, preferred_element_type=jnp.float32)
         + b_out_ref[...])
    o_ref[...] = ((jnp.tanh(y) + 1.0) * 0.5).astype(o_ref.dtype)


# --------------------------------- wrapper ---------------------------------
def fourier_forward(x, params, *, tb=1024):
    """x: (B, 2) batch-major (like torch). Returns (B, 1)."""
    w_in, b_in, w_h, b_h, w_out, b_out = params
    b = x.shape[0]
    tb = min(tb, b)
    assert b % tb == 0, "batch must be divisible by the tile size"
    assert tb == b or tb % 128 == 0, "tile must be a multiple of 128 lanes"

    # Tiny Fourier feature map done in the wrapper; fed feature-major so the
    # batch lands on the 128-lane axis inside the kernel.
    t = _fourier_features(x).T                                   # (INIT_SIZE, B)

    out = pl.pallas_call(
        fourier_kernel,
        out_shape=jax.ShapeDtypeStruct((1, b), x.dtype),
        grid=(b // tb,),
        in_specs=[
            pl.BlockSpec((INIT_SIZE, tb), lambda i: (0, i)),
            pl.BlockSpec(w_in.shape, lambda i: (0, 0)),
            pl.BlockSpec(b_in.shape, lambda i: (0, 0)),
            pl.BlockSpec(w_h.shape, lambda i: (0, 0, 0)),
            pl.BlockSpec(b_h.shape, lambda i: (0, 0, 0)),
            pl.BlockSpec(w_out.shape, lambda i: (0, 0)),
            pl.BlockSpec(b_out.shape, lambda i: (0, 0)),
        ],
        out_specs=pl.BlockSpec((1, tb), lambda i: (0, i)),
        compiler_params=pltpu.CompilerParams(
            dimension_semantics=("parallel",)),  # grid>=2 shards across v7x TCs
    )(t, w_in, b_in, w_h, b_h, w_out, b_out)
    return out.reshape(b, 1)


# ------------------------------ param setup --------------------------------
def init_params(key):
    # torch-native (out, in) weights, (out, 1) column biases.
    def lin(k, fan_in, fan_out):
        kw, kb = jax.random.split(k)
        bound = 1.0 / np.sqrt(fan_in)
        w = jax.random.uniform(kw, (fan_out, fan_in), jnp.float32, -bound, bound)
        b = jax.random.uniform(kb, (fan_out, 1), jnp.float32, -bound, bound)
        return w, b

    ks = jax.random.split(key, NUM_HIDDEN_LAYERS + 2)
    w_in, b_in = lin(ks[0], INIT_SIZE, HIDDEN)

    w_hs, b_hs = [], []
    for l in range(NUM_HIDDEN_LAYERS):
        fan_in = HIDDEN + INIT_SIZE if l == 0 else CONCAT
        w, b = lin(ks[1 + l], fan_in, HIDDEN)
        if l == 0:
            # Layer 0 sees no `prev` in torch (empty cat). Pad its weight with
            # zero columns in the prev slot so all layers share (HIDDEN, CONCAT);
            # the kernel statically skips the prev matmul at l == 0.
            w = jnp.concatenate(
                [w[:, :HIDDEN], jnp.zeros((HIDDEN, HIDDEN), jnp.float32),
                 w[:, HIDDEN:]], axis=1)
        w_hs.append(w)
        b_hs.append(b)
    w_h = jnp.stack(w_hs)                 # (L, HIDDEN, CONCAT)
    b_h = jnp.stack(b_hs)                 # (L, HIDDEN, 1)

    w_out, b_out = lin(ks[-1], CONCAT, 1)
    return w_in, b_in, w_h, b_h, w_out, b_out


# ----------------------------- pure-JAX reference --------------------------
def fourier_reference(x, params):
    """Mirror of the torch forward (batch-major, real concatenation)."""
    w_in, b_in, w_h, b_h, w_out, b_out = params
    t = _fourier_features(x)                                      # (B, 18)
    cur = _leaky_relu(t @ w_in.T + b_in[:, 0])
    prev = jnp.zeros((x.shape[0], 0), dtype=x.dtype)              # empty prev
    for l in range(NUM_HIDDEN_LAYERS):
        if l == 0:
            w = jnp.concatenate(
                [w_h[0, :, :HIDDEN], w_h[0, :, 2 * HIDDEN:]], axis=1)
        else:
            w = w_h[l]
        combined = jnp.concatenate([cur, prev, t], axis=1)
        prev, cur = cur, _leaky_relu(combined @ w.T + b_h[l][:, 0])
    combined = jnp.concatenate([cur, prev, t], axis=1)
    y = combined @ w_out.T + b_out[:, 0]
    return (jnp.tanh(y) + 1.0) / 2.0


if __name__ == "__main__":
    key = jax.random.PRNGKey(0)
    k_x, k_p = jax.random.split(key)

    batch = 2048            # 2 tiles of 1024 -> parallel grid on both v7x TCs
    x = jax.random.normal(k_x, (batch, 2), dtype=jnp.float32)
    params = init_params(k_p)

    out = jax.block_until_ready(fourier_forward(x, params, tb=1024))
    ref = fourier_reference(x, params)

    assert out.shape == (batch, 1)
    np.testing.assert_allclose(np.asarray(out), np.asarray(ref),
                               atol=2e-5, rtol=2e-5)
    print("KERNEL_OK")
</pallas_src>

<mosaic_0001>
module attributes {stable_mosaic.version = 11 : i64} {
  func.func @fourier_kernel(%arg0: i32, %arg1: memref<18x1024xf32, #tpu.memory_space<vmem>>, %arg2: memref<32x18xf32, #tpu.memory_space<vmem>>, %arg3: memref<32x1xf32, #tpu.memory_space<vmem>>, %arg4: memref<3x32x82xf32, #tpu.memory_space<vmem>>, %arg5: memref<3x32x1xf32, #tpu.memory_space<vmem>>, %arg6: memref<1x82xf32, #tpu.memory_space<vmem>>, %arg7: memref<1x1xf32, #tpu.memory_space<vmem>>, %arg8: memref<1x1024xf32, #tpu.memory_space<vmem>>) attributes {dimension_semantics = [#tpu.dimension_semantics<parallel>], iteration_bounds = array<i64: 2>, scalar_prefetch = 0 : i64, scratch_operands = 0 : i64, tpu.core_type = #tpu.core_type<tc>, window_params = [{transform_indices = @transform_0, window_bounds = array<i64: 18, 1024>}, {pipeline_mode = #tpu.pipeline_mode<synchronous>, transform_indices = @transform_1, window_bounds = array<i64: 32, 18>}, {pipeline_mode = #tpu.pipeline_mode<synchronous>, transform_indices = @transform_2, window_bounds = array<i64: 32, 1>}, {pipeline_mode = #tpu.pipeline_mode<synchronous>, transform_indices = @transform_3, window_bounds = array<i64: 3, 32, 82>}, {pipeline_mode = #tpu.pipeline_mode<synchronous>, transform_indices = @transform_4, window_bounds = array<i64: 3, 32, 1>}, {pipeline_mode = #tpu.pipeline_mode<synchronous>, transform_indices = @transform_5, window_bounds = array<i64: 1, 82>}, {pipeline_mode = #tpu.pipeline_mode<synchronous>, transform_indices = @transform_6, window_bounds = array<i64: 1, 1>}, {transform_indices = @transform_7, window_bounds = array<i64: 1, 1024>}]} {
    %c0 = arith.constant 0 : index
    %c0_0 = arith.constant 0 : index
    %0 = vector.load %arg1[%c0, %c0_0] : memref<18x1024xf32, #tpu.memory_space<vmem>>, vector<18x1024xf32>
    %c0_1 = arith.constant 0 : index
    %c0_2 = arith.constant 0 : index
    %1 = vector.load %arg2[%c0_1, %c0_2] : memref<32x18xf32, #tpu.memory_space<vmem>>, vector<32x18xf32>
    %cst = arith.constant dense<0.000000e+00> : vector<32x1024xf32>
    %2 = tpu.matmul %1, %0, %cst {dimension_numbers = #tpu.dot_dimension_numbers<[1], [0], [0], [1], [0, 0, 1, 1], [], []>} : vector<32x18xf32>, vector<18x1024xf32>, vector<32x1024xf32> -> vector<32x1024xf32>
    %c0_3 = arith.constant 0 : index
    %c0_4 = arith.constant 0 : index
    %3 = vector.load %arg3[%c0_3, %c0_4] : memref<32x1xf32, #tpu.memory_space<vmem>>, vector<32x1xf32>
    %4 = vector.broadcast %3 : vector<32x1xf32> to vector<32x1024xf32>
    %5 = arith.addf %2, %4 : vector<32x1024xf32>
    %cst_5 = arith.constant 0.00999999977 : f32
    %6 = vector.broadcast %cst_5 : f32 to vector<32x1024xf32>
    %7 = arith.mulf %6, %5 : vector<32x1024xf32>
    %8 = arith.maximumf %5, %7 : vector<32x1024xf32>
    %c0_6 = arith.constant 0 : index
    %c0_7 = arith.constant 0 : index
    %c0_8 = arith.constant 0 : index
    %9 = vector.load %arg4[%c0_6, %c0_7, %c0_8] : memref<3x32x82xf32, #tpu.memory_space<vmem>>, vector<1x32x82xf32>
    %10 = vector.shape_cast %9 : vector<1x32x82xf32> to vector<32x82xf32>
    %11 = vector.extract_strided_slice %10 {offsets = [0, 0], sizes = [32, 32], strides = [1, 1]} : vector<32x82xf32> to vector<32x32xf32>
    %cst_9 = arith.constant dense<0.000000e+00> : vector<32x1024xf32>
    %12 = tpu.matmul %11, %8, %cst_9 {dimension_numbers = #tpu.dot_dimension_numbers<[1], [0], [0], [1], [0, 0, 1, 1], [], []>} : vector<32x32xf32>, vector<32x1024xf32>, vector<32x1024xf32> -> vector<32x1024xf32>
    %13 = vector.extract_strided_slice %10 {offsets = [0, 64], sizes = [32, 18], strides = [1, 1]} : vector<32x82xf32> to vector<32x18xf32>
    %cst_10 = arith.constant dense<0.000000e+00> : vector<32x1024xf32>
    %14 = tpu.matmul %13, %0, %cst_10 {dimension_numbers = #tpu.dot_dimension_numbers<[1], [0], [0], [1], [0, 0, 1, 1], [], []>} : vector<32x18xf32>, vector<18x1024xf32>, vector<32x1024xf32> -> vector<32x1024xf32>
    %15 = arith.addf %12, %14 : vector<32x1024xf32>
    %c0_11 = arith.constant 0 : index
    %c0_12 = arith.constant 0 : index
    %c0_13 = arith.constant 0 : index
    %16 = vector.load %arg5[%c0_11, %c0_12, %c0_13] : memref<3x32x1xf32, #tpu.memory_space<vmem>>, vector<1x32x1xf32>
    %17 = vector.shape_cast %16 : vector<1x32x1xf32> to vector<32x1xf32>
    %18 = vector.broadcast %17 : vector<32x1xf32> to vector<32x1024xf32>
    %19 = arith.addf %15, %18 : vector<32x1024xf32>
    %cst_14 = arith.constant 0.00999999977 : f32
    %20 = vector.broadcast %cst_14 : f32 to vector<32x1024xf32>
    %21 = arith.mulf %20, %19 : vector<32x1024xf32>
    %22 = arith.maximumf %19, %21 : vector<32x1024xf32>
    %c1 = arith.constant 1 : index
    %c0_15 = arith.constant 0 : index
    %c0_16 = arith.constant 0 : index
    %23 = vector.load %arg4[%c1, %c0_15, %c0_16] : memref<3x32x82xf32, #tpu.memory_space<vmem>>, vector<1x32x82xf32>
    %24 = vector.shape_cast %23 : vector<1x32x82xf32> to vector<32x82xf32>
    %25 = vector.extract_strided_slice %24 {offsets = [0, 0], sizes = [32, 32], strides = [1, 1]} : vector<32x82xf32> to vector<32x32xf32>
    %cst_17 = arith.constant dense<0.000000e+00> : vector<32x1024xf32>
    %26 = tpu.matmul %25, %22, %cst_17 {dimension_numbers = #tpu.dot_dimension_numbers<[1], [0], [0], [1], [0, 0, 1, 1], [], []>} : vector<32x32xf32>, vector<32x1024xf32>, vector<32x1024xf32> -> vector<32x1024xf32>
    %27 = vector.extract_strided_slice %24 {offsets = [0, 32], sizes = [32, 32], strides = [1, 1]} : vector<32x82xf32> to vector<32x32xf32>
    %cst_18 = arith.constant dense<0.000000e+00> : vector<32x1024xf32>
    %28 = tpu.matmul %27, %8, %cst_18 {dimension_numbers = #tpu.dot_dimension_numbers<[1], [0], [0], [1], [0, 0, 1, 1], [], []>} : vector<32x32xf32>, vector<32x1024xf32>, vector<32x1024xf32> -> vector<32x1024xf32>
    %29 = arith.addf %26, %28 : vector<32x1024xf32>
    %30 = vector.extract_strided_slice %24 {offsets = [0, 64], sizes = [32, 18], strides = [1, 1]} : vector<32x82xf32> to vector<32x18xf32>
    %cst_19 = arith.constant dense<0.000000e+00> : vector<32x1024xf32>
    %31 = tpu.matmul %30, %0, %cst_19 {dimension_numbers = #tpu.dot_dimension_numbers<[1], [0], [0], [1], [0, 0, 1, 1], [], []>} : vector<32x18xf32>, vector<18x1024xf32>, vector<32x1024xf32> -> vector<32x1024xf32>
    %32 = arith.addf %29, %31 : vector<32x1024xf32>
    %c1_20 = arith.constant 1 : index
    %c0_21 = arith.constant 0 : index
    %c0_22 = arith.constant 0 : index
    %33 = vector.load %arg5[%c1_20, %c0_21, %c0_22] : memref<3x32x1xf32, #tpu.memory_space<vmem>>, vector<1x32x1xf32>
    %34 = vector.shape_cast %33 : vector<1x32x1xf32> to vector<32x1xf32>
    %35 = vector.broadcast %34 : vector<32x1xf32> to vector<32x1024xf32>
    %36 = arith.addf %32, %35 : vector<32x1024xf32>
    %cst_23 = arith.constant 0.00999999977 : f32
    %37 = vector.broadcast %cst_23 : f32 to vector<32x1024xf32>
    %38 = arith.mulf %37, %36 : vector<32x1024xf32>
    %39 = arith.maximumf %36, %38 : vector<32x1024xf32>
    %c2 = arith.constant 2 : index
    %c0_24 = arith.constant 0 : index
    %c0_25 = arith.constant 0 : index
    %40 = vector.load %arg4[%c2, %c0_24, %c0_25] : memref<3x32x82xf32, #tpu.memory_space<vmem>>, vector<1x32x82xf32>
    %41 = vector.shape_cast %40 : vector<1x32x82xf32> to vector<32x82xf32>
    %42 = vector.extract_strided_slice %41 {offsets = [0, 0], sizes = [32, 32], strides = [1, 1]} : vector<32x82xf32> to vector<32x32xf32>
    %cst_26 = arith.constant dense<0.000000e+00> : vector<32x1024xf32>
    %43 = tpu.matmul %42, %39, %cst_26 {dimension_numbers = #tpu.dot_dimension_numbers<[1], [0], [0], [1], [0, 0, 1, 1], [], []>} : vector<32x32xf32>, vector<32x1024xf32>, vector<32x1024xf32> -> vector<32x1024xf32>
    %44 = vector.extract_strided_slice %41 {offsets = [0, 32], sizes = [32, 32], strides = [1, 1]} : vector<32x82xf32> to vector<32x32xf32>
    %cst_27 = arith.constant dense<0.000000e+00> : vector<32x1024xf32>
    %45 = tpu.matmul %44, %22, %cst_27 {dimension_numbers = #tpu.dot_dimension_numbers<[1], [0], [0], [1], [0, 0, 1, 1], [], []>} : vector<32x32xf32>, vector<32x1024xf32>, vector<32x1024xf32> -> vector<32x1024xf32>
    %46 = arith.addf %43, %45 : vector<32x1024xf32>
    %47 = vector.extract_strided_slice %41 {offsets = [0, 64], sizes = [32, 18], strides = [1, 1]} : vector<32x82xf32> to vector<32x18xf32>
    %cst_28 = arith.constant dense<0.000000e+00> : vector<32x1024xf32>
    %48 = tpu.matmul %47, %0, %cst_28 {dimension_numbers = #tpu.dot_dimension_numbers<[1], [0], [0], [1], [0, 0, 1, 1], [], []>} : vector<32x18xf32>, vector<18x1024xf32>, vector<32x1024xf32> -> vector<32x1024xf32>
    %49 = arith.addf %46, %48 : vector<32x1024xf32>
    %c2_29 = arith.constant 2 : index
    %c0_30 = arith.constant 0 : index
    %c0_31 = arith.constant 0 : index
    %50 = vector.load %arg5[%c2_29, %c0_30, %c0_31] : memref<3x32x1xf32, #tpu.memory_space<vmem>>, vector<1x32x1xf32>
    %51 = vector.shape_cast %50 : vector<1x32x1xf32> to vector<32x1xf32>
    %52 = vector.broadcast %51 : vector<32x1xf32> to vector<32x1024xf32>
    %53 = arith.addf %49, %52 : vector<32x1024xf32>
    %cst_32 = arith.constant 0.00999999977 : f32
    %54 = vector.broadcast %cst_32 : f32 to vector<32x1024xf32>
    %55 = arith.mulf %54, %53 : vector<32x1024xf32>
    %56 = arith.maximumf %53, %55 : vector<32x1024xf32>
    %c0_33 = arith.constant 0 : index
    %c0_34 = arith.constant 0 : index
    %57 = vector.load %arg6[%c0_33, %c0_34] : memref<1x82xf32, #tpu.memory_space<vmem>>, vector<1x82xf32>
    %58 = vector.extract_strided_slice %57 {offsets = [0, 0], sizes = [1, 32], strides = [1, 1]} : vector<1x82xf32> to vector<1x32xf32>
    %cst_35 = arith.constant dense<0.000000e+00> : vector<1x1024xf32>
    %59 = tpu.matmul %58, %56, %cst_35 {dimension_numbers = #tpu.dot_dimension_numbers<[1], [0], [0], [1], [0, 0, 1, 1], [], []>} : vector<1x32xf32>, vector<32x1024xf32>, vector<1x1024xf32> -> vector<1x1024xf32>
    %60 = vector.extract_strided_slice %57 {offsets = [0, 32], sizes = [1, 32], strides = [1, 1]} : vector<1x82xf32> to vector<1x32xf32>
    %cst_36 = arith.constant dense<0.000000e+00> : vector<1x1024xf32>
    %61 = tpu.matmul %60, %39, %cst_36 {dimension_numbers = #tpu.dot_dimension_numbers<[1], [0], [0], [1], [0, 0, 1, 1], [], []>} : vector<1x32xf32>, vector<32x1024xf32>, vector<1x1024xf32> -> vector<1x1024xf32>
    %62 = arith.addf %59, %61 : vector<1x1024xf32>
    %63 = vector.extract_strided_slice %57 {offsets = [0, 64], sizes = [1, 18], strides = [1, 1]} : vector<1x82xf32> to vector<1x18xf32>
    %cst_37 = arith.constant dense<0.000000e+00> : vector<1x1024xf32>
    %64 = tpu.matmul %63, %0, %cst_37 {dimension_numbers = #tpu.dot_dimension_numbers<[1], [0], [0], [1], [0, 0, 1, 1], [], []>} : vector<1x18xf32>, vector<18x1024xf32>, vector<1x1024xf32> -> vector<1x1024xf32>
    %65 = arith.addf %62, %64 : vector<1x1024xf32>
    %c0_38 = arith.constant 0 : index
    %c0_39 = arith.constant 0 : index
    %66 = vector.load %arg7[%c0_38, %c0_39] : memref<1x1xf32, #tpu.memory_space<vmem>>, vector<1x1xf32>
    %67 = vector.broadcast %66 : vector<1x1xf32> to vector<1x1024xf32>
    %68 = arith.addf %65, %67 : vector<1x1024xf32>
    %69 = math.tanh %68 : vector<1x1024xf32>
    %cst_40 = arith.constant 1.000000e+00 : f32
    %70 = vector.broadcast %cst_40 : f32 to vector<1x1024xf32>
    %71 = arith.addf %69, %70 : vector<1x1024xf32>
    %cst_41 = arith.constant 5.000000e-01 : f32
    %72 = vector.broadcast %cst_41 : f32 to vector<1x1024xf32>
    %73 = arith.mulf %71, %72 : vector<1x1024xf32>
    %c0_42 = arith.constant 0 : index
    %c0_43 = arith.constant 0 : index
    %74 = vector.load %arg8[%c0_42, %c0_43] : memref<1x1024xf32, #tpu.memory_space<vmem>>, vector<1x1024xf32>
    tpu.vector_store %arg8[%c0_42, %c0_43], %73 {strides = array<i32>} : memref<1x1024xf32, #tpu.memory_space<vmem>>, vector<1x1024xf32>,
    return
  }
  func.func @transform_0(%arg0: i32) -> (i32, i32) {
    %c0_i32 = arith.constant 0 : i32
    %c0_i32_0 = arith.constant 0 : i32
    return %c0_i32, %arg0 : i32, i32
  }
  func.func @transform_1(%arg0: i32) -> (i32, i32) {
    %c0_i32 = arith.constant 0 : i32
    %c0_i32_0 = arith.constant 0 : i32
    %c0_i32_1 = arith.constant 0 : i32
    return %c0_i32, %c0_i32_0 : i32, i32
  }
  func.func @transform_2(%arg0: i32) -> (i32, i32) {
    %c0_i32 = arith.constant 0 : i32
    %c0_i32_0 = arith.constant 0 : i32
    %c0_i32_1 = arith.constant 0 : i32
    return %c0_i32, %c0_i32_0 : i32, i32
  }
  func.func @transform_3(%arg0: i32) -> (i32, i32, i32) {
    %c0_i32 = arith.constant 0 : i32
    %c0_i32_0 = arith.constant 0 : i32
    %c0_i32_1 = arith.constant 0 : i32
    %c0_i32_2 = arith.constant 0 : i32
    return %c0_i32, %c0_i32_0, %c0_i32_1 : i32, i32, i32
  }
  func.func @transform_4(%arg0: i32) -> (i32, i32, i32) {
    %c0_i32 = arith.constant 0 : i32
    %c0_i32_0 = arith.constant 0 : i32
    %c0_i32_1 = arith.constant 0 : i32
    %c0_i32_2 = arith.constant 0 : i32
    return %c0_i32, %c0_i32_0, %c0_i32_1 : i32, i32, i32
  }
  func.func @transform_5(%arg0: i32) -> (i32, i32) {
    %c0_i32 = arith.constant 0 : i32
    %c0_i32_0 = arith.constant 0 : i32
    %c0_i32_1 = arith.constant 0 : i32
    return %c0_i32, %c0_i32_0 : i32, i32
  }
  func.func @transform_6(%arg0: i32) -> (i32, i32) {
    %c0_i32 = arith.constant 0 : i32
    %c0_i32_0 = arith.constant 0 : i32
    %c0_i32_1 = arith.constant 0 : i32
    return %c0_i32, %c0_i32_0 : i32, i32
  }
  func.func @transform_7(%arg0: i32) -> (i32, i32) {
    %c0_i32 = arith.constant 0 : i32
    %c0_i32_0 = arith.constant 0 : i32
    return %c0_i32, %arg0 : i32, i32
  }
}

</mosaic_0001>

<llo_original>
// kernel: tpu_custom_call.1
$region0: #{tpu_custom_call.1}
  #allocation0 [shape = 'u32[]', space=smem, size = 0x4, offset = 0x4, fixed_abs, tag = 'smem constant byte address 0x4 - core index']
  #allocation1 [shape = 'u32[144,128]{1,0:T(1,128)}', space=vmem, size = 0x12000, scoped, tag = 'internal scratch']
  #allocation2 [shape = 'f32[1,1]{1,0:T(1,128)S(1)}', space=vmem, size = 0x200, scoped, tag = 'scoped memory for tpu_custom_call.1']
  %s0 = inlined_call_operand.hbm [shape: f32[18,2048], index: 0, kind: input, shape index: {}]
  %s1 = inlined_call_operand.vmem [shape: f32[32,18], index: 1, kind: input, shape index: {}]
  %s2 = inlined_call_operand.vmem [shape: f32[32,1], index: 2, kind: input, shape index: {}]
  %s3 = inlined_call_operand.vmem [shape: f32[3,32,82], index: 3, kind: input, shape index: {}]
  %s4 = inlined_call_operand.vmem [shape: f32[3,32,1], index: 4, kind: input, shape index: {}]
  %s5 = inlined_call_operand.vmem [shape: f32[1,82], index: 5, kind: input, shape index: {}]
  %s6 = inlined_call_operand.<no memory space> [shape: f32[1,1], index: 6, kind: input, shape index: {}]
  %s7 = inlined_call_operand.hbm [shape: f32[1,2048], index: 7, kind: output, shape index: {}]
  %s8 = sld [smem:[#allocation0]]
  $region65: #{tpu_custom_call.1} parent=0
    _
  %s10 = ssub.s32 1, %s8
  %s11 = scalar_select 0, %s10, %s8
  %v12 = vstv %s6
  %13 = vst [vmem:[#allocation2] sm:$0x1] %v12
  $region1: #{tpu_custom_call.1} parent=0
    #allocation3 [shape = 'u8[196608]{0}', space=vmem, size = 0x30000, scoped, tag = 'input window, operand 0']
    #allocation4 [shape = 's32[2]{0}', space=sflag, size = 0x8, scoped, tag = 'scoped memory for tpu_custom_call.1']
    #allocation5 [shape = 's32[2]{0}', space=sflag, size = 0x8, scoped, tag = 'scoped memory for tpu_custom_call.1']
    #allocation6 [shape = 'u8[8192]{0}', space=vmem, size = 0x2000, scoped, tag = 'output window, operand 0']
    %14 = vsyncpa [#allocation4], 0
    %s15 = scalar_lea.sflag [#allocation4], 1
    %16 = vsyncpa %s15, 0
    %17 = vsyncpa [#allocation5], 0
    %s18 = scalar_lea.sflag [#allocation5], 1
    %19 = vsyncpa %s18, 0
    loop: start=0, step=1, limit=4
    $region2: #{tpu_custom_call.1} parent=1 // loop_pre_header
      _
    $region3: #{tpu_custom_call.1} parent=1 // loop_header
      %s21 = sphi 0, %s25
      %p22 = scmp.ge.s32.totalorder %s21, 4
      %s31 = sphi 0, %s33
      %s34 = sphi 0, %s31
      %s35 = sphi 0, %s34
      %s51 = sphi 0, %s35
      %s55 = sphi 0, %s55
      %s57 = sphi 0, %s55
      %s58 = sphi 0, %s57
      %s72 = sphi 0, %s58
      %s76 = sphi 0, %s76
      %s78 = sphi 0, %s76
      %s79 = sphi 0, %s78
      %s93 = sphi 0, %s79
      %s97 = sphi 0, %s97
      %s99 = sphi 0, %s97
      %s100 = sphi 0, %s99
      %s114 = sphi 0, %s100
      %s118 = sphi 0, %s118
      %s120 = sphi 0, %s118
      %s121 = sphi 0, %s120
      %s135 = sphi 0, %s121
      %s139 = sphi 0, %s139
      %s141 = sphi 0, %s139
      %s142 = sphi 0, %s141
      %s156 = sphi 0, %s142
      %s160 = sphi 0, %s160
      %s162 = sphi 0, %s160
      %s163 = sphi 0, %s162
      %s177 = sphi 0, %s163
      %s183 = sphi 0, %s185
      %s186 = sphi 0, %s183
      %s187 = sphi 0, %s186
      %s203 = sphi 0, %s187
    $region4: #{tpu_custom_call.1} parent=1 // loop_header_branch
      %24 = sbr.rel (%p22) target = $region8
    $region5: #{tpu_custom_call.1} parent=1 // loop_body
      %s26 = ssub.s32 %s21, 1
      %s27 = ssub.s32 %s21, 2
      %s28 = sadd.s32 %s21, 1
      %s29 = ssub.s32 %s21, %s28
      %p30 = scmp.eq.s32.totalorder %s29, 0
      %s32 = sadd.s32 %s31, 1
      %s33 = scalar_select %p30, %s31, %s32
      %p36 = pneg %p30
      %p37 = scmp.eq.s32.totalorder %s21, 1
      %p38 = por %p36, %p37
      %p39 = scmp.ne.s32.totalorder %s31, %s34
      %p40 = scmp.eq.s32.totalorder %s21, 0
      %p41 = por %p39, %p40
      %p42 = scmp.ne.s32.totalorder %s31, %s34
      %p43 = scmp.eq.s32.totalorder %s26, 1
      %p44 = por %p42, %p43
      %p45 = scmp.ne.s32.totalorder %s34, %s35
      %p46 = scmp.eq.s32.totalorder %s26, 0
      %p47 = por %p45, %p46
      %p48 = scmp.ne.s32.totalorder %s34, %s35
      %p49 = scmp.eq.s32.totalorder %s27, 1
      %p50 = por %p48, %p49
      %p52 = scmp.ne.s32.totalorder %s35, %s51
      %p53 = scmp.eq.s32.totalorder %s27, 0
      %p54 = por %p52, %p53
      %s56 = sadd.s32 %s55, 1
      %p59 = scmp.eq.s32.totalorder %s21, 1
      %p60 = scmp.ne.s32.totalorder %s55, %s57
      %p61 = scmp.eq.s32.totalorder %s21, 0
      %p62 = por %p60, %p61
      %p63 = scmp.ne.s32.totalorder %s55, %s57
      %p64 = scmp.eq.s32.totalorder %s26, 1
      %p65 = por %p63, %p64
      %p66 = scmp.ne.s32.totalorder %s57, %s58
      %p67 = scmp.eq.s32.totalorder %s26, 0
      %p68 = por %p66, %p67
      %p69 = scmp.ne.s32.totalorder %s57, %s58
      %p70 = scmp.eq.s32.totalorder %s27, 1
      %p71 = por %p69, %p70
      %p73 = scmp.ne.s32.totalorder %s58, %s72
      %p74 = scmp.eq.s32.totalorder %s27, 0
      %p75 = por %p73, %p74
      %s77 = sadd.s32 %s76, 1
      %p80 = scmp.eq.s32.totalorder %s21, 1
      %p81 = scmp.ne.s32.totalorder %s76, %s78
      %p82 = scmp.eq.s32.totalorder %s21, 0
      %p83 = por %p81, %p82
      %p84 = scmp.ne.s32.totalorder %s76, %s78
      %p85 = scmp.eq.s32.totalorder %s26, 1
      %p86 = por %p84, %p85
      %p87 = scmp.ne.s32.totalorder %s78, %s79
      %p88 = scmp.eq.s32.totalorder %s26, 0
      %p89 = por %p87, %p88
      %p90 = scmp.ne.s32.totalorder %s78, %s79
      %p91 = scmp.eq.s32.totalorder %s27, 1
      %p92 = por %p90, %p91
      %p94 = scmp.ne.s32.totalorder %s79, %s93
      %p95 = scmp.eq.s32.totalorder %s27, 0
      %p96 = por %p94, %p95
      %s98 = sadd.s32 %s97, 1
      %p101 = scmp.eq.s32.totalorder %s21, 1
      %p102 = scmp.ne.s32.totalorder %s97, %s99
      %p103 = scmp.eq.s32.totalorder %s21, 0
      %p104 = por %p102, %p103
      %p105 = scmp.ne.s32.totalorder %s97, %s99
      %p106 = scmp.eq.s32.totalorder %s26, 1
      %p107 = por %p105, %p106
      %p108 = scmp.ne.s32.totalorder %s99, %s100
      %p109 = scmp.eq.s32.totalorder %s26, 0
      %p110 = por %p108, %p109
      %p111 = scmp.ne.s32.totalorder %s99, %s100
      %p112 = scmp.eq.s32.totalorder %s27, 1
      %p113 = por %p111, %p112
      %p115 = scmp.ne.s32.totalorder %s100, %s114
      %p116 = scmp.eq.s32.totalorder %s27, 0
      %p117 = por %p115, %p116
      %s119 = sadd.s32 %s118, 1
      %p122 = scmp.eq.s32.totalorder %s21, 1
      %p123 = scmp.ne.s32.totalorder %s118, %s120
      %p124 = scmp.eq.s32.totalorder %s21, 0
      %p125 = por %p123, %p124
      %p126 = scmp.ne.s32.totalorder %s118, %s120
      %p127 = scmp.eq.s32.totalorder %s26, 1
      %p128 = por %p126, %p127
      %p129 = scmp.ne.s32.totalorder %s120, %s121
      %p130 = scmp.eq.s32.totalorder %s26, 0
      %p131 = por %p129, %p130
      %p132 = scmp.ne.s32.totalorder %s120, %s121
      %p133 = scmp.eq.s32.totalorder %s27, 1
      %p134 = por %p132, %p133
      %p136 = scmp.ne.s32.totalorder %s121, %s135
      %p137 = scmp.eq.s32.totalorder %s27, 0
      %p138 = por %p136, %p137
      %s140 = sadd.s32 %s139, 1
      %p143 = scmp.eq.s32.totalorder %s21, 1
      %p144 = scmp.ne.s32.totalorder %s139, %s141
      %p145 = scmp.eq.s32.totalorder %s21, 0
      %p146 = por %p144, %p145
      %p147 = scmp.ne.s32.totalorder %s139, %s141
      %p148 = scmp.eq.s32.totalorder %s26, 1
      %p149 = por %p147, %p148
      %p150 = scmp.ne.s32.totalorder %s141, %s142
      %p151 = scmp.eq.s32.totalorder %s26, 0
      %p152 = por %p150, %p151
      %p153 = scmp.ne.s32.totalorder %s141, %s142
      %p154 = scmp.eq.s32.totalorder %s27, 1
      %p155 = por %p153, %p154
      %p157 = scmp.ne.s32.totalorder %s142, %s156
      %p158 = scmp.eq.s32.totalorder %s27, 0
      %p159 = por %p157, %p158
      %s161 = sadd.s32 %s160, 1
      %p164 = scmp.eq.s32.totalorder %s21, 1
      %p165 = scmp.ne.s32.totalorder %s160, %s162
      %p166 = scmp.eq.s32.totalorder %s21, 0
      %p167 = por %p165, %p166
      %p168 = scmp.ne.s32.totalorder %s160, %s162
      %p169 = scmp.eq.s32.totalorder %s26, 1
      %p170 = por %p168, %p169
      %p171 = scmp.ne.s32.totalorder %s162, %s163
      %p172 = scmp.eq.s32.totalorder %s26, 0
      %p173 = por %p171, %p172
      %p174 = scmp.ne.s32.totalorder %s162, %s163
      %p175 = scmp.eq.s32.totalorder %s27, 1
      %p176 = por %p174, %p175
      %p178 = scmp.ne.s32.totalorder %s163, %s177
      %p179 = scmp.eq.s32.totalorder %s27, 0
      %p180 = por %p178, %p179
      %s181 = ssub.s32 %s21, %s28
      %p182 = scmp.eq.s32.totalorder %s181, 0
      %s184 = sadd.s32 %s183, 1
      %s185 = scalar_select %p182, %s183, %s184
      %p188 = pneg %p182
      %p189 = scmp.eq.s32.totalorder %s21, 1
      %p190 = por %p188, %p189
      %p191 = scmp.ne.s32.totalorder %s183, %s186
      %p192 = scmp.eq.s32.totalorder %s21, 0
      %p193 = por %p191, %p192
      %p194 = scmp.ne.s32.totalorder %s183, %s186
      %p195 = scmp.eq.s32.totalorder %s26, 1
      %p196 = por %p194, %p195
      %p197 = scmp.ne.s32.totalorder %s186, %s187
      %p198 = scmp.eq.s32.totalorder %s26, 0
      %p199 = por %p197, %p198
      %p200 = scmp.ne.s32.totalorder %s186, %s187
      %p201 = scmp.eq.s32.totalorder %s27, 1
      %p202 = por %p200, %p201
      %p204 = scmp.ne.s32.totalorder %s187, %s203
      %p205 = scmp.eq.s32.totalorder %s27, 0
      %p206 = por %p204, %p205
      %p207 = scmp.le.s32.totalorder 1, %s21
      %p208 = scmp.lt.s32.totalorder %s21, 3
      %p209 = pnand %p207, %p208
      %p210 = pneg %p209
      // Predicated region
      $region9: #{tpu_custom_call.1} parent=5 // pred_check
        _
      $region10: #{tpu_custom_call.1} parent=5 // pred_check_branch
        %212 = sbr.rel (%p209) target = $region12
      $region11: #{tpu_custom_call.1} parent=5 // pred_region
        %s213 = ssub.s32 %s21, 1
        // Predicated region
        $region13: #{tpu_custom_call.1} parent=11 // pred_check
          %p214 = pneg %p68
        $region14: #{tpu_custom_call.1} parent=11 // pred_check_branch
          %216 = sbr.rel (%p214) target = $region16
        $region15: #{tpu_custom_call.1} parent=11 // pred_region
          _
        $region16: #{tpu_custom_call.1} parent=11 // pred_fallthru
          _
        // Predicated region
        $region17: #{tpu_custom_call.1} parent=11 // pred_check
          %p217 = pneg %p89
        $region18: #{tpu_custom_call.1} parent=11 // pred_check_branch
          %219 = sbr.rel (%p217) target = $region20
        $region19: #{tpu_custom_call.1} parent=11 // pred_region
          _
        $region20: #{tpu_custom_call.1} parent=11 // pred_fallthru
          _
        // Predicated region
        $region21: #{tpu_custom_call.1} parent=11 // pred_check
          %p220 = pneg %p110
        $region22: #{tpu_custom_call.1} parent=11 // pred_check_branch
          %222 = sbr.rel (%p220) target = $region24
        $region23: #{tpu_custom_call.1} parent=11 // pred_region
          _
        $region24: #{tpu_custom_call.1} parent=11 // pred_fallthru
          _
        // Predicated region
        $region25: #{tpu_custom_call.1} parent=11 // pred_check
          %p223 = pneg %p131
        $region26: #{tpu_custom_call.1} parent=11 // pred_check_branch
          %225 = sbr.rel (%p223) target = $region28
        $region27: #{tpu_custom_call.1} parent=11 // pred_region
          _
        $region28: #{tpu_custom_call.1} parent=11 // pred_fallthru
          _
        // Predicated region
        $region29: #{tpu_custom_call.1} parent=11 // pred_check
          %p226 = pneg %p152
        $region30: #{tpu_custom_call.1} parent=11 // pred_check_branch
          %228 = sbr.rel (%p226) target = $region32
        $region31: #{tpu_custom_call.1} parent=11 // pred_region
          _
        $region32: #{tpu_custom_call.1} parent=11 // pred_fallthru
          _
        // Predicated region
        $region33: #{tpu_custom_call.1} parent=11 // pred_check
          %p229 = pneg %p173
        $region34: #{tpu_custom_call.1} parent=11 // pred_check_branch
          %231 = sbr.rel (%p229) target = $region36
        $region35: #{tpu_custom_call.1} parent=11 // pred_region
          _
        $region36: #{tpu_custom_call.1} parent=11 // pred_fallthru
          _
      $region12: #{tpu_custom_call.1} parent=5 // pred_fallthru
        _
      %p232 = scmp.lt.s32.totalorder %s21, 2
      // Predicated region
      $region37: #{tpu_custom_call.1} parent=5 // pred_check
        %p233 = pneg %p232
      $region38: #{tpu_custom_call.1} parent=5 // pred_check_branch
        %235 = sbr.rel (%p233) target = $region40
      $region39: #{tpu_custom_call.1} parent=5 // pred_region
        // Predicated region
        $region41: #{tpu_custom_call.1} parent=39 // pred_check
          %p236 = pneg %p41
        $region42: #{tpu_custom_call.1} parent=39 // pred_check_branch
          %238 = sbr.rel (%p236) target = $region44
        $region43: #{tpu_custom_call.1} parent=39 // pred_region
          %s239 = sand.u32 %s31, 1
          %s240 = scalar_lea.sflag [#allocation4], %s239
          %s241 = sand.u32 %s31, 1
          %s242 = smul.addr %s241, 192
          %s243 = scalar_lea.vmem [#allocation3], %s242
          %s244 = smul.u32 8, %s21
          %s246 = ssub.s32 3072, 3072
          %247 = vsyncadd %s240, %s246
          %s248 = smul.addr %s244, 128
          %s249 = scalar_lea.hbm %s0, %s248
          %s250 = sshll.u32 %s243, 4
          %s251 = int_to_ptr.vmem [resolvable:$true] %s250
          %256 = dma.hbm_to_vmem [thread:$0]  %s249, 3072, %s251, %s240, 2048, 1024, 64
        $region44: #{tpu_custom_call.1} parent=39 // pred_fallthru
          _
      $region40: #{tpu_custom_call.1} parent=5 // pred_fallthru
        _
      %p257 = scmp.le.s32.totalorder 1, %s21
      %p258 = scmp.lt.s32.totalorder %s21, 3
      %p259 = pnand %p257, %p258
      %p260 = pneg %p259
      // Predicated region
      $region45: #{tpu_custom_call.1} parent=5 // pred_check
        _
      $region46: #{tpu_custom_call.1} parent=5 // pred_check_branch
        %262 = sbr.rel (%p259) target = $region48
      $region47: #{tpu_custom_call.1} parent=5 // pred_region
        %s263 = ssub.s32 %s21, 1
        %s264 = sand.u32 %s34, 1
        %s265 = scalar_lea.sflag [#allocation4], %s264
        %s266 = sand.u32 %s34, 1
        %s267 = smul.addr %s266, 192
        %s268 = scalar_lea.vmem [#allocation3], %s267
        // Predicated region
        $region49: #{tpu_custom_call.1} parent=47 // pred_check
          %p269 = pneg %p47
        $region50: #{tpu_custom_call.1} parent=47 // pred_check_branch
          %271 = sbr.rel (%p269) target = $region52
        $region51: #{tpu_custom_call.1} parent=47 // pred_region
          %272 = dma.done %s265, 3072
        $region52: #{tpu_custom_call.1} parent=47 // pred_fallthru
          _
        %s273 = sand.u32 %s34, 1
        %s274 = scalar_lea.sflag [#allocation4], %s273
        %s275 = sand.u32 %s34, 1
        %s276 = smul.addr %s275, 192
        %s277 = scalar_lea.vmem [#allocation3], %s276
        %p278 = pneg %p47
        %p279 = pneg %p44
        %p280 = pneg %p68
        %p281 = pneg %p65
        %p282 = pneg %p89
        %p283 = pneg %p86
        %p284 = pneg %p110
        %p285 = pneg %p107
        %p286 = pneg %p131
        %p287 = pneg %p128
        %p288 = pneg %p152
        %p289 = pneg %p149
        %p290 = pneg %p173
        %p291 = pneg %p170
        %p292 = pneg %p199
        %p293 = pneg %p196
        %s294 = sand.u32 %s186, 1
        %s295 = scalar_lea.sflag [#allocation5], %s294
        %s296 = sand.u32 %s186, 1
        %s297 = smul.addr %s296, 8
        %s298 = scalar_lea.vmem [#allocation6], %s297
        %s299 = smul.u32 8, %s26
        %s300 = smul.u32 8, %s26
        %v301 = vld [vmem:[%s268] sm:$0xff]
        %v302 = vld [vmem:[%s268 + $0x8] sm:$0xff]
        %v303 = vld [vmem:[%s268 + $0x10] sm:$0xff]
        %v304 = vld [vmem:[%s268 + $0x18] sm:$0xff]
        %v305 = vld [vmem:[%s268 + $0x20] sm:$0xff]
        %v306 = vld [vmem:[%s268 + $0x28] sm:$0xff]
        %v307 = vld [vmem:[%s268 + $0x30] sm:$0xff]
        %v308 = vld [vmem:[%s268 + $0x38] sm:$0xff]
        %v309 = vld [vmem:[%s268 + $0x40] sm:$0xff]
        %v310 = vld [vmem:[%s268 + $0x48] sm:$0xff]
        %v311 = vld [vmem:[%s268 + $0x50] sm:$0xff]
        %v312 = vld [vmem:[%s268 + $0x58] sm:$0xff]
        %v313 = vld [vmem:[%s268 + $0x60] sm:$0xff]
        %v314 = vld [vmem:[%s268 + $0x68] sm:$0xff]
        %v315 = vld [vmem:[%s268 + $0x70] sm:$0xff]
        %v316 = vld [vmem:[%s268 + $0x78] sm:$0xff]
        %v317 = vld [vmem:[%s268 + $0x80] sm:$0x3]
        %v318 = vld [vmem:[%s268 + $0x88] sm:$0x3]
        %v319 = vld [vmem:[%s268 + $0x90] sm:$0x3]
        %v320 = vld [vmem:[%s268 + $0x98] sm:$0x3]
        %v321 = vld [vmem:[%s268 + $0xa0] sm:$0x3]
        %v322 = vld [vmem:[%s268 + $0xa8] sm:$0x3]
        %v323 = vld [vmem:[%s268 + $0xb0] sm:$0x3]
        %v324 = vld [vmem:[%s268 + $0xb8] sm:$0x3]
        %v325 = vld [vmem:[%s1] sm:$0xff]
        %v326 = vld [vmem:[%s1 + $0x8] sm:$0xff]
        %v327 = vld [vmem:[%s1 + $0x10] sm:$0xff]
        %v328 = vld [vmem:[%s1 + $0x18] sm:$0xff]
        %v329 = vld [vmem:[%s2] sm:$0xff]
        %v330 = vld [vmem:[%s2 + $0x8] sm:$0xff]
        %v331 = vld [vmem:[%s2 + $0x10] sm:$0xff]
        %v332 = vld [vmem:[%s2 + $0x18] sm:$0xff]
        %334 = vset.pattern.permute.xlu0 0
        %335 = vperm.xlu0 %334, %v329
        %v336 = vpop.permute.xlu0 %335
        %339 = vset.pattern.permute.xlu0 0
        %340 = vperm.xlu0 %339, %v330
        %v341 = vpop.permute.xlu0 %340
        %344 = vset.pattern.permute.xlu0 0
        %345 = vperm.xlu0 %344, %v331
        %v346 = vpop.permute.xlu0 %345
        %349 = vset.pattern.permute.xlu0 0
        %350 = vperm.xlu0 %349, %v332
        %v351 = vpop.permute.xlu0 %350
        %vm353 = vcmask 146432
        %v355 = vsel %vm353, %v325, 0
        %v358 = vsel %vm353, %v326, 0
        %v361 = vsel %vm353, %v327, 0
        %v364 = vsel %vm353, %v328, 0
        %vm366 = vcmask 1041408
        %v368 = vsel %vm366, %v317, 0
        %v371 = vsel %vm366, %v318, 0
        %v374 = vsel %vm366, %v319, 0
        %v377 = vsel %vm366, %v320, 0
        %v380 = vsel %vm366, %v321, 0
        %v383 = vsel %vm366, %v322, 0
        %v386 = vsel %vm366, %v323, 0
        %v389 = vsel %vm366, %v324, 0
        %391 = vmatprep.subr.mxu0 0.0
        %392 = vmatpush1.msra.mxu0 0.0
        %393 = vmatprep.subr.mxu0 0.0
        %394 = vmatpush1.msra.mxu0 0.0
        %395 = vmatprep.subr.mxu0 0.0
        %396 = vmatpush1.msra.mxu0 0.0
        %397 = vmatprep.subr.mxu0 0.0
        %398 = vmatpush1.msra.mxu0 0.0
        %399 = vmatprep.subr.mxu0 0.0
        %400 = vmatpush1.msra.mxu0 0.0
        %401 = vmatprep.subr.mxu0 0.0
        %402 = vmatpush1.msra.mxu0 0.0
        %403 = vmatprep.subr.mxu0 0.0
        %404 = vmatpush1.msra.mxu0 0.0
        %405 = vmatprep.subr.mxu0 0.0
        %406 = vmatpush1.msra.mxu0 0.0
        %407 = vmatprep.subr.mxu0 0.0
        %408 = vmatpush1.msra.mxu0 0.0
        %409 = vmatprep.subr.mxu0 0.0
        %410 = vmatpush1.msra.mxu0 0.0
        %411 = vmatprep.subr.mxu0 0.0
        %412 = vmatpush1.msra.mxu0 0.0
        %413 = vmatprep.subr.mxu0 0.0
        %414 = vmatpush1.msra.mxu0 0.0
        %415 = vmatprep.subr.mxu0 0.0
        %416 = vmatpush1.msra.mxu0 0.0
        %417 = vmatprep.subr.mxu0 %v371
        %418 = vmatpush1.msra.mxu0 %v368
        %419 = vmatprep.subr.mxu0 %v310
        %420 = vmatpush1.msra.mxu0 %v309
        %421 = vmatprep.subr.mxu0 %v302
        %422 = vmatpush1.msra.mxu0 %v301
        %423 = vmatprep.subr.mxu0 0.0
        %424 = vmatpush2.msra.mxu0 0.0
        %425 = vmatprep.subr.mxu0 0.0
        %426 = vmatpush2.msra.mxu0 0.0
        %427 = vmatprep.subr.mxu0 0.0
        %428 = vmatpush2.msra.mxu0 0.0
        %429 = vmatprep.subr.mxu0 0.0
        %430 = vmatpush2.msra.mxu0 0.0
        %431 = vmatprep.subr.mxu0 0.0
        %432 = vmatpush2.msra.mxu0 0.0
        %433 = vmatprep.subr.mxu0 0.0
        %434 = vmatpush2.msra.mxu0 0.0
        %435 = vmatprep.subr.mxu0 0.0
        %436 = vmatpush2.msra.mxu0 0.0
        %437 = vmatprep.subr.mxu0 0.0
        %438 = vmatpush2.msra.mxu0 0.0
        %439 = vmatprep.subr.mxu0 0.0
        %440 = vmatpush2.msra.mxu0 0.0
        %441 = vmatprep.subr.mxu0 0.0
        %442 = vmatpush2.msra.mxu0 0.0
        %443 = vmatprep.subr.mxu0 0.0
        %444 = vmatpush2.msra.mxu0 0.0
        %445 = vmatprep.subr.mxu0 0.0
        %446 = vmatpush2.msra.mxu0 0.0
        %447 = vmatprep.subr.mxu0 0.0
        %448 = vmatpush2.msra.mxu0 0.0
        %449 = vmatprep.subr.mxu0 0.0
        %450 = vmatpush2.msra.mxu0 0.0
        %451 = vmatprep.subr.mxu0 0.0
        %452 = vmatpush2.msra.mxu0 0.0
        %453 = vmatprep.subr.mxu0 0.0
        %454 = vmatpush2.msra.mxu0 0.0
        %455 = vmatprep.mubr.f32.mxu0 0.0
        %456 = vmatmul.mubr.f32.gmra.mxu0 %v355
        %v457 = vpop.f32.mrf.mxu0
        %v458 = vadd.f32 %v336, %v457
        %v459 = vpop.f32.mrf.mxu0
        %v460 = vadd.f32 %v336, %v459
        %461 = vmatprep.mubr.f32.mxu0 0.0
        %462 = vmatmul.mubr.f32.gmra.mxu0 %v358
        %v463 = vpop.f32.mrf.mxu0
        %v464 = vadd.f32 %v341, %v463
        %v465 = vpop.f32.mrf.mxu0
        %v466 = vadd.f32 %v341, %v465
        %467 = vmatprep.mubr.f32.mxu0 0.0
        %468 = vmatmul.mubr.f32.gmra.mxu0 %v361
        %v469 = vpop.f32.mrf.mxu0
        %v470 = vadd.f32 %v346, %v469
        %v471 = vpop.f32.mrf.mxu0
        %v472 = vadd.f32 %v346, %v471
        %473 = vmatprep.mubr.f32.mxu0 0.0
        %474 = vmatmul.mubr.f32.gmra.mxu0 %v364
        %v475 = vpop.f32.mrf.mxu0
        %v476 = vadd.f32 %v351, %v475
        %v477 = vpop.f32.mrf.mxu0
        %v478 = vadd.f32 %v351, %v477
        %479 = vdwg.mxu0
        %480 = vmatprep.subr.mxu0 0.0
        %481 = vmatpush1.msra.mxu0 0.0
        %482 = vmatprep.subr.mxu0 0.0
        %483 = vmatpush1.msra.mxu0 0.0
        %484 = vmatprep.subr.mxu0 0.0
        %485 = vmatpush1.msra.mxu0 0.0
        %486 = vmatprep.subr.mxu0 0.0
        %487 = vmatpush1.msra.mxu0 0.0
        %488 = vmatprep.subr.mxu0 0.0
        %489 = vmatpush1.msra.mxu0 0.0
        %490 = vmatprep.subr.mxu0 0.0
        %491 = vmatpush1.msra.mxu0 0.0
        %492 = vmatprep.subr.mxu0 0.0
        %493 = vmatpush1.msra.mxu0 0.0
        %494 = vmatprep.subr.mxu0 0.0
        %495 = vmatpush1.msra.mxu0 0.0
        %496 = vmatprep.subr.mxu0 0.0
        %497 = vmatpush1.msra.mxu0 0.0
        %498 = vmatprep.subr.mxu0 0.0
        %499 = vmatpush1.msra.mxu0 0.0
        %500 = vmatprep.subr.mxu0 0.0
        %501 = vmatpush1.msra.mxu0 0.0
        %502 = vmatprep.subr.mxu0 0.0
        %503 = vmatpush1.msra.mxu0 0.0
        %504 = vmatprep.subr.mxu0 0.0
        %505 = vmatpush1.msra.mxu0 0.0
        %506 = vmatprep.subr.mxu0 %v377
        %507 = vmatpush1.msra.mxu0 %v374
        %508 = vmatprep.subr.mxu0 %v312
        %509 = vmatpush1.msra.mxu0 %v311
        %510 = vmatprep.subr.mxu0 %v304
        %511 = vmatpush1.msra.mxu0 %v303
        %512 = vmatprep.subr.mxu0 0.0
        %513 = vmatpush2.msra.mxu0 0.0
        %514 = vmatprep.subr.mxu0 0.0
        %515 = vmatpush2.msra.mxu0 0.0
        %516 = vmatprep.subr.mxu0 0.0
        %517 = vmatpush2.msra.mxu0 0.0
        %518 = vmatprep.subr.mxu0 0.0
        %519 = vmatpush2.msra.mxu0 0.0
        %520 = vmatprep.subr.mxu0 0.0
        %521 = vmatpush2.msra.mxu0 0.0
        %522 = vmatprep.subr.mxu0 0.0
        %523 = vmatpush2.msra.mxu0 0.0
        %524 = vmatprep.subr.mxu0 0.0
        %525 = vmatpush2.msra.mxu0 0.0
        %526 = vmatprep.subr.mxu0 0.0
        %527 = vmatpush2.msra.mxu0 0.0
        %528 = vmatprep.subr.mxu0 0.0
        %529 = vmatpush2.msra.mxu0 0.0
        %530 = vmatprep.subr.mxu0 0.0
        %531 = vmatpush2.msra.mxu0 0.0
        %532 = vmatprep.subr.mxu0 0.0
        %533 = vmatpush2.msra.mxu0 0.0
        %534 = vmatprep.subr.mxu0 0.0
        %535 = vmatpush2.msra.mxu0 0.0
        %536 = vmatprep.subr.mxu0 0.0
        %537 = vmatpush2.msra.mxu0 0.0
        %538 = vmatprep.subr.mxu0 0.0
        %539 = vmatpush2.msra.mxu0 0.0
        %540 = vmatprep.subr.mxu0 0.0
        %541 = vmatpush2.msra.mxu0 0.0
        %542 = vmatprep.subr.mxu0 0.0
        %543 = vmatpush2.msra.mxu0 0.0
        %544 = vmatprep.mubr.f32.mxu0 0.0
        %545 = vmatmul.mubr.f32.gmra.mxu0 %v355
        %v546 = vpop.f32.mrf.mxu0
        %v547 = vadd.f32 %v336, %v546
        %v548 = vpop.f32.mrf.mxu0
        %v549 = vadd.f32 %v336, %v548
        %550 = vmatprep.mubr.f32.mxu0 0.0
        %551 = vmatmul.mubr.f32.gmra.mxu0 %v358
        %v552 = vpop.f32.mrf.mxu0
        %v553 = vadd.f32 %v341, %v552
        %v554 = vpop.f32.mrf.mxu0
        %v555 = vadd.f32 %v341, %v554
        %556 = vmatprep.mubr.f32.mxu0 0.0
        %557 = vmatmul.mubr.f32.gmra.mxu0 %v361
        %v558 = vpop.f32.mrf.mxu0
        %v559 = vadd.f32 %v346, %v558
        %v560 = vpop.f32.mrf.mxu0
        %v561 = vadd.f32 %v346, %v560
        %562 = vmatprep.mubr.f32.mxu0 0.0
        %563 = vmatmul.mubr.f32.gmra.mxu0 %v364
        %v564 = vpop.f32.mrf.mxu0
        %v565 = vadd.f32 %v351, %v564
        %v566 = vpop.f32.mrf.mxu0
        %v567 = vadd.f32 %v351, %v566
        %568 = vdwg.mxu0
        %569 = vmatprep.subr.mxu0 0.0
        %570 = vmatpush1.msra.mxu0 0.0
        %571 = vmatprep.subr.mxu0 0.0
        %572 = vmatpush1.msra.mxu0 0.0
        %573 = vmatprep.subr.mxu0 0.0
        %574 = vmatpush1.msra.mxu0 0.0
        %575 = vmatprep.subr.mxu0 0.0
        %576 = vmatpush1.msra.mxu0 0.0
        %577 = vmatprep.subr.mxu0 0.0
        %578 = vmatpush1.msra.mxu0 0.0
        %579 = vmatprep.subr.mxu0 0.0
        %580 = vmatpush1.msra.mxu0 0.0
        %581 = vmatprep.subr.mxu0 0.0
        %582 = vmatpush1.msra.mxu0 0.0
        %583 = vmatprep.subr.mxu0 0.0
        %584 = vmatpush1.msra.mxu0 0.0
        %585 = vmatprep.subr.mxu0 0.0
        %586 = vmatpush1.msra.mxu0 0.0
        %587 = vmatprep.subr.mxu0 0.0
        %588 = vmatpush1.msra.mxu0 0.0
        %589 = vmatprep.subr.mxu0 0.0
        %590 = vmatpush1.msra.mxu0 0.0
        %591 = vmatprep.subr.mxu0 0.0
        %592 = vmatpush1.msra.mxu0 0.0
        %593 = vmatprep.subr.mxu0 0.0
        %594 = vmatpush1.msra.mxu0 0.0
        %595 = vmatprep.subr.mxu0 %v383
        %596 = vmatpush1.msra.mxu0 %v380
        %597 = vmatprep.subr.mxu0 %v314
        %598 = vmatpush1.msra.mxu0 %v313
        %599 = vmatprep.subr.mxu0 %v306
        %600 = vmatpush1.msra.mxu0 %v305
        %601 = vmatprep.subr.mxu0 0.0
        %602 = vmatpush2.msra.mxu0 0.0
        %603 = vmatprep.subr.mxu0 0.0
        %604 = vmatpush2.msra.mxu0 0.0
        %605 = vmatprep.subr.mxu0 0.0
        %606 = vmatpush2.msra.mxu0 0.0
        %607 = vmatprep.subr.mxu0 0.0
        %608 = vmatpush2.msra.mxu0 0.0
        %609 = vmatprep.subr.mxu0 0.0
        %610 = vmatpush2.msra.mxu0 0.0
        %611 = vmatprep.subr.mxu0 0.0
        %612 = vmatpush2.msra.mxu0 0.0
        %613 = vmatprep.subr.mxu0 0.0
        %614 = vmatpush2.msra.mxu0 0.0
        %615 = vmatprep.subr.mxu0 0.0
        %616 = vmatpush2.msra.mxu0 0.0
        %617 = vmatprep.subr.mxu0 0.0
        %618 = vmatpush2.msra.mxu0 0.0
        %619 = vmatprep.subr.mxu0 0.0
        %620 = vmatpush2.msra.mxu0 0.0
        %621 = vmatprep.subr.mxu0 0.0
        %622 = vmatpush2.msra.mxu0 0.0
        %623 = vmatprep.subr.mxu0 0.0
        %624 = vmatpush2.msra.mxu0 0.0
        %625 = vmatprep.subr.mxu0 0.0
        %626 = vmatpush2.msra.mxu0 0.0
        %627 = vmatprep.subr.mxu0 0.0
        %628 = vmatpush2.msra.mxu0 0.0
        %629 = vmatprep.subr.mxu0 0.0
        %630 = vmatpush2.msra.mxu0 0.0
        %631 = vmatprep.subr.mxu0 0.0
        %632 = vmatpush2.msra.mxu0 0.0
        %633 = vmatprep.mubr.f32.mxu0 0.0
        %634 = vmatmul.mubr.f32.gmra.mxu0 %v355
        %v635 = vpop.f32.mrf.mxu0
        %v636 = vadd.f32 %v336, %v635
        %v637 = vpop.f32.mrf.mxu0
        %v638 = vadd.f32 %v336, %v637
        %639 = vmatprep.mubr.f32.mxu0 0.0
        %640 = vmatmul.mubr.f32.gmra.mxu0 %v358
        %v641 = vpop.f32.mrf.mxu0
        %v642 = vadd.f32 %v341, %v641
        %v643 = vpop.f32.mrf.mxu0
        %v644 = vadd.f32 %v341, %v643
        %645 = vmatprep.mubr.f32.mxu0 0.0
        %646 = vmatmul.mubr.f32.gmra.mxu0 %v361
        %v647 = vpop.f32.mrf.mxu0
        %v648 = vadd.f32 %v346, %v647
        %v649 = vpop.f32.mrf.mxu0
        %v650 = vadd.f32 %v346, %v649
        %651 = vmatprep.mubr.f32.mxu0 0.0
        %652 = vmatmul.mubr.f32.gmra.mxu0 %v364
        %v653 = vpop.f32.mrf.mxu0
        %v654 = vadd.f32 %v351, %v653
        %v655 = vpop.f32.mrf.mxu0
        %v656 = vadd.f32 %v351, %v655
        %657 = vdwg.mxu0
        %658 = vmatprep.subr.mxu0 0.0
        %659 = vmatpush1.msra.mxu0 0.0
        %660 = vmatprep.subr.mxu0 0.0
        %661 = vmatpush1.msra.mxu0 0.0
        %662 = vmatprep.subr.mxu0 0.0
        %663 = vmatpush1.msra.mxu0 0.0
        %664 = vmatprep.subr.mxu0 0.0
        %665 = vmatpush1.msra.mxu0 0.0
        %666 = vmatprep.subr.mxu0 0.0
        %667 = vmatpush1.msra.mxu0 0.0
        %668 = vmatprep.subr.mxu0 0.0
        %669 = vmatpush1.msra.mxu0 0.0
        %670 = vmatprep.subr.mxu0 0.0
        %671 = vmatpush1.msra.mxu0 0.0
        %672 = vmatprep.subr.mxu0 0.0
        %673 = vmatpush1.msra.mxu0 0.0
        %674 = vmatprep.subr.mxu0 0.0
        %675 = vmatpush1.msra.mxu0 0.0
        %676 = vmatprep.subr.mxu0 0.0
        %677 = vmatpush1.msra.mxu0 0.0
        %678 = vmatprep.subr.mxu0 0.0
        %679 = vmatpush1.msra.mxu0 0.0
        %680 = vmatprep.subr.mxu0 0.0
        %681 = vmatpush1.msra.mxu0 0.0
        %682 = vmatprep.subr.mxu0 0.0
        %683 = vmatpush1.msra.mxu0 0.0
        %684 = vmatprep.subr.mxu0 %v389
        %685 = vmatpush1.msra.mxu0 %v386
        %686 = vmatprep.subr.mxu0 %v316
        %687 = vmatpush1.msra.mxu0 %v315
        %688 = vmatprep.subr.mxu0 %v308
        %689 = vmatpush1.msra.mxu0 %v307
        %690 = vmatprep.subr.mxu0 0.0
        %691 = vmatpush2.msra.mxu0 0.0
        %692 = vmatprep.subr.mxu0 0.0
        %693 = vmatpush2.msra.mxu0 0.0
        %694 = vmatprep.subr.mxu0 0.0
        %695 = vmatpush2.msra.mxu0 0.0
        %696 = vmatprep.subr.mxu0 0.0
        %697 = vmatpush2.msra.mxu0 0.0
        %698 = vmatprep.subr.mxu0 0.0
        %699 = vmatpush2.msra.mxu0 0.0
        %700 = vmatprep.subr.mxu0 0.0
        %701 = vmatpush2.msra.mxu0 0.0
        %702 = vmatprep.subr.mxu0 0.0
        %703 = vmatpush2.msra.mxu0 0.0
        %704 = vmatprep.subr.mxu0 0.0
        %705 = vmatpush2.msra.mxu0 0.0
        %706 = vmatprep.subr.mxu0 0.0
        %707 = vmatpush2.msra.mxu0 0.0
        %708 = vmatprep.subr.mxu0 0.0
        %709 = vmatpush2.msra.mxu0 0.0
        %710 = vmatprep.subr.mxu0 0.0
        %711 = vmatpush2.msra.mxu0 0.0
        %712 = vmatprep.subr.mxu0 0.0
        %713 = vmatpush2.msra.mxu0 0.0
        %714 = vmatprep.subr.mxu0 0.0
        %715 = vmatpush2.msra.mxu0 0.0
        %716 = vmatprep.subr.mxu0 0.0
        %717 = vmatpush2.msra.mxu0 0.0
        %718 = vmatprep.subr.mxu0 0.0
        %719 = vmatpush2.msra.mxu0 0.0
        %720 = vmatprep.subr.mxu0 0.0
        %721 = vmatpush2.msra.mxu0 0.0
        %722 = vmatprep.mubr.f32.mxu0 0.0
        %723 = vmatmul.mubr.f32.gmra.mxu0 %v355
        %v724 = vpop.f32.mrf.mxu0
        %v725 = vadd.f32 %v336, %v724
        %v726 = vpop.f32.mrf.mxu0
        %v727 = vadd.f32 %v336, %v726
        %728 = vmatprep.mubr.f32.mxu0 0.0
        %729 = vmatmul.mubr.f32.gmra.mxu0 %v358
        %v730 = vpop.f32.mrf.mxu0
        %v731 = vadd.f32 %v341, %v730
        %v732 = vpop.f32.mrf.mxu0
        %v733 = vadd.f32 %v341, %v732
        %734 = vmatprep.mubr.f32.mxu0 0.0
        %735 = vmatmul.mubr.f32.gmra.mxu0 %v361
        %v736 = vpop.f32.mrf.mxu0
        %v737 = vadd.f32 %v346, %v736
        %v738 = vpop.f32.mrf.mxu0
        %v739 = vadd.f32 %v346, %v738
        %740 = vmatprep.mubr.f32.mxu0 0.0
        %741 = vmatmul.mubr.f32.gmra.mxu0 %v364
        %v742 = vpop.f32.mrf.mxu0
        %v743 = vadd.f32 %v351, %v742
        %v744 = vpop.f32.mrf.mxu0
        %v745 = vadd.f32 %v351, %v744
        %746 = vdwg.mxu0
        %v747 = vmul.f32 %v458, 0.01
        %v748 = vmul.f32 %v460, 0.01
        %v749 = vmul.f32 %v547, 0.01
        %v750 = vmul.f32 %v549, 0.01
        %v751 = vmul.f32 %v636, 0.01
        %v752 = vmul.f32 %v638, 0.01
        %v753 = vmul.f32 %v725, 0.01
        %v754 = vmul.f32 %v727, 0.01
        %v755 = vmul.f32 %v464, 0.01
        %v756 = vmul.f32 %v466, 0.01
        %v757 = vmul.f32 %v553, 0.01
        %v758 = vmul.f32 %v555, 0.01
        %v759 = vmul.f32 %v642, 0.01
        %v760 = vmul.f32 %v644, 0.01
        %v761 = vmul.f32 %v731, 0.01
        %v762 = vmul.f32 %v733, 0.01
        %v763 = vmul.f32 %v470, 0.01
        %v764 = vmul.f32 %v472, 0.01
        %v765 = vmul.f32 %v559, 0.01
        %v766 = vmul.f32 %v561, 0.01
        %v767 = vmul.f32 %v648, 0.01
        %v768 = vmul.f32 %v650, 0.01
        %v769 = vmul.f32 %v737, 0.01
        %v770 = vmul.f32 %v739, 0.01
        %v771 = vmul.f32 %v476, 0.01
        %v772 = vmul.f32 %v478, 0.01
        %v773 = vmul.f32 %v565, 0.01
        %v774 = vmul.f32 %v567, 0.01
        %v775 = vmul.f32 %v654, 0.01
        %v776 = vmul.f32 %v656, 0.01
        %v777 = vmul.f32 %v743, 0.01
        %v778 = vmul.f32 %v745, 0.01
        %v779 = vmax.f32 %v458, %v747
        %v780 = vmax.f32 %v460, %v748
        %v781 = vmax.f32 %v547, %v749
        %v782 = vmax.f32 %v549, %v750
        %v783 = vmax.f32 %v636, %v751
        %v784 = vmax.f32 %v638, %v752
        %v785 = vmax.f32 %v725, %v753
        %v786 = vmax.f32 %v727, %v754
        %v787 = vmax.f32 %v464, %v755
        %v788 = vmax.f32 %v466, %v756
        %v789 = vmax.f32 %v553, %v757
        %v790 = vmax.f32 %v555, %v758
        %v791 = vmax.f32 %v642, %v759
        %v792 = vmax.f32 %v644, %v760
        %v793 = vmax.f32 %v731, %v761
        %v794 = vmax.f32 %v733, %v762
        %v795 = vmax.f32 %v470, %v763
        %v796 = vmax.f32 %v472, %v764
        %v797 = vmax.f32 %v559, %v765
        %v798 = vmax.f32 %v561, %v766
        %v799 = vmax.f32 %v648, %v767
        %v800 = vmax.f32 %v650, %v768
        %v801 = vmax.f32 %v737, %v769
        %v802 = vmax.f32 %v739, %v770
        %v803 = vmax.f32 %v476, %v771
        %v804 = vmax.f32 %v478, %v772
        %v805 = vmax.f32 %v565, %v773
        %v806 = vmax.f32 %v567, %v774
        %v807 = vmax.f32 %v654, %v775
        %v808 = vmax.f32 %v656, %v776
        %v809 = vmax.f32 %v743, %v777
        %v810 = vmax.f32 %v745, %v778
        %v811 = vld [vmem:[%s3] sm:$0xff]
        %v812 = vld [vmem:[%s3 + $0x8] sm:$0xff]
        %v813 = vld [vmem:[%s3 + $0x10] sm:$0xff]
        %v814 = vld [vmem:[%s3 + $0x18] sm:$0xff]
        %819 = vrot.lane.b32.xlu0 %v811, 64
        %v820 = vpop.permute.xlu0 %819
        %821 = vrot.lane.b32.xlu0 %v812, 64
        %v822 = vpop.permute.xlu0 %821
        %823 = vrot.lane.b32.xlu0 %v813, 64
        %v824 = vpop.permute.xlu0 %823
        %825 = vrot.lane.b32.xlu0 %v814, 64
        %v826 = vpop.permute.xlu0 %825
        %v827 = vsel %vm353, %v820, 0
        %v829 = vsel %vm353, %v822, 0
        %v831 = vsel %vm353, %v824, 0
        %v833 = vsel %vm353, %v826, 0
        %835 = vmatprep.subr.mxu0 0.0
        %836 = vmatpush1.msra.mxu0 0.0
        %837 = vmatprep.subr.mxu0 0.0
        %838 = vmatpush1.msra.mxu0 0.0
        %839 = vmatprep.subr.mxu0 0.0
        %840 = vmatpush1.msra.mxu0 0.0
        %841 = vmatprep.subr.mxu0 0.0
        %842 = vmatpush1.msra.mxu0 0.0
        %843 = vmatprep.subr.mxu0 0.0
        %844 = vmatpush1.msra.mxu0 0.0
        %845 = vmatprep.subr.mxu0 0.0
        %846 = vmatpush1.msra.mxu0 0.0
        %847 = vmatprep.subr.mxu0 0.0
        %848 = vmatpush1.msra.mxu0 0.0
        %849 = vmatprep.subr.mxu0 0.0
        %850 = vmatpush1.msra.mxu0 0.0
        %851 = vmatprep.subr.mxu0 0.0
        %852 = vmatpush1.msra.mxu0 0.0
        %853 = vmatprep.subr.mxu0 0.0
        %854 = vmatpush1.msra.mxu0 0.0
        %855 = vmatprep.subr.mxu0 0.0
        %856 = vmatpush1.msra.mxu0 0.0
        %857 = vmatprep.subr.mxu0 0.0
        %858 = vmatpush1.msra.mxu0 0.0
        %859 = vmatprep.subr.mxu0 0.0
        %860 = vmatpush1.msra.mxu0 0.0
        %861 = vmatprep.subr.mxu0 %v371
        %862 = vmatpush1.msra.mxu0 %v368
        %863 = vmatprep.subr.mxu0 %v310
        %864 = vmatpush1.msra.mxu0 %v309
        %865 = vmatprep.subr.mxu0 %v302
        %866 = vmatpush1.msra.mxu0 %v301
        %867 = vmatprep.subr.mxu0 0.0
        %868 = vmatpush2.msra.mxu0 0.0
        %869 = vmatprep.subr.mxu0 0.0
        %870 = vmatpush2.msra.mxu0 0.0
        %871 = vmatprep.subr.mxu0 0.0
        %872 = vmatpush2.msra.mxu0 0.0
        %873 = vmatprep.subr.mxu0 0.0
        %874 = vmatpush2.msra.mxu0 0.0
        %875 = vmatprep.subr.mxu0 0.0
        %876 = vmatpush2.msra.mxu0 0.0
        %877 = vmatprep.subr.mxu0 0.0
        %878 = vmatpush2.msra.mxu0 0.0
        %879 = vmatprep.subr.mxu0 0.0
        %880 = vmatpush2.msra.mxu0 0.0
        %881 = vmatprep.subr.mxu0 0.0
        %882 = vmatpush2.msra.mxu0 0.0
        %883 = vmatprep.subr.mxu0 0.0
        %884 = vmatpush2.msra.mxu0 0.0
        %885 = vmatprep.subr.mxu0 0.0
        %886 = vmatpush2.msra.mxu0 0.0
        %887 = vmatprep.subr.mxu0 0.0
        %888 = vmatpush2.msra.mxu0 0.0
        %889 = vmatprep.subr.mxu0 0.0
        %890 = vmatpush2.msra.mxu0 0.0
        %891 = vmatprep.subr.mxu0 0.0
        %892 = vmatpush2.msra.mxu0 0.0
        %893 = vmatprep.subr.mxu0 0.0
        %894 = vmatpush2.msra.mxu0 0.0
        %895 = vmatprep.subr.mxu0 0.0
        %896 = vmatpush2.msra.mxu0 0.0
        %897 = vmatprep.subr.mxu0 0.0
        %898 = vmatpush2.msra.mxu0 0.0
        %899 = vmatprep.mubr.f32.mxu0 0.0
        %900 = vmatmul.mubr.f32.gmra.mxu0 %v827
        %v901 = vpop.f32.mrf.mxu0
        %v902 = vadd.f32 0.0, %v901
        %v903 = vpop.f32.mrf.mxu0
        %v904 = vadd.f32 0.0, %v903
        %905 = vmatprep.mubr.f32.mxu0 0.0
        %906 = vmatmul.mubr.f32.gmra.mxu0 %v829
        %v907 = vpop.f32.mrf.mxu0
        %v908 = vadd.f32 0.0, %v907
        %v909 = vpop.f32.mrf.mxu0
        %v910 = vadd.f32 0.0, %v909
        %911 = vmatprep.mubr.f32.mxu0 0.0
        %912 = vmatmul.mubr.f32.gmra.mxu0 %v831
        %v913 = vpop.f32.mrf.mxu0
        %v914 = vadd.f32 0.0, %v913
        %v915 = vpop.f32.mrf.mxu0
        %v916 = vadd.f32 0.0, %v915
        %917 = vmatprep.mubr.f32.mxu0 0.0
        %918 = vmatmul.mubr.f32.gmra.mxu0 %v833
        %v919 = vpop.f32.mrf.mxu0
        %v920 = vadd.f32 0.0, %v919
        %v921 = vpop.f32.mrf.mxu0
        %v922 = vadd.f32 0.0, %v921
        %923 = vdwg.mxu0
        %924 = vmatprep.subr.mxu0 0.0
        %925 = vmatpush1.msra.mxu0 0.0
        %926 = vmatprep.subr.mxu0 0.0
        %927 = vmatpush1.msra.mxu0 0.0
        %928 = vmatprep.subr.mxu0 0.0
        %929 = vmatpush1.msra.mxu0 0.0
        %930 = vmatprep.subr.mxu0 0.0
        %931 = vmatpush1.msra.mxu0 0.0
        %932 = vmatprep.subr.mxu0 0.0
        %933 = vmatpush1.msra.mxu0 0.0
        %934 = vmatprep.subr.mxu0 0.0
        %935 = vmatpush1.msra.mxu0 0.0
        %936 = vmatprep.subr.mxu0 0.0
        %937 = vmatpush1.msra.mxu0 0.0
        %938 = vmatprep.subr.mxu0 0.0
        %939 = vmatpush1.msra.mxu0 0.0
        %940 = vmatprep.subr.mxu0 0.0
        %941 = vmatpush1.msra.mxu0 0.0
        %942 = vmatprep.subr.mxu0 0.0
        %943 = vmatpush1.msra.mxu0 0.0
        %944 = vmatprep.subr.mxu0 0.0
        %945 = vmatpush1.msra.mxu0 0.0
        %946 = vmatprep.subr.mxu0 0.0
        %947 = vmatpush1.msra.mxu0 0.0
        %948 = vmatprep.subr.mxu0 0.0
        %949 = vmatpush1.msra.mxu0 0.0
        %950 = vmatprep.subr.mxu0 %v377
        %951 = vmatpush1.msra.mxu0 %v374
        %952 = vmatprep.subr.mxu0 %v312
        %953 = vmatpush1.msra.mxu0 %v311
        %954 = vmatprep.subr.mxu0 %v304
        %955 = vmatpush1.msra.mxu0 %v303
        %956 = vmatprep.subr.mxu0 0.0
        %957 = vmatpush2.msra.mxu0 0.0
        %958 = vmatprep.subr.mxu0 0.0
        %959 = vmatpush2.msra.mxu0 0.0
        %960 = vmatprep.subr.mxu0 0.0
        %961 = vmatpush2.msra.mxu0 0.0
        %962 = vmatprep.subr.mxu0 0.0
        %963 = vmatpush2.msra.mxu0 0.0
        %964 = vmatprep.subr.mxu0 0.0
        %965 = vmatpush2.msra.mxu0 0.0
        %966 = vmatprep.subr.mxu0 0.0
        %967 = vmatpush2.msra.mxu0 0.0
        %968 = vmatprep.subr.mxu0 0.0
        %969 = vmatpush2.msra.mxu0 0.0
        %970 = vmatprep.subr.mxu0 0.0
        %971 = vmatpush2.msra.mxu0 0.0
        %972 = vmatprep.subr.mxu0 0.0
        %973 = vmatpush2.msra.mxu0 0.0
        %974 = vmatprep.subr.mxu0 0.0
        %975 = vmatpush2.msra.mxu0 0.0
        %976 = vmatprep.subr.mxu0 0.0
        %977 = vmatpush2.msra.mxu0 0.0
        %978 = vmatprep.subr.mxu0 0.0
        %979 = vmatpush2.msra.mxu0 0.0
        %980 = vmatprep.subr.mxu0 0.0
        %981 = vmatpush2.msra.mxu0 0.0
        %982 = vmatprep.subr.mxu0 0.0
        %983 = vmatpush2.msra.mxu0 0.0
        %984 = vmatprep.subr.mxu0 0.0
        %985 = vmatpush2.msra.mxu0 0.0
        %986 = vmatprep.subr.mxu0 0.0
        %987 = vmatpush2.msra.mxu0 0.0
        %988 = vmatprep.mubr.f32.mxu0 0.0
        %989 = vmatmul.mubr.f32.gmra.mxu0 %v827
        %v990 = vpop.f32.mrf.mxu0
        %v991 = vadd.f32 0.0, %v990
        %v992 = vpop.f32.mrf.mxu0
        %v993 = vadd.f32 0.0, %v992
        %994 = vmatprep.mubr.f32.mxu0 0.0
        %995 = vmatmul.mubr.f32.gmra.mxu0 %v829
        %v996 = vpop.f32.mrf.mxu0
        %v997 = vadd.f32 0.0, %v996
        %v998 = vpop.f32.mrf.mxu0
        %v999 = vadd.f32 0.0, %v998
        %1000 = vmatprep.mubr.f32.mxu0 0.0
        %1001 = vmatmul.mubr.f32.gmra.mxu0 %v831
        %v1002 = vpop.f32.mrf.mxu0
        %v1003 = vadd.f32 0.0, %v1002
        %v1004 = vpop.f32.mrf.mxu0
        %v1005 = vadd.f32 0.0, %v1004
        %1006 = vmatprep.mubr.f32.mxu0 0.0
        %1007 = vmatmul.mubr.f32.gmra.mxu0 %v833
        %v1008 = vpop.f32.mrf.mxu0
        %v1009 = vadd.f32 0.0, %v1008
        %v1010 = vpop.f32.mrf.mxu0
        %v1011 = vadd.f32 0.0, %v1010
        %1012 = vdwg.mxu0
        %1013 = vmatprep.subr.mxu0 0.0
        %1014 = vmatpush1.msra.mxu0 0.0
        %1015 = vmatprep.subr.mxu0 0.0
        %1016 = vmatpush1.msra.mxu0 0.0
        %1017 = vmatprep.subr.mxu0 0.0
        %1018 = vmatpush1.msra.mxu0 0.0
        %1019 = vmatprep.subr.mxu0 0.0
        %1020 = vmatpush1.msra.mxu0 0.0
        %1021 = vmatprep.subr.mxu0 0.0
        %1022 = vmatpush1.msra.mxu0 0.0
        %1023 = vmatprep.subr.mxu0 0.0
        %1024 = vmatpush1.msra.mxu0 0.0
        %1025 = vmatprep.subr.mxu0 0.0
        %1026 = vmatpush1.msra.mxu0 0.0
        %1027 = vmatprep.subr.mxu0 0.0
        %1028 = vmatpush1.msra.mxu0 0.0
        %1029 = vmatprep.subr.mxu0 0.0
        %1030 = vmatpush1.msra.mxu0 0.0
        %1031 = vmatprep.subr.mxu0 0.0
        %1032 = vmatpush1.msra.mxu0 0.0
        %1033 = vmatprep.subr.mxu0 0.0
        %1034 = vmatpush1.msra.mxu0 0.0
        %1035 = vmatprep.subr.mxu0 0.0
        %1036 = vmatpush1.msra.mxu0 0.0
        %1037 = vmatprep.subr.mxu0 0.0
        %1038 = vmatpush1.msra.mxu0 0.0
        %1039 = vmatprep.subr.mxu0 %v383
        %1040 = vmatpush1.msra.mxu0 %v380
        %1041 = vmatprep.subr.mxu0 %v314
        %1042 = vmatpush1.msra.mxu0 %v313
        %1043 = vmatprep.subr.mxu0 %v306
        %1044 = vmatpush1.msra.mxu0 %v305
        %1045 = vmatprep.subr.mxu0 0.0
        %1046 = vmatpush2.msra.mxu0 0.0
        %1047 = vmatprep.subr.mxu0 0.0
        %1048 = vmatpush2.msra.mxu0 0.0
        %1049 = vmatprep.subr.mxu0 0.0
        %1050 = vmatpush2.msra.mxu0 0.0
        %1051 = vmatprep.subr.mxu0 0.0
        %1052 = vmatpush2.msra.mxu0 0.0
        %1053 = vmatprep.subr.mxu0 0.0
        %1054 = vmatpush2.msra.mxu0 0.0
        %1055 = vmatprep.subr.mxu0 0.0
        %1056 = vmatpush2.msra.mxu0 0.0
        %1057 = vmatprep.subr.mxu0 0.0
        %1058 = vmatpush2.msra.mxu0 0.0
        %1059 = vmatprep.subr.mxu0 0.0
        %1060 = vmatpush2.msra.mxu0 0.0
        %1061 = vmatprep.subr.mxu0 0.0
        %1062 = vmatpush2.msra.mxu0 0.0
        %1063 = vmatprep.subr.mxu0 0.0
        %1064 = vmatpush2.msra.mxu0 0.0
        %1065 = vmatprep.subr.mxu0 0.0
        %1066 = vmatpush2.msra.mxu0 0.0
        %1067 = vmatprep.subr.mxu0 0.0
        %1068 = vmatpush2.msra.mxu0 0.0
        %1069 = vmatprep.subr.mxu0 0.0
        %1070 = vmatpush2.msra.mxu0 0.0
        %1071 = vmatprep.subr.mxu0 0.0
        %1072 = vmatpush2.msra.mxu0 0.0
        %1073 = vmatprep.subr.mxu0 0.0
        %1074 = vmatpush2.msra.mxu0 0.0
        %1075 = vmatprep.subr.mxu0 0.0
        %1076 = vmatpush2.msra.mxu0 0.0
        %1077 = vmatprep.mubr.f32.mxu0 0.0
        %1078 = vmatmul.mubr.f32.gmra.mxu0 %v827
        %v1079 = vpop.f32.mrf.mxu0
        %v1080 = vadd.f32 0.0, %v1079
        %v1081 = vpop.f32.mrf.mxu0
        %v1082 = vadd.f32 0.0, %v1081
        %1083 = vmatprep.mubr.f32.mxu0 0.0
        %1084 = vmatmul.mubr.f32.gmra.mxu0 %v829
        %v1085 = vpop.f32.mrf.mxu0
        %v1086 = vadd.f32 0.0, %v1085
        %v1087 = vpop.f32.mrf.mxu0
        %v1088 = vadd.f32 0.0, %v1087
        %1089 = vmatprep.mubr.f32.mxu0 0.0
        %1090 = vmatmul.mubr.f32.gmra.mxu0 %v831
        %v1091 = vpop.f32.mrf.mxu0
        %v1092 = vadd.f32 0.0, %v1091
        %v1093 = vpop.f32.mrf.mxu0
        %v1094 = vadd.f32 0.0, %v1093
        %1095 = vmatprep.mubr.f32.mxu0 0.0
        %1096 = vmatmul.mubr.f32.gmra.mxu0 %v833
        %v1097 = vpop.f32.mrf.mxu0
        %v1098 = vadd.f32 0.0, %v1097
        %v1099 = vpop.f32.mrf.mxu0
        %v1100 = vadd.f32 0.0, %v1099
        %1101 = vdwg.mxu0
        %1102 = vmatprep.subr.mxu0 0.0
        %1103 = vmatpush1.msra.mxu0 0.0
        %1104 = vmatprep.subr.mxu0 0.0
        %1105 = vmatpush1.msra.mxu0 0.0
        %1106 = vmatprep.subr.mxu0 0.0
        %1107 = vmatpush1.msra.mxu0 0.0
        %1108 = vmatprep.subr.mxu0 0.0
        %1109 = vmatpush1.msra.mxu0 0.0
        %1110 = vmatprep.subr.mxu0 0.0
        %1111 = vmatpush1.msra.mxu0 0.0
        %1112 = vmatprep.subr.mxu0 0.0
        %1113 = vmatpush1.msra.mxu0 0.0
        %1114 = vmatprep.subr.mxu0 0.0
        %1115 = vmatpush1.msra.mxu0 0.0
        %1116 = vmatprep.subr.mxu0 0.0
        %1117 = vmatpush1.msra.mxu0 0.0
        %1118 = vmatprep.subr.mxu0 0.0
        %1119 = vmatpush1.msra.mxu0 0.0
        %1120 = vmatprep.subr.mxu0 0.0
        %1121 = vmatpush1.msra.mxu0 0.0
        %1122 = vmatprep.subr.mxu0 0.0
        %1123 = vmatpush1.msra.mxu0 0.0
        %1124 = vmatprep.subr.mxu0 0.0
        %1125 = vmatpush1.msra.mxu0 0.0
        %1126 = vmatprep.subr.mxu0 0.0
        %1127 = vmatpush1.msra.mxu0 0.0
        %1128 = vmatprep.subr.mxu0 %v389
        %1129 = vmatpush1.msra.mxu0 %v386
        %1130 = vmatprep.subr.mxu0 %v316
        %1131 = vmatpush1.msra.mxu0 %v315
        %1132 = vmatprep.subr.mxu0 %v308
        %1133 = vmatpush1.msra.mxu0 %v307
        %1134 = vmatprep.subr.mxu0 0.0
        %1135 = vmatpush2.msra.mxu0 0.0
        %1136 = vmatprep.subr.mxu0 0.0
        %1137 = vmatpush2.msra.mxu0 0.0
        %1138 = vmatprep.subr.mxu0 0.0
        %1139 = vmatpush2.msra.mxu0 0.0
        %1140 = vmatprep.subr.mxu0 0.0
        %1141 = vmatpush2.msra.mxu0 0.0
        %1142 = vmatprep.subr.mxu0 0.0
        %1143 = vmatpush2.msra.mxu0 0.0
        %1144 = vmatprep.subr.mxu0 0.0
        %1145 = vmatpush2.msra.mxu0 0.0
        %1146 = vmatprep.subr.mxu0 0.0
        %1147 = vmatpush2.msra.mxu0 0.0
        %1148 = vmatprep.subr.mxu0 0.0
        %1149 = vmatpush2.msra.mxu0 0.0
        %1150 = vmatprep.subr.mxu0 0.0
        %1151 = vmatpush2.msra.mxu0 0.0
        %1152 = vmatprep.subr.mxu0 0.0
        %1153 = vmatpush2.msra.mxu0 0.0
        %1154 = vmatprep.subr.mxu0 0.0
        %1155 = vmatpush2.msra.mxu0 0.0
        %1156 = vmatprep.subr.mxu0 0.0
        %1157 = vmatpush2.msra.mxu0 0.0
        %1158 = vmatprep.subr.mxu0 0.0
        %1159 = vmatpush2.msra.mxu0 0.0
        %1160 = vmatprep.subr.mxu0 0.0
        %1161 = vmatpush2.msra.mxu0 0.0
        %1162 = vmatprep.subr.mxu0 0.0
        %1163 = vmatpush2.msra.mxu0 0.0
        %1164 = vmatprep.subr.mxu0 0.0
        %1165 = vmatpush2.msra.mxu0 0.0
        %1166 = vmatprep.mubr.f32.mxu0 0.0
        %1167 = vmatmul.mubr.f32.gmra.mxu0 %v827
        %v1168 = vpop.f32.mrf.mxu0
        %v1169 = vadd.f32 0.0, %v1168
        %v1170 = vpop.f32.mrf.mxu0
        %v1171 = vadd.f32 0.0, %v1170
        %1172 = vmatprep.mubr.f32.mxu0 0.0
        %1173 = vmatmul.mubr.f32.gmra.mxu0 %v829
        %v1174 = vpop.f32.mrf.mxu0
        %v1175 = vadd.f32 0.0, %v1174
        %v1176 = vpop.f32.mrf.mxu0
        %v1177 = vadd.f32 0.0, %v1176
        %1178 = vmatprep.mubr.f32.mxu0 0.0
        %1179 = vmatmul.mubr.f32.gmra.mxu0 %v831
        %v1180 = vpop.f32.mrf.mxu0
        %v1181 = vadd.f32 0.0, %v1180
        %v1182 = vpop.f32.mrf.mxu0
        %v1183 = vadd.f32 0.0, %v1182
        %1184 = vmatprep.mubr.f32.mxu0 0.0
        %1185 = vmatmul.mubr.f32.gmra.mxu0 %v833
        %v1186 = vpop.f32.mrf.mxu0
        %v1187 = vadd.f32 0.0, %v1186
        %v1188 = vpop.f32.mrf.mxu0
        %v1189 = vadd.f32 0.0, %v1188
        %1190 = vdwg.mxu0
        %vm1191 = vcmask 261120
        %v1192 = vsel %vm1191, %v811, 0
        %v1194 = vsel %vm1191, %v812, 0
        %v1196 = vsel %vm1191, %v813, 0
        %v1198 = vsel %vm1191, %v814, 0
        %1200 = vmatprep.subr.mxu0 0.0
        %1201 = vmatpush1.msra.mxu0 0.0
        %1202 = vmatprep.subr.mxu0 0.0
        %1203 = vmatpush1.msra.mxu0 0.0
        %1204 = vmatprep.subr.mxu0 0.0
        %1205 = vmatpush1.msra.mxu0 0.0
        %1206 = vmatprep.subr.mxu0 0.0
        %1207 = vmatpush1.msra.mxu0 0.0
        %1208 = vmatprep.subr.mxu0 0.0
        %1209 = vmatpush1.msra.mxu0 0.0
        %1210 = vmatprep.subr.mxu0 0.0
        %1211 = vmatpush1.msra.mxu0 0.0
        %1212 = vmatprep.subr.mxu0 0.0
        %1213 = vmatpush1.msra.mxu0 0.0
        %1214 = vmatprep.subr.mxu0 0.0
        %1215 = vmatpush1.msra.mxu0 0.0
        %1216 = vmatprep.subr.mxu0 0.0
        %1217 = vmatpush1.msra.mxu0 0.0
        %1218 = vmatprep.subr.mxu0 0.0
        %1219 = vmatpush1.msra.mxu0 0.0
        %1220 = vmatprep.subr.mxu0 0.0
        %1221 = vmatpush1.msra.mxu0 0.0
        %1222 = vmatprep.subr.mxu0 0.0
        %1223 = vmatpush1.msra.mxu0 0.0
        %1224 = vmatprep.subr.mxu0 %v804
        %1225 = vmatpush1.msra.mxu0 %v803
        %1226 = vmatprep.subr.mxu0 %v796
        %1227 = vmatpush1.msra.mxu0 %v795
        %1228 = vmatprep.subr.mxu0 %v788
        %1229 = vmatpush1.msra.mxu0 %v787
        %1230 = vmatprep.subr.mxu0 %v780
        %1231 = vmatpush1.msra.mxu0 %v779
        %1232 = vmatprep.subr.mxu0 0.0
        %1233 = vmatpush2.msra.mxu0 0.0
        %1234 = vmatprep.subr.mxu0 0.0
        %1235 = vmatpush2.msra.mxu0 0.0
        %1236 = vmatprep.subr.mxu0 0.0
        %1237 = vmatpush2.msra.mxu0 0.0
        %1238 = vmatprep.subr.mxu0 0.0
        %1239 = vmatpush2.msra.mxu0 0.0
        %1240 = vmatprep.subr.mxu0 0.0
        %1241 = vmatpush2.msra.mxu0 0.0
        %1242 = vmatprep.subr.mxu0 0.0
        %1243 = vmatpush2.msra.mxu0 0.0
        %1244 = vmatprep.subr.mxu0 0.0
        %1245 = vmatpush2.msra.mxu0 0.0
        %1246 = vmatprep.subr.mxu0 0.0
        %1247 = vmatpush2.msra.mxu0 0.0
        %1248 = vmatprep.subr.mxu0 0.0
        %1249 = vmatpush2.msra.mxu0 0.0
        %1250 = vmatprep.subr.mxu0 0.0
        %1251 = vmatpush2.msra.mxu0 0.0
        %1252 = vmatprep.subr.mxu0 0.0
        %1253 = vmatpush2.msra.mxu0 0.0
        %1254 = vmatprep.subr.mxu0 0.0
        %1255 = vmatpush2.msra.mxu0 0.0
        %1256 = vmatprep.subr.mxu0 0.0
        %1257 = vmatpush2.msra.mxu0 0.0
        %1258 = vmatprep.subr.mxu0 0.0
        %1259 = vmatpush2.msra.mxu0 0.0
        %1260 = vmatprep.subr.mxu0 0.0
        %1261 = vmatpush2.msra.mxu0 0.0
        %1262 = vmatprep.subr.mxu0 0.0
        %1263 = vmatpush2.msra.mxu0 0.0
        %1264 = vmatprep.mubr.f32.mxu0 0.0
        %1265 = vmatmul.mubr.f32.gmra.mxu0 %v1192
        %v1266 = vpop.f32.mrf.mxu0
        %v1267 = vadd.f32 %v902, %v1266
        %v1268 = vpop.f32.mrf.mxu0
        %v1269 = vadd.f32 %v904, %v1268
        %1270 = vmatprep.mubr.f32.mxu0 0.0
        %1271 = vmatmul.mubr.f32.gmra.mxu0 %v1194
        %v1272 = vpop.f32.mrf.mxu0
        %v1273 = vadd.f32 %v908, %v1272
        %v1274 = vpop.f32.mrf.mxu0
        %v1275 = vadd.f32 %v910, %v1274
        %1276 = vmatprep.mubr.f32.mxu0 0.0
        %1277 = vmatmul.mubr.f32.gmra.mxu0 %v1196
        %v1278 = vpop.f32.mrf.mxu0
        %v1279 = vadd.f32 %v914, %v1278
        %v1280 = vpop.f32.mrf.mxu0
        %v1281 = vadd.f32 %v916, %v1280
        %1282 = vmatprep.mubr.f32.mxu0 0.0
        %1283 = vmatmul.mubr.f32.gmra.mxu0 %v1198
        %v1284 = vpop.f32.mrf.mxu0
        %v1285 = vadd.f32 %v920, %v1284
        %v1286 = vpop.f32.mrf.mxu0
        %v1287 = vadd.f32 %v922, %v1286
        %1288 = vdwg.mxu0
        %1289 = vmatprep.subr.mxu0 0.0
        %1290 = vmatpush1.msra.mxu0 0.0
        %1291 = vmatprep.subr.mxu0 0.0
        %1292 = vmatpush1.msra.mxu0 0.0
        %1293 = vmatprep.subr.mxu0 0.0
        %1294 = vmatpush1.msra.mxu0 0.0
        %1295 = vmatprep.subr.mxu0 0.0
        %1296 = vmatpush1.msra.mxu0 0.0
        %1297 = vmatprep.subr.mxu0 0.0
        %1298 = vmatpush1.msra.mxu0 0.0
        %1299 = vmatprep.subr.mxu0 0.0
        %1300 = vmatpush1.msra.mxu0 0.0
        %1301 = vmatprep.subr.mxu0 0.0
        %1302 = vmatpush1.msra.mxu0 0.0
        %1303 = vmatprep.subr.mxu0 0.0
        %1304 = vmatpush1.msra.mxu0 0.0
        %1305 = vmatprep.subr.mxu0 0.0
        %1306 = vmatpush1.msra.mxu0 0.0
        %1307 = vmatprep.subr.mxu0 0.0
        %1308 = vmatpush1.msra.mxu0 0.0
        %1309 = vmatprep.subr.mxu0 0.0
        %1310 = vmatpush1.msra.mxu0 0.0
        %1311 = vmatprep.subr.mxu0 0.0
        %1312 = vmatpush1.msra.mxu0 0.0
        %1313 = vmatprep.subr.mxu0 %v806
        %1314 = vmatpush1.msra.mxu0 %v805
        %1315 = vmatprep.subr.mxu0 %v798
        %1316 = vmatpush1.msra.mxu0 %v797
        %1317 = vmatprep.subr.mxu0 %v790
        %1318 = vmatpush1.msra.mxu0 %v789
        %1319 = vmatprep.subr.mxu0 %v782
        %1320 = vmatpush1.msra.mxu0 %v781
        %1321 = vmatprep.subr.mxu0 0.0
        %1322 = vmatpush2.msra.mxu0 0.0
        %1323 = vmatprep.subr.mxu0 0.0
        %1324 = vmatpush2.msra.mxu0 0.0
        %1325 = vmatprep.subr.mxu0 0.0
        %1326 = vmatpush2.msra.mxu0 0.0
        %1327 = vmatprep.subr.mxu0 0.0
        %1328 = vmatpush2.msra.mxu0 0.0
        %1329 = vmatprep.subr.mxu0 0.0
        %1330 = vmatpush2.msra.mxu0 0.0
        %1331 = vmatprep.subr.mxu0 0.0
        %1332 = vmatpush2.msra.mxu0 0.0
        %1333 = vmatprep.subr.mxu0 0.0
        %1334 = vmatpush2.msra.mxu0 0.0
        %1335 = vmatprep.subr.mxu0 0.0
        %1336 = vmatpush2.msra.mxu0 0.0
        %1337 = vmatprep.subr.mxu0 0.0
        %1338 = vmatpush2.msra.mxu0 0.0
        %1339 = vmatprep.subr.mxu0 0.0
        %1340 = vmatpush2.msra.mxu0 0.0
        %1341 = vmatprep.subr.mxu0 0.0
        %1342 = vmatpush2.msra.mxu0 0.0
        %1343 = vmatprep.subr.mxu0 0.0
        %1344 = vmatpush2.msra.mxu0 0.0
        %1345 = vmatprep.subr.mxu0 0.0
        %1346 = vmatpush2.msra.mxu0 0.0
        %1347 = vmatprep.subr.mxu0 0.0
        %1348 = vmatpush2.msra.mxu0 0.0
        %1349 = vmatprep.subr.mxu0 0.0
        %1350 = vmatpush2.msra.mxu0 0.0
        %1351 = vmatprep.subr.mxu0 0.0
        %1352 = vmatpush2.msra.mxu0 0.0
        %1353 = vmatprep.mubr.f32.mxu0 0.0
        %1354 = vmatmul.mubr.f32.gmra.mxu0 %v1192
        %v1355 = vpop.f32.mrf.mxu0
        %v1356 = vadd.f32 %v991, %v1355
        %v1357 = vpop.f32.mrf.mxu0
        %v1358 = vadd.f32 %v993, %v1357
        %1359 = vmatprep.mubr.f32.mxu0 0.0
        %1360 = vmatmul.mubr.f32.gmra.mxu0 %v1194
        %v1361 = vpop.f32.mrf.mxu0
        %v1362 = vadd.f32 %v997, %v1361
        %v1363 = vpop.f32.mrf.mxu0
        %v1364 = vadd.f32 %v999, %v1363
        %1365 = vmatprep.mubr.f32.mxu0 0.0
        %1366 = vmatmul.mubr.f32.gmra.mxu0 %v1196
        %v1367 = vpop.f32.mrf.mxu0
        %v1368 = vadd.f32 %v1003, %v1367
        %v1369 = vpop.f32.mrf.mxu0
        %v1370 = vadd.f32 %v1005, %v1369
        %1371 = vmatprep.mubr.f32.mxu0 0.0
        %1372 = vmatmul.mubr.f32.gmra.mxu0 %v1198
        %v1373 = vpop.f32.mrf.mxu0
        %v1374 = vadd.f32 %v1009, %v1373
        %v1375 = vpop.f32.mrf.mxu0
        %v1376 = vadd.f32 %v1011, %v1375
        %1377 = vdwg.mxu0
        %1378 = vmatprep.subr.mxu0 0.0
        %1379 = vmatpush1.msra.mxu0 0.0
        %1380 = vmatprep.subr.mxu0 0.0
        %1381 = vmatpush1.msra.mxu0 0.0
        %1382 = vmatprep.subr.mxu0 0.0
        %1383 = vmatpush1.msra.mxu0 0.0
        %1384 = vmatprep.subr.mxu0 0.0
        %1385 = vmatpush1.msra.mxu0 0.0
        %1386 = vmatprep.subr.mxu0 0.0
        %1387 = vmatpush1.msra.mxu0 0.0
        %1388 = vmatprep.subr.mxu0 0.0
        %1389 = vmatpush1.msra.mxu0 0.0
        %1390 = vmatprep.subr.mxu0 0.0
        %1391 = vmatpush1.msra.mxu0 0.0
        %1392 = vmatprep.subr.mxu0 0.0
        %1393 = vmatpush1.msra.mxu0 0.0
        %1394 = vmatprep.subr.mxu0 0.0
        %1395 = vmatpush1.msra.mxu0 0.0
        %1396 = vmatprep.subr.mxu0 0.0
        %1397 = vmatpush1.msra.mxu0 0.0
        %1398 = vmatprep.subr.mxu0 0.0
        %1399 = vmatpush1.msra.mxu0 0.0
        %1400 = vmatprep.subr.mxu0 0.0
        %1401 = vmatpush1.msra.mxu0 0.0
        %1402 = vmatprep.subr.mxu0 %v808
        %1403 = vmatpush1.msra.mxu0 %v807
        %1404 = vmatprep.subr.mxu0 %v800
        %1405 = vmatpush1.msra.mxu0 %v799
        %1406 = vmatprep.subr.mxu0 %v792
        %1407 = vmatpush1.msra.mxu0 %v791
        %1408 = vmatprep.subr.mxu0 %v784
        %1409 = vmatpush1.msra.mxu0 %v783
        %1410 = vmatprep.subr.mxu0 0.0
        %1411 = vmatpush2.msra.mxu0 0.0
        %1412 = vmatprep.subr.mxu0 0.0
        %1413 = vmatpush2.msra.mxu0 0.0
        %1414 = vmatprep.subr.mxu0 0.0
        %1415 = vmatpush2.msra.mxu0 0.0
        %1416 = vmatprep.subr.mxu0 0.0
        %1417 = vmatpush2.msra.mxu0 0.0
        %1418 = vmatprep.subr.mxu0 0.0
        %1419 = vmatpush2.msra.mxu0 0.0
        %1420 = vmatprep.subr.mxu0 0.0
        %1421 = vmatpush2.msra.mxu0 0.0
        %1422 = vmatprep.subr.mxu0 0.0
        %1423 = vmatpush2.msra.mxu0 0.0
        %1424 = vmatprep.subr.mxu0 0.0
        %1425 = vmatpush2.msra.mxu0 0.0
        %1426 = vmatprep.subr.mxu0 0.0
        %1427 = vmatpush2.msra.mxu0 0.0
        %1428 = vmatprep.subr.mxu0 0.0
        %1429 = vmatpush2.msra.mxu0 0.0
        %1430 = vmatprep.subr.mxu0 0.0
        %1431 = vmatpush2.msra.mxu0 0.0
        %1432 = vmatprep.subr.mxu0 0.0
        %1433 = vmatpush2.msra.mxu0 0.0
        %1434 = vmatprep.subr.mxu0 0.0
        %1435 = vmatpush2.msra.mxu0 0.0
        %1436 = vmatprep.subr.mxu0 0.0
        %1437 = vmatpush2.msra.mxu0 0.0
        %1438 = vmatprep.subr.mxu0 0.0
        %1439 = vmatpush2.msra.mxu0 0.0
        %1440 = vmatprep.subr.mxu0 0.0
        %1441 = vmatpush2.msra.mxu0 0.0
        %1442 = vmatprep.mubr.f32.mxu0 0.0
        %1443 = vmatmul.mubr.f32.gmra.mxu0 %v1192
        %v1444 = vpop.f32.mrf.mxu0
        %v1445 = vadd.f32 %v1080, %v1444
        %v1446 = vpop.f32.mrf.mxu0
        %v1447 = vadd.f32 %v1082, %v1446
        %1448 = vmatprep.mubr.f32.mxu0 0.0
        %1449 = vmatmul.mubr.f32.gmra.mxu0 %v1194
        %v1450 = vpop.f32.mrf.mxu0
        %v1451 = vadd.f32 %v1086, %v1450
        %v1452 = vpop.f32.mrf.mxu0
        %v1453 = vadd.f32 %v1088, %v1452
        %1454 = vmatprep.mubr.f32.mxu0 0.0
        %1455 = vmatmul.mubr.f32.gmra.mxu0 %v1196
        %v1456 = vpop.f32.mrf.mxu0
        %v1457 = vadd.f32 %v1092, %v1456
        %v1458 = vpop.f32.mrf.mxu0
        %v1459 = vadd.f32 %v1094, %v1458
        %1460 = vmatprep.mubr.f32.mxu0 0.0
        %1461 = vmatmul.mubr.f32.gmra.mxu0 %v1198
        %v1462 = vpop.f32.mrf.mxu0
        %v1463 = vadd.f32 %v1098, %v1462
        %v1464 = vpop.f32.mrf.mxu0
        %v1465 = vadd.f32 %v1100, %v1464
        %1466 = vdwg.mxu0
        %1467 = vmatprep.subr.mxu0 0.0
        %1468 = vmatpush1.msra.mxu0 0.0
        %1469 = vmatprep.subr.mxu0 0.0
        %1470 = vmatpush1.msra.mxu0 0.0
        %1471 = vmatprep.subr.mxu0 0.0
        %1472 = vmatpush1.msra.mxu0 0.0
        %1473 = vmatprep.subr.mxu0 0.0
        %1474 = vmatpush1.msra.mxu0 0.0
        %1475 = vmatprep.subr.mxu0 0.0
        %1476 = vmatpush1.msra.mxu0 0.0
        %1477 = vmatprep.subr.mxu0 0.0
        %1478 = vmatpush1.msra.mxu0 0.0
        %1479 = vmatprep.subr.mxu0 0.0
        %1480 = vmatpush1.msra.mxu0 0.0
        %1481 = vmatprep.subr.mxu0 0.0
        %1482 = vmatpush1.msra.mxu0 0.0
        %1483 = vmatprep.subr.mxu0 0.0
        %1484 = vmatpush1.msra.mxu0 0.0
        %1485 = vmatprep.subr.mxu0 0.0
        %1486 = vmatpush1.msra.mxu0 0.0
        %1487 = vmatprep.subr.mxu0 0.0
        %1488 = vmatpush1.msra.mxu0 0.0
        %1489 = vmatprep.subr.mxu0 0.0
        %1490 = vmatpush1.msra.mxu0 0.0
        %1491 = vmatprep.subr.mxu0 %v810
        %1492 = vmatpush1.msra.mxu0 %v809
        %1493 = vmatprep.subr.mxu0 %v802
        %1494 = vmatpush1.msra.mxu0 %v801
        %1495 = vmatprep.subr.mxu0 %v794
        %1496 = vmatpush1.msra.mxu0 %v793
        %1497 = vmatprep.subr.mxu0 %v786
        %1498 = vmatpush1.msra.mxu0 %v785
        %1499 = vmatprep.subr.mxu0 0.0
        %1500 = vmatpush2.msra.mxu0 0.0
        %1501 = vmatprep.subr.mxu0 0.0
        %1502 = vmatpush2.msra.mxu0 0.0
        %1503 = vmatprep.subr.mxu0 0.0
        %1504 = vmatpush2.msra.mxu0 0.0
        %1505 = vmatprep.subr.mxu0 0.0
        %1506 = vmatpush2.msra.mxu0 0.0
        %1507 = vmatprep.subr.mxu0 0.0
        %1508 = vmatpush2.msra.mxu0 0.0
        %1509 = vmatprep.subr.mxu0 0.0
        %1510 = vmatpush2.msra.mxu0 0.0
        %1511 = vmatprep.subr.mxu0 0.0
        %1512 = vmatpush2.msra.mxu0 0.0
        %1513 = vmatprep.subr.mxu0 0.0
        %1514 = vmatpush2.msra.mxu0 0.0
        %1515 = vmatprep.subr.mxu0 0.0
        %1516 = vmatpush2.msra.mxu0 0.0
        %1517 = vmatprep.subr.mxu0 0.0
        %1518 = vmatpush2.msra.mxu0 0.0
        %1519 = vmatprep.subr.mxu0 0.0
        %1520 = vmatpush2.msra.mxu0 0.0
        %1521 = vmatprep.subr.mxu0 0.0
        %1522 = vmatpush2.msra.mxu0 0.0
        %1523 = vmatprep.subr.mxu0 0.0
        %1524 = vmatpush2.msra.mxu0 0.0
        %1525 = vmatprep.subr.mxu0 0.0
        %1526 = vmatpush2.msra.mxu0 0.0
        %1527 = vmatprep.subr.mxu0 0.0
        %1528 = vmatpush2.msra.mxu0 0.0
        %1529 = vmatprep.subr.mxu0 0.0
        %1530 = vmatpush2.msra.mxu0 0.0
        %1531 = vmatprep.mubr.f32.mxu0 0.0
        %1532 = vmatmul.mubr.f32.gmra.mxu0 %v1192
        %v1533 = vpop.f32.mrf.mxu0
        %v1534 = vadd.f32 %v1169, %v1533
        %v1535 = vpop.f32.mrf.mxu0
        %v1536 = vadd.f32 %v1171, %v1535
        %1537 = vmatprep.mubr.f32.mxu0 0.0
        %1538 = vmatmul.mubr.f32.gmra.mxu0 %v1194
        %v1539 = vpop.f32.mrf.mxu0
        %v1540 = vadd.f32 %v1175, %v1539
        %v1541 = vpop.f32.mrf.mxu0
        %v1542 = vadd.f32 %v1177, %v1541
        %1543 = vmatprep.mubr.f32.mxu0 0.0
        %1544 = vmatmul.mubr.f32.gmra.mxu0 %v1196
        %v1545 = vpop.f32.mrf.mxu0
        %v1546 = vadd.f32 %v1181, %v1545
        %v1547 = vpop.f32.mrf.mxu0
        %v1548 = vadd.f32 %v1183, %v1547
        %1549 = vmatprep.mubr.f32.mxu0 0.0
        %1550 = vmatmul.mubr.f32.gmra.mxu0 %v1198
        %v1551 = vpop.f32.mrf.mxu0
        %v1552 = vadd.f32 %v1187, %v1551
        %v1553 = vpop.f32.mrf.mxu0
        %v1554 = vadd.f32 %v1189, %v1553
        %1555 = vdwg.mxu0
        %v1556 = vld [vmem:[%s4] sm:$0xff]
        %v1557 = vld [vmem:[%s4 + $0x8] sm:$0xff]
        %v1558 = vld [vmem:[%s4 + $0x10] sm:$0xff]
        %v1559 = vld [vmem:[%s4 + $0x18] sm:$0xff]
        %1561 = vset.pattern.permute.xlu0 0
        %1562 = vperm.xlu0 %1561, %v1556
        %v1563 = vpop.permute.xlu0 %1562
        %1566 = vset.pattern.permute.xlu0 0
        %1567 = vperm.xlu0 %1566, %v1557
        %v1568 = vpop.permute.xlu0 %1567
        %1571 = vset.pattern.permute.xlu0 0
        %1572 = vperm.xlu0 %1571, %v1558
        %v1573 = vpop.permute.xlu0 %1572
        %1576 = vset.pattern.permute.xlu0 0
        %1577 = vperm.xlu0 %1576, %v1559
        %v1578 = vpop.permute.xlu0 %1577
        %v1580 = vadd.f32 %v1267, %v1563
        %v1581 = vadd.f32 %v1269, %v1563
        %v1582 = vadd.f32 %v1356, %v1563
        %v1583 = vadd.f32 %v1358, %v1563
        %v1584 = vadd.f32 %v1445, %v1563
        %v1585 = vadd.f32 %v1447, %v1563
        %v1586 = vadd.f32 %v1534, %v1563
        %v1587 = vadd.f32 %v1536, %v1563
        %v1588 = vadd.f32 %v1273, %v1568
        %v1589 = vadd.f32 %v1275, %v1568
        %v1590 = vadd.f32 %v1362, %v1568
        %v1591 = vadd.f32 %v1364, %v1568
        %v1592 = vadd.f32 %v1451, %v1568
        %v1593 = vadd.f32 %v1453, %v1568
        %v1594 = vadd.f32 %v1540, %v1568
        %v1595 = vadd.f32 %v1542, %v1568
        %v1596 = vadd.f32 %v1279, %v1573
        %v1597 = vadd.f32 %v1281, %v1573
        %v1598 = vadd.f32 %v1368, %v1573
        %v1599 = vadd.f32 %v1370, %v1573
        %v1600 = vadd.f32 %v1457, %v1573
        %v1601 = vadd.f32 %v1459, %v1573
        %v1602 = vadd.f32 %v1546, %v1573
        %v1603 = vadd.f32 %v1548, %v1573
        %v1604 = vadd.f32 %v1285, %v1578
        %v1605 = vadd.f32 %v1287, %v1578
        %v1606 = vadd.f32 %v1374, %v1578
        %v1607 = vadd.f32 %v1376, %v1578
        %v1608 = vadd.f32 %v1463, %v1578
        %v1609 = vadd.f32 %v1465, %v1578
        %v1610 = vadd.f32 %v1552, %v1578
        %v1611 = vadd.f32 %v1554, %v1578
        %v1612 = vmul.f32 %v1580, 0.01
        %v1613 = vmul.f32 %v1581, 0.01
        %v1614 = vmul.f32 %v1582, 0.01
        %v1615 = vmul.f32 %v1583, 0.01
        %v1616 = vmul.f32 %v1584, 0.01
        %v1617 = vmul.f32 %v1585, 0.01
        %v1618 = vmul.f32 %v1586, 0.01
        %v1619 = vmul.f32 %v1587, 0.01
        %v1620 = vmul.f32 %v1588, 0.01
        %v1621 = vmul.f32 %v1589, 0.01
        %v1622 = vmul.f32 %v1590, 0.01
        %v1623 = vmul.f32 %v1591, 0.01
        %v1624 = vmul.f32 %v1592, 0.01
        %v1625 = vmul.f32 %v1593, 0.01
        %v1626 = vmul.f32 %v1594, 0.01
        %v1627 = vmul.f32 %v1595, 0.01
        %v1628 = vmul.f32 %v1596, 0.01
        %v1629 = vmul.f32 %v1597, 0.01
        %v1630 = vmul.f32 %v1598, 0.01
        %v1631 = vmul.f32 %v1599, 0.01
        %v1632 = vmul.f32 %v1600, 0.01
        %v1633 = vmul.f32 %v1601, 0.01
        %v1634 = vmul.f32 %v1602, 0.01
        %v1635 = vmul.f32 %v1603, 0.01
        %v1636 = vmul.f32 %v1604, 0.01
        %v1637 = vmul.f32 %v1605, 0.01
        %v1638 = vmul.f32 %v1606, 0.01
        %v1639 = vmul.f32 %v1607, 0.01
        %v1640 = vmul.f32 %v1608, 0.01
        %v1641 = vmul.f32 %v1609, 0.01
        %v1642 = vmul.f32 %v1610, 0.01
        %v1643 = vmul.f32 %v1611, 0.01
        %v1644 = vmax.f32 %v1580, %v1612
        %v1645 = vmax.f32 %v1581, %v1613
        %v1646 = vmax.f32 %v1582, %v1614
        %v1647 = vmax.f32 %v1583, %v1615
        %v1648 = vmax.f32 %v1584, %v1616
        %v1649 = vmax.f32 %v1585, %v1617
        %v1650 = vmax.f32 %v1586, %v1618
        %v1651 = vmax.f32 %v1587, %v1619
        %v1652 = vmax.f32 %v1588, %v1620
        %v1653 = vmax.f32 %v1589, %v1621
        %v1654 = vmax.f32 %v1590, %v1622
        %v1655 = vmax.f32 %v1591, %v1623
        %v1656 = vmax.f32 %v1592, %v1624
        %v1657 = vmax.f32 %v1593, %v1625
        %v1658 = vmax.f32 %v1594, %v1626
        %v1659 = vmax.f32 %v1595, %v1627
        %v1660 = vmax.f32 %v1596, %v1628
        %v1661 = vmax.f32 %v1597, %v1629
        %v1662 = vmax.f32 %v1598, %v1630
        %v1663 = vmax.f32 %v1599, %v1631
        %v1664 = vmax.f32 %v1600, %v1632
        %v1665 = vmax.f32 %v1601, %v1633
        %v1666 = vmax.f32 %v1602, %v1634
        %v1667 = vmax.f32 %v1603, %v1635
        %v1668 = vmax.f32 %v1604, %v1636
        %v1669 = vmax.f32 %v1605, %v1637
        %v1670 = vmax.f32 %v1606, %v1638
        %v1671 = vmax.f32 %v1607, %v1639
        %v1672 = vmax.f32 %v1608, %v1640
        %v1673 = vmax.f32 %v1609, %v1641
        %v1674 = vmax.f32 %v1610, %v1642
        %v1675 = vmax.f32 %v1611, %v1643
        %s1676 = scalar_lea.vmem %s3, 32
        %v1677 = vld [vmem:[%s1676] sm:$0xff]
        %v1678 = vld [vmem:[%s1676 + $0x8] sm:$0xff]
        %v1679 = vld [vmem:[%s1676 + $0x10] sm:$0xff]
        %v1680 = vld [vmem:[%s1676 + $0x18] sm:$0xff]
        %1685 = vrot.lane.b32.xlu0 %v1677, 96
        %v1686 = vpop.permute.xlu0 %1685
        %1687 = vrot.lane.b32.xlu0 %v1678, 96
        %v1688 = vpop.permute.xlu0 %1687
        %1689 = vrot.lane.b32.xlu0 %v1679, 96
        %v1690 = vpop.permute.xlu0 %1689
        %1691 = vrot.lane.b32.xlu0 %v1680, 96
        %v1692 = vpop.permute.xlu0 %1691
        %v1693 = vsel %vm1191, %v1686, 0
        %v1695 = vsel %vm1191, %v1688, 0
        %v1697 = vsel %vm1191, %v1690, 0
        %v1699 = vsel %vm1191, %v1692, 0
        %1701 = vmatprep.subr.mxu0 0.0
        %1702 = vmatpush1.msra.mxu0 0.0
        %1703 = vmatprep.subr.mxu0 0.0
        %1704 = vmatpush1.msra.mxu0 0.0
        %1705 = vmatprep.subr.mxu0 0.0
        %1706 = vmatpush1.msra.mxu0 0.0
        %1707 = vmatprep.subr.mxu0 0.0
        %1708 = vmatpush1.msra.mxu0 0.0
        %1709 = vmatprep.subr.mxu0 0.0
        %1710 = vmatpush1.msra.mxu0 0.0
        %1711 = vmatprep.subr.mxu0 0.0
        %1712 = vmatpush1.msra.mxu0 0.0
        %1713 = vmatprep.subr.mxu0 0.0
        %1714 = vmatpush1.msra.mxu0 0.0
        %1715 = vmatprep.subr.mxu0 0.0
        %1716 = vmatpush1.msra.mxu0 0.0
        %1717 = vmatprep.subr.mxu0 0.0
        %1718 = vmatpush1.msra.mxu0 0.0
        %1719 = vmatprep.subr.mxu0 0.0
        %1720 = vmatpush1.msra.mxu0 0.0
        %1721 = vmatprep.subr.mxu0 0.0
        %1722 = vmatpush1.msra.mxu0 0.0
        %1723 = vmatprep.subr.mxu0 0.0
        %1724 = vmatpush1.msra.mxu0 0.0
        %1725 = vmatprep.subr.mxu0 %v804
        %1726 = vmatpush1.msra.mxu0 %v803
        %1727 = vmatprep.subr.mxu0 %v796
        %1728 = vmatpush1.msra.mxu0 %v795
        %1729 = vmatprep.subr.mxu0 %v788
        %1730 = vmatpush1.msra.mxu0 %v787
        %1731 = vmatprep.subr.mxu0 %v780
        %1732 = vmatpush1.msra.mxu0 %v779
        %1733 = vmatprep.subr.mxu0 0.0
        %1734 = vmatpush2.msra.mxu0 0.0
        %1735 = vmatprep.subr.mxu0 0.0
        %1736 = vmatpush2.msra.mxu0 0.0
        %1737 = vmatprep.subr.mxu0 0.0
        %1738 = vmatpush2.msra.mxu0 0.0
        %1739 = vmatprep.subr.mxu0 0.0
        %1740 = vmatpush2.msra.mxu0 0.0
        %1741 = vmatprep.subr.mxu0 0.0
        %1742 = vmatpush2.msra.mxu0 0.0
        %1743 = vmatprep.subr.mxu0 0.0
        %1744 = vmatpush2.msra.mxu0 0.0
        %1745 = vmatprep.subr.mxu0 0.0
        %1746 = vmatpush2.msra.mxu0 0.0
        %1747 = vmatprep.subr.mxu0 0.0
        %1748 = vmatpush2.msra.mxu0 0.0
        %1749 = vmatprep.subr.mxu0 0.0
        %1750 = vmatpush2.msra.mxu0 0.0
        %1751 = vmatprep.subr.mxu0 0.0
        %1752 = vmatpush2.msra.mxu0 0.0
        %1753 = vmatprep.subr.mxu0 0.0
        %1754 = vmatpush2.msra.mxu0 0.0
        %1755 = vmatprep.subr.mxu0 0.0
        %1756 = vmatpush2.msra.mxu0 0.0
        %1757 = vmatprep.subr.mxu0 0.0
        %1758 = vmatpush2.msra.mxu0 0.0
        %1759 = vmatprep.subr.mxu0 0.0
        %1760 = vmatpush2.msra.mxu0 0.0
        %1761 = vmatprep.subr.mxu0 0.0
        %1762 = vmatpush2.msra.mxu0 0.0
        %1763 = vmatprep.subr.mxu0 0.0
        %1764 = vmatpush2.msra.mxu0 0.0
        %1765 = vmatprep.mubr.f32.mxu0 0.0
        %1766 = vmatmul.mubr.f32.gmra.mxu0 %v1693
        %v1767 = vpop.f32.mrf.mxu0
        %v1768 = vadd.f32 0.0, %v1767
        %v1769 = vpop.f32.mrf.mxu0
        %v1770 = vadd.f32 0.0, %v1769
        %1771 = vmatprep.mubr.f32.mxu0 0.0
        %1772 = vmatmul.mubr.f32.gmra.mxu0 %v1695
        %v1773 = vpop.f32.mrf.mxu0
        %v1774 = vadd.f32 0.0, %v1773
        %v1775 = vpop.f32.mrf.mxu0
        %v1776 = vadd.f32 0.0, %v1775
        %1777 = vmatprep.mubr.f32.mxu0 0.0
        %1778 = vmatmul.mubr.f32.gmra.mxu0 %v1697
        %v1779 = vpop.f32.mrf.mxu0
        %v1780 = vadd.f32 0.0, %v1779
        %v1781 = vpop.f32.mrf.mxu0
        %v1782 = vadd.f32 0.0, %v1781
        %1783 = vmatprep.mubr.f32.mxu0 0.0
        %1784 = vmatmul.mubr.f32.gmra.mxu0 %v1699
        %v1785 = vpop.f32.mrf.mxu0
        %v1786 = vadd.f32 0.0, %v1785
        %v1787 = vpop.f32.mrf.mxu0
        %v1788 = vadd.f32 0.0, %v1787
        %1789 = vdwg.mxu0
        %1790 = vmatprep.subr.mxu0 0.0
        %1791 = vmatpush1.msra.mxu0 0.0
        %1792 = vmatprep.subr.mxu0 0.0
        %1793 = vmatpush1.msra.mxu0 0.0
        %1794 = vmatprep.subr.mxu0 0.0
        %1795 = vmatpush1.msra.mxu0 0.0
        %1796 = vmatprep.subr.mxu0 0.0
        %1797 = vmatpush1.msra.mxu0 0.0
        %1798 = vmatprep.subr.mxu0 0.0
        %1799 = vmatpush1.msra.mxu0 0.0
        %1800 = vmatprep.subr.mxu0 0.0
        %1801 = vmatpush1.msra.mxu0 0.0
        %1802 = vmatprep.subr.mxu0 0.0
        %1803 = vmatpush1.msra.mxu0 0.0
        %1804 = vmatprep.subr.mxu0 0.0
        %1805 = vmatpush1.msra.mxu0 0.0
        %1806 = vmatprep.subr.mxu0 0.0
        %1807 = vmatpush1.msra.mxu0 0.0
        %1808 = vmatprep.subr.mxu0 0.0
        %1809 = vmatpush1.msra.mxu0 0.0
        %1810 = vmatprep.subr.mxu0 0.0
        %1811 = vmatpush1.msra.mxu0 0.0
        %1812 = vmatprep.subr.mxu0 0.0
        %1813 = vmatpush1.msra.mxu0 0.0
        %1814 = vmatprep.subr.mxu0 %v806
        %1815 = vmatpush1.msra.mxu0 %v805
        %1816 = vmatprep.subr.mxu0 %v798
        %1817 = vmatpush1.msra.mxu0 %v797
        %1818 = vmatprep.subr.mxu0 %v790
        %1819 = vmatpush1.msra.mxu0 %v789
        %1820 = vmatprep.subr.mxu0 %v782
        %1821 = vmatpush1.msra.mxu0 %v781
        %1822 = vmatprep.subr.mxu0 0.0
        %1823 = vmatpush2.msra.mxu0 0.0
        %1824 = vmatprep.subr.mxu0 0.0
        %1825 = vmatpush2.msra.mxu0 0.0
        %1826 = vmatprep.subr.mxu0 0.0
        %1827 = vmatpush2.msra.mxu0 0.0
        %1828 = vmatprep.subr.mxu0 0.0
        %1829 = vmatpush2.msra.mxu0 0.0
        %1830 = vmatprep.subr.mxu0 0.0
        %1831 = vmatpush2.msra.mxu0 0.0
        %1832 = vmatprep.subr.mxu0 0.0
        %1833 = vmatpush2.msra.mxu0 0.0
        %1834 = vmatprep.subr.mxu0 0.0
        %1835 = vmatpush2.msra.mxu0 0.0
        %1836 = vmatprep.subr.mxu0 0.0
        %1837 = vmatpush2.msra.mxu0 0.0
        %1838 = vmatprep.subr.mxu0 0.0
        %1839 = vmatpush2.msra.mxu0 0.0
        %1840 = vmatprep.subr.mxu0 0.0
        %1841 = vmatpush2.msra.mxu0 0.0
        %1842 = vmatprep.subr.mxu0 0.0
        %1843 = vmatpush2.msra.mxu0 0.0
        %1844 = vmatprep.subr.mxu0 0.0
        %1845 = vmatpush2.msra.mxu0 0.0
        %1846 = vmatprep.subr.mxu0 0.0
        %1847 = vmatpush2.msra.mxu0 0.0
        %1848 = vmatprep.subr.mxu0 0.0
        %1849 = vmatpush2.msra.mxu0 0.0
        %1850 = vmatprep.subr.mxu0 0.0
        %1851 = vmatpush2.msra.mxu0 0.0
        %1852 = vmatprep.subr.mxu0 0.0
        %1853 = vmatpush2.msra.mxu0 0.0
        %1854 = vmatprep.mubr.f32.mxu0 0.0
        %1855 = vmatmul.mubr.f32.gmra.mxu0 %v1693
        %v1856 = vpop.f32.mrf.mxu0
        %v1857 = vadd.f32 0.0, %v1856
        %v1858 = vpop.f32.mrf.mxu0
        %v1859 = vadd.f32 0.0, %v1858
        %1860 = vmatprep.mubr.f32.mxu0 0.0
        %1861 = vmatmul.mubr.f32.gmra.mxu0 %v1695
        %v1862 = vpop.f32.mrf.mxu0
        %v1863 = vadd.f32 0.0, %v1862
        %v1864 = vpop.f32.mrf.mxu0
        %v1865 = vadd.f32 0.0, %v1864
        %1866 = vmatprep.mubr.f32.mxu0 0.0
        %1867 = vmatmul.mubr.f32.gmra.mxu0 %v1697
        %v1868 = vpop.f32.mrf.mxu0
        %v1869 = vadd.f32 0.0, %v1868
        %v1870 = vpop.f32.mrf.mxu0
        %v1871 = vadd.f32 0.0, %v1870
        %1872 = vmatprep.mubr.f32.mxu0 0.0
        %1873 = vmatmul.mubr.f32.gmra.mxu0 %v1699
        %v1874 = vpop.f32.mrf.mxu0
        %v1875 = vadd.f32 0.0, %v1874
        %v1876 = vpop.f32.mrf.mxu0
        %v1877 = vadd.f32 0.0, %v1876
        %1878 = vdwg.mxu0
        %1879 = vmatprep.subr.mxu0 0.0
        %1880 = vmatpush1.msra.mxu0 0.0
        %1881 = vmatprep.subr.mxu0 0.0
        %1882 = vmatpush1.msra.mxu0 0.0
        %1883 = vmatprep.subr.mxu0 0.0
        %1884 = vmatpush1.msra.mxu0 0.0
        %1885 = vmatprep.subr.mxu0 0.0
        %1886 = vmatpush1.msra.mxu0 0.0
        %1887 = vmatprep.subr.mxu0 0.0
        %1888 = vmatpush1.msra.mxu0 0.0
        %1889 = vmatprep.subr.mxu0 0.0
        %1890 = vmatpush1.msra.mxu0 0.0
        %1891 = vmatprep.subr.mxu0 0.0
        %1892 = vmatpush1.msra.mxu0 0.0
        %1893 = vmatprep.subr.mxu0 0.0
        %1894 = vmatpush1.msra.mxu0 0.0
        %1895 = vmatprep.subr.mxu0 0.0
        %1896 = vmatpush1.msra.mxu0 0.0
        %1897 = vmatprep.subr.mxu0 0.0
        %1898 = vmatpush1.msra.mxu0 0.0
        %1899 = vmatprep.subr.mxu0 0.0
        %1900 = vmatpush1.msra.mxu0 0.0
        %1901 = vmatprep.subr.mxu0 0.0
        %1902 = vmatpush1.msra.mxu0 0.0
        %1903 = vmatprep.subr.mxu0 %v808
        %1904 = vmatpush1.msra.mxu0 %v807
        %1905 = vmatprep.subr.mxu0 %v800
        %1906 = vmatpush1.msra.mxu0 %v799
        %1907 = vmatprep.subr.mxu0 %v792
        %1908 = vmatpush1.msra.mxu0 %v791
        %1909 = vmatprep.subr.mxu0 %v784
        %1910 = vmatpush1.msra.mxu0 %v783
        %1911 = vmatprep.subr.mxu0 0.0
        %1912 = vmatpush2.msra.mxu0 0.0
        %1913 = vmatprep.subr.mxu0 0.0
        %1914 = vmatpush2.msra.mxu0 0.0
        %1915 = vmatprep.subr.mxu0 0.0
        %1916 = vmatpush2.msra.mxu0 0.0
        %1917 = vmatprep.subr.mxu0 0.0
        %1918 = vmatpush2.msra.mxu0 0.0
        %1919 = vmatprep.subr.mxu0 0.0
        %1920 = vmatpush2.msra.mxu0 0.0
        %1921 = vmatprep.subr.mxu0 0.0
        %1922 = vmatpush2.msra.mxu0 0.0
        %1923 = vmatprep.subr.mxu0 0.0
        %1924 = vmatpush2.msra.mxu0 0.0
        %1925 = vmatprep.subr.mxu0 0.0
        %1926 = vmatpush2.msra.mxu0 0.0
        %1927 = vmatprep.subr.mxu0 0.0
        %1928 = vmatpush2.msra.mxu0 0.0
        %1929 = vmatprep.subr.mxu0 0.0
        %1930 = vmatpush2.msra.mxu0 0.0
        %1931 = vmatprep.subr.mxu0 0.0
        %1932 = vmatpush2.msra.mxu0 0.0
        %1933 = vmatprep.subr.mxu0 0.0
        %1934 = vmatpush2.msra.mxu0 0.0
        %1935 = vmatprep.subr.mxu0 0.0
        %1936 = vmatpush2.msra.mxu0 0.0
        %1937 = vmatprep.subr.mxu0 0.0
        %1938 = vmatpush2.msra.mxu0 0.0
        %1939 = vmatprep.subr.mxu0 0.0
        %1940 = vmatpush2.msra.mxu0 0.0
        %1941 = vmatprep.subr.mxu0 0.0
        %1942 = vmatpush2.msra.mxu0 0.0
        %1943 = vmatprep.mubr.f32.mxu0 0.0
        %1944 = vmatmul.mubr.f32.gmra.mxu0 %v1693
        %v1945 = vpop.f32.mrf.mxu0
        %v1946 = vadd.f32 0.0, %v1945
        %v1947 = vpop.f32.mrf.mxu0
        %v1948 = vadd.f32 0.0, %v1947
        %1949 = vmatprep.mubr.f32.mxu0 0.0
        %1950 = vmatmul.mubr.f32.gmra.mxu0 %v1695
        %v1951 = vpop.f32.mrf.mxu0
        %v1952 = vadd.f32 0.0, %v1951
        %v1953 = vpop.f32.mrf.mxu0
        %v1954 = vadd.f32 0.0, %v1953
        %1955 = vmatprep.mubr.f32.mxu0 0.0
        %1956 = vmatmul.mubr.f32.gmra.mxu0 %v1697
        %v1957 = vpop.f32.mrf.mxu0
        %v1958 = vadd.f32 0.0, %v1957
        %v1959 = vpop.f32.mrf.mxu0
        %v1960 = vadd.f32 0.0, %v1959
        %1961 = vmatprep.mubr.f32.mxu0 0.0
        %1962 = vmatmul.mubr.f32.gmra.mxu0 %v1699
        %v1963 = vpop.f32.mrf.mxu0
        %v1964 = vadd.f32 0.0, %v1963
        %v1965 = vpop.f32.mrf.mxu0
        %v1966 = vadd.f32 0.0, %v1965
        %1967 = vdwg.mxu0
        %1968 = vmatprep.subr.mxu0 0.0
        %1969 = vmatpush1.msra.mxu0 0.0
        %1970 = vmatprep.subr.mxu0 0.0
        %1971 = vmatpush1.msra.mxu0 0.0
        %1972 = vmatprep.subr.mxu0 0.0
        %1973 = vmatpush1.msra.mxu0 0.0
        %1974 = vmatprep.subr.mxu0 0.0
        %1975 = vmatpush1.msra.mxu0 0.0
        %1976 = vmatprep.subr.mxu0 0.0
        %1977 = vmatpush1.msra.mxu0 0.0
        %1978 = vmatprep.subr.mxu0 0.0
        %1979 = vmatpush1.msra.mxu0 0.0
        %1980 = vmatprep.subr.mxu0 0.0
        %1981 = vmatpush1.msra.mxu0 0.0
        %1982 = vmatprep.subr.mxu0 0.0
        %1983 = vmatpush1.msra.mxu0 0.0
        %1984 = vmatprep.subr.mxu0 0.0
        %1985 = vmatpush1.msra.mxu0 0.0
        %1986 = vmatprep.subr.mxu0 0.0
        %1987 = vmatpush1.msra.mxu0 0.0
        %1988 = vmatprep.subr.mxu0 0.0
        %1989 = vmatpush1.msra.mxu0 0.0
        %1990 = vmatprep.subr.mxu0 0.0
        %1991 = vmatpush1.msra.mxu0 0.0
        %1992 = vmatprep.subr.mxu0 %v810
        %1993 = vmatpush1.msra.mxu0 %v809
        %1994 = vmatprep.subr.mxu0 %v802
        %1995 = vmatpush1.msra.mxu0 %v801
        %1996 = vmatprep.subr.mxu0 %v794
        %1997 = vmatpush1.msra.mxu0 %v793
        %1998 = vmatprep.subr.mxu0 %v786
        %1999 = vmatpush1.msra.mxu0 %v785
        %2000 = vmatprep.subr.mxu0 0.0
        %2001 = vmatpush2.msra.mxu0 0.0
        %2002 = vmatprep.subr.mxu0 0.0
        %2003 = vmatpush2.msra.mxu0 0.0
        %2004 = vmatprep.subr.mxu0 0.0
        %2005 = vmatpush2.msra.mxu0 0.0
        %2006 = vmatprep.subr.mxu0 0.0
        %2007 = vmatpush2.msra.mxu0 0.0
        %2008 = vmatprep.subr.mxu0 0.0
        %2009 = vmatpush2.msra.mxu0 0.0
        %2010 = vmatprep.subr.mxu0 0.0
        %2011 = vmatpush2.msra.mxu0 0.0
        %2012 = vmatprep.subr.mxu0 0.0
        %2013 = vmatpush2.msra.mxu0 0.0
        %2014 = vmatprep.subr.mxu0 0.0
        %2015 = vmatpush2.msra.mxu0 0.0
        %2016 = vmatprep.subr.mxu0 0.0
        %2017 = vmatpush2.msra.mxu0 0.0
        %2018 = vmatprep.subr.mxu0 0.0
        %2019 = vmatpush2.msra.mxu0 0.0
        %2020 = vmatprep.subr.mxu0 0.0
        %2021 = vmatpush2.msra.mxu0 0.0
        %2022 = vmatprep.subr.mxu0 0.0
        %2023 = vmatpush2.msra.mxu0 0.0
        %2024 = vmatprep.subr.mxu0 0.0
        %2025 = vmatpush2.msra.mxu0 0.0
        %2026 = vmatprep.subr.mxu0 0.0
        %2027 = vmatpush2.msra.mxu0 0.0
        %2028 = vmatprep.subr.mxu0 0.0
        %2029 = vmatpush2.msra.mxu0 0.0
        %2030 = vmatprep.subr.mxu0 0.0
        %2031 = vmatpush2.msra.mxu0 0.0
        %2032 = vmatprep.mubr.f32.mxu0 0.0
        %2033 = vmatmul.mubr.f32.gmra.mxu0 %v1693
        %v2034 = vpop.f32.mrf.mxu0
        %v2035 = vadd.f32 0.0, %v2034
        %v2036 = vpop.f32.mrf.mxu0
        %v2037 = vadd.f32 0.0, %v2036
        %2038 = vmatprep.mubr.f32.mxu0 0.0
        %2039 = vmatmul.mubr.f32.gmra.mxu0 %v1695
        %v2040 = vpop.f32.mrf.mxu0
        %v2041 = vadd.f32 0.0, %v2040
        %v2042 = vpop.f32.mrf.mxu0
        %v2043 = vadd.f32 0.0, %v2042
        %2044 = vmatprep.mubr.f32.mxu0 0.0
        %2045 = vmatmul.mubr.f32.gmra.mxu0 %v1697
        %v2046 = vpop.f32.mrf.mxu0
        %v2047 = vadd.f32 0.0, %v2046
        %v2048 = vpop.f32.mrf.mxu0
        %v2049 = vadd.f32 0.0, %v2048
        %2050 = vmatprep.mubr.f32.mxu0 0.0
        %2051 = vmatmul.mubr.f32.gmra.mxu0 %v1699
        %v2052 = vpop.f32.mrf.mxu0
        %v2053 = vadd.f32 0.0, %v2052
        %v2054 = vpop.f32.mrf.mxu0
        %v2055 = vadd.f32 0.0, %v2054
        %2056 = vdwg.mxu0
        %v2057 = vsel %vm1191, %v1677, 0
        %v2059 = vsel %vm1191, %v1678, 0
        %v2061 = vsel %vm1191, %v1679, 0
        %v2063 = vsel %vm1191, %v1680, 0
        %2065 = vmatprep.subr.mxu0 0.0
        %2066 = vmatpush1.msra.mxu0 0.0
        %2067 = vmatprep.subr.mxu0 0.0
        %2068 = vmatpush1.msra.mxu0 0.0
        %2069 = vmatprep.subr.mxu0 0.0
        %2070 = vmatpush1.msra.mxu0 0.0
        %2071 = vmatprep.subr.mxu0 0.0
        %2072 = vmatpush1.msra.mxu0 0.0
        %2073 = vmatprep.subr.mxu0 0.0
        %2074 = vmatpush1.msra.mxu0 0.0
        %2075 = vmatprep.subr.mxu0 0.0
        %2076 = vmatpush1.msra.mxu0 0.0
        %2077 = vmatprep.subr.mxu0 0.0
        %2078 = vmatpush1.msra.mxu0 0.0
        %2079 = vmatprep.subr.mxu0 0.0
        %2080 = vmatpush1.msra.mxu0 0.0
        %2081 = vmatprep.subr.mxu0 0.0
        %2082 = vmatpush1.msra.mxu0 0.0
        %2083 = vmatprep.subr.mxu0 0.0
        %2084 = vmatpush1.msra.mxu0 0.0
        %2085 = vmatprep.subr.mxu0 0.0
        %2086 = vmatpush1.msra.mxu0 0.0
        %2087 = vmatprep.subr.mxu0 0.0
        %2088 = vmatpush1.msra.mxu0 0.0
        %2089 = vmatprep.subr.mxu0 %v1669
        %2090 = vmatpush1.msra.mxu0 %v1668
        %2091 = vmatprep.subr.mxu0 %v1661
        %2092 = vmatpush1.msra.mxu0 %v1660
        %2093 = vmatprep.subr.mxu0 %v1653
        %2094 = vmatpush1.msra.mxu0 %v1652
        %2095 = vmatprep.subr.mxu0 %v1645
        %2096 = vmatpush1.msra.mxu0 %v1644
        %2097 = vmatprep.subr.mxu0 0.0
        %2098 = vmatpush2.msra.mxu0 0.0
        %2099 = vmatprep.subr.mxu0 0.0
        %2100 = vmatpush2.msra.mxu0 0.0
        %2101 = vmatprep.subr.mxu0 0.0
        %2102 = vmatpush2.msra.mxu0 0.0
        %2103 = vmatprep.subr.mxu0 0.0
        %2104 = vmatpush2.msra.mxu0 0.0
        %2105 = vmatprep.subr.mxu0 0.0
        %2106 = vmatpush2.msra.mxu0 0.0
        %2107 = vmatprep.subr.mxu0 0.0
        %2108 = vmatpush2.msra.mxu0 0.0
        %2109 = vmatprep.subr.mxu0 0.0
        %2110 = vmatpush2.msra.mxu0 0.0
        %2111 = vmatprep.subr.mxu0 0.0
        %2112 = vmatpush2.msra.mxu0 0.0
        %2113 = vmatprep.subr.mxu0 0.0
        %2114 = vmatpush2.msra.mxu0 0.0
        %2115 = vmatprep.subr.mxu0 0.0
        %2116 = vmatpush2.msra.mxu0 0.0
        %2117 = vmatprep.subr.mxu0 0.0
        %2118 = vmatpush2.msra.mxu0 0.0
        %2119 = vmatprep.subr.mxu0 0.0
        %2120 = vmatpush2.msra.mxu0 0.0
        %2121 = vmatprep.subr.mxu0 0.0
        %2122 = vmatpush2.msra.mxu0 0.0
        %2123 = vmatprep.subr.mxu0 0.0
        %2124 = vmatpush2.msra.mxu0 0.0
        %2125 = vmatprep.subr.mxu0 0.0
        %2126 = vmatpush2.msra.mxu0 0.0
        %2127 = vmatprep.subr.mxu0 0.0
        %2128 = vmatpush2.msra.mxu0 0.0
        %2129 = vmatprep.mubr.f32.mxu0 0.0
        %2130 = vmatmul.mubr.f32.gmra.mxu0 %v2057
        %v2131 = vpop.f32.mrf.mxu0
        %v2132 = vadd.f32 %v1768, %v2131
        %v2133 = vpop.f32.mrf.mxu0
        %v2134 = vadd.f32 %v1770, %v2133
        %2135 = vmatprep.mubr.f32.mxu0 0.0
        %2136 = vmatmul.mubr.f32.gmra.mxu0 %v2059
        %v2137 = vpop.f32.mrf.mxu0
        %v2138 = vadd.f32 %v1774, %v2137
        %v2139 = vpop.f32.mrf.mxu0
        %v2140 = vadd.f32 %v1776, %v2139
        %2141 = vmatprep.mubr.f32.mxu0 0.0
        %2142 = vmatmul.mubr.f32.gmra.mxu0 %v2061
        %v2143 = vpop.f32.mrf.mxu0
        %v2144 = vadd.f32 %v1780, %v2143
        %v2145 = vpop.f32.mrf.mxu0
        %v2146 = vadd.f32 %v1782, %v2145
        %2147 = vmatprep.mubr.f32.mxu0 0.0
        %2148 = vmatmul.mubr.f32.gmra.mxu0 %v2063
        %v2149 = vpop.f32.mrf.mxu0
        %v2150 = vadd.f32 %v1786, %v2149
        %v2151 = vpop.f32.mrf.mxu0
        %v2152 = vadd.f32 %v1788, %v2151
        %2153 = vdwg.mxu0
        %2154 = vmatprep.subr.mxu0 0.0
        %2155 = vmatpush1.msra.mxu0 0.0
        %2156 = vmatprep.subr.mxu0 0.0
        %2157 = vmatpush1.msra.mxu0 0.0
        %2158 = vmatprep.subr.mxu0 0.0
        %2159 = vmatpush1.msra.mxu0 0.0
        %2160 = vmatprep.subr.mxu0 0.0
        %2161 = vmatpush1.msra.mxu0 0.0
        %2162 = vmatprep.subr.mxu0 0.0
        %2163 = vmatpush1.msra.mxu0 0.0
        %2164 = vmatprep.subr.mxu0 0.0
        %2165 = vmatpush1.msra.mxu0 0.0
        %2166 = vmatprep.subr.mxu0 0.0
        %2167 = vmatpush1.msra.mxu0 0.0
        %2168 = vmatprep.subr.mxu0 0.0
        %2169 = vmatpush1.msra.mxu0 0.0
        %2170 = vmatprep.subr.mxu0 0.0
        %2171 = vmatpush1.msra.mxu0 0.0
        %2172 = vmatprep.subr.mxu0 0.0
        %2173 = vmatpush1.msra.mxu0 0.0
        %2174 = vmatprep.subr.mxu0 0.0
        %2175 = vmatpush1.msra.mxu0 0.0
        %2176 = vmatprep.subr.mxu0 0.0
        %2177 = vmatpush1.msra.mxu0 0.0
        %2178 = vmatprep.subr.mxu0 %v1671
        %2179 = vmatpush1.msra.mxu0 %v1670
        %2180 = vmatprep.subr.mxu0 %v1663
        %2181 = vmatpush1.msra.mxu0 %v1662
        %2182 = vmatprep.subr.mxu0 %v1655
        %2183 = vmatpush1.msra.mxu0 %v1654
        %2184 = vmatprep.subr.mxu0 %v1647
        %2185 = vmatpush1.msra.mxu0 %v1646
        %2186 = vmatprep.subr.mxu0 0.0
        %2187 = vmatpush2.msra.mxu0 0.0
        %2188 = vmatprep.subr.mxu0 0.0
        %2189 = vmatpush2.msra.mxu0 0.0
        %2190 = vmatprep.subr.mxu0 0.0
        %2191 = vmatpush2.msra.mxu0 0.0
        %2192 = vmatprep.subr.mxu0 0.0
        %2193 = vmatpush2.msra.mxu0 0.0
        %2194 = vmatprep.subr.mxu0 0.0
        %2195 = vmatpush2.msra.mxu0 0.0
        %2196 = vmatprep.subr.mxu0 0.0
        %2197 = vmatpush2.msra.mxu0 0.0
        %2198 = vmatprep.subr.mxu0 0.0
        %2199 = vmatpush2.msra.mxu0 0.0
        %2200 = vmatprep.subr.mxu0 0.0
        %2201 = vmatpush2.msra.mxu0 0.0
        %2202 = vmatprep.subr.mxu0 0.0
        %2203 = vmatpush2.msra.mxu0 0.0
        %2204 = vmatprep.subr.mxu0 0.0
        %2205 = vmatpush2.msra.mxu0 0.0
        %2206 = vmatprep.subr.mxu0 0.0
        %2207 = vmatpush2.msra.mxu0 0.0
        %2208 = vmatprep.subr.mxu0 0.0
        %2209 = vmatpush2.msra.mxu0 0.0
        %2210 = vmatprep.subr.mxu0 0.0
        %2211 = vmatpush2.msra.mxu0 0.0
        %2212 = vmatprep.subr.mxu0 0.0
        %2213 = vmatpush2.msra.mxu0 0.0
        %2214 = vmatprep.subr.mxu0 0.0
        %2215 = vmatpush2.msra.mxu0 0.0
        %2216 = vmatprep.subr.mxu0 0.0
        %2217 = vmatpush2.msra.mxu0 0.0
        %2218 = vmatprep.mubr.f32.mxu0 0.0
        %2219 = vmatmul.mubr.f32.gmra.mxu0 %v2057
        %v2220 = vpop.f32.mrf.mxu0
        %v2221 = vadd.f32 %v1857, %v2220
        %v2222 = vpop.f32.mrf.mxu0
        %v2223 = vadd.f32 %v1859, %v2222
        %2224 = vmatprep.mubr.f32.mxu0 0.0
        %2225 = vmatmul.mubr.f32.gmra.mxu0 %v2059
        %v2226 = vpop.f32.mrf.mxu0
        %v2227 = vadd.f32 %v1863, %v2226
        %v2228 = vpop.f32.mrf.mxu0
        %v2229 = vadd.f32 %v1865, %v2228
        %2230 = vmatprep.mubr.f32.mxu0 0.0
        %2231 = vmatmul.mubr.f32.gmra.mxu0 %v2061
        %v2232 = vpop.f32.mrf.mxu0
        %v2233 = vadd.f32 %v1869, %v2232
        %v2234 = vpop.f32.mrf.mxu0
        %v2235 = vadd.f32 %v1871, %v2234
        %2236 = vmatprep.mubr.f32.mxu0 0.0
        %2237 = vmatmul.mubr.f32.gmra.mxu0 %v2063
        %v2238 = vpop.f32.mrf.mxu0
        %v2239 = vadd.f32 %v1875, %v2238
        %v2240 = vpop.f32.mrf.mxu0
        %v2241 = vadd.f32 %v1877, %v2240
        %2242 = vdwg.mxu0
        %2243 = vmatprep.subr.mxu0 0.0
        %2244 = vmatpush1.msra.mxu0 0.0
        %2245 = vmatprep.subr.mxu0 0.0
        %2246 = vmatpush1.msra.mxu0 0.0
        %2247 = vmatprep.subr.mxu0 0.0
        %2248 = vmatpush1.msra.mxu0 0.0
        %2249 = vmatprep.subr.mxu0 0.0
        %2250 = vmatpush1.msra.mxu0 0.0
        %2251 = vmatprep.subr.mxu0 0.0
        %2252 = vmatpush1.msra.mxu0 0.0
        %2253 = vmatprep.subr.mxu0 0.0
        %2254 = vmatpush1.msra.mxu0 0.0
        %2255 = vmatprep.subr.mxu0 0.0
        %2256 = vmatpush1.msra.mxu0 0.0
        %2257 = vmatprep.subr.mxu0 0.0
        %2258 = vmatpush1.msra.mxu0 0.0
        %2259 = vmatprep.subr.mxu0 0.0
        %2260 = vmatpush1.msra.mxu0 0.0
        %2261 = vmatprep.subr.mxu0 0.0
        %2262 = vmatpush1.msra.mxu0 0.0
        %2263 = vmatprep.subr.mxu0 0.0
        %2264 = vmatpush1.msra.mxu0 0.0
        %2265 = vmatprep.subr.mxu0 0.0
        %2266 = vmatpush1.msra.mxu0 0.0
        %2267 = vmatprep.subr.mxu0 %v1673
        %2268 = vmatpush1.msra.mxu0 %v1672
        %2269 = vmatprep.subr.mxu0 %v1665
        %2270 = vmatpush1.msra.mxu0 %v1664
        %2271 = vmatprep.subr.mxu0 %v1657
        %2272 = vmatpush1.msra.mxu0 %v1656
        %2273 = vmatprep.subr.mxu0 %v1649
        %2274 = vmatpush1.msra.mxu0 %v1648
        %2275 = vmatprep.subr.mxu0 0.0
        %2276 = vmatpush2.msra.mxu0 0.0
        %2277 = vmatprep.subr.mxu0 0.0
        %2278 = vmatpush2.msra.mxu0 0.0
        %2279 = vmatprep.subr.mxu0 0.0
        %2280 = vmatpush2.msra.mxu0 0.0
        %2281 = vmatprep.subr.mxu0 0.0
        %2282 = vmatpush2.msra.mxu0 0.0
        %2283 = vmatprep.subr.mxu0 0.0
        %2284 = vmatpush2.msra.mxu0 0.0
        %2285 = vmatprep.subr.mxu0 0.0
        %2286 = vmatpush2.msra.mxu0 0.0
        %2287 = vmatprep.subr.mxu0 0.0
        %2288 = vmatpush2.msra.mxu0 0.0
        %2289 = vmatprep.subr.mxu0 0.0
        %2290 = vmatpush2.msra.mxu0 0.0
        %2291 = vmatprep.subr.mxu0 0.0
        %2292 = vmatpush2.msra.mxu0 0.0
        %2293 = vmatprep.subr.mxu0 0.0
        %2294 = vmatpush2.msra.mxu0 0.0
        %2295 = vmatprep.subr.mxu0 0.0
        %2296 = vmatpush2.msra.mxu0 0.0
        %2297 = vmatprep.subr.mxu0 0.0
        %2298 = vmatpush2.msra.mxu0 0.0
        %2299 = vmatprep.subr.mxu0 0.0
        %2300 = vmatpush2.msra.mxu0 0.0
        %2301 = vmatprep.subr.mxu0 0.0
        %2302 = vmatpush2.msra.mxu0 0.0
        %2303 = vmatprep.subr.mxu0 0.0
        %2304 = vmatpush2.msra.mxu0 0.0
        %2305 = vmatprep.subr.mxu0 0.0
        %2306 = vmatpush2.msra.mxu0 0.0
        %2307 = vmatprep.mubr.f32.mxu0 0.0
        %2308 = vmatmul.mubr.f32.gmra.mxu0 %v2057
        %v2309 = vpop.f32.mrf.mxu0
        %v2310 = vadd.f32 %v1946, %v2309
        %v2311 = vpop.f32.mrf.mxu0
        %v2312 = vadd.f32 %v1948, %v2311
        %2313 = vmatprep.mubr.f32.mxu0 0.0
        %2314 = vmatmul.mubr.f32.gmra.mxu0 %v2059
        %v2315 = vpop.f32.mrf.mxu0
        %v2316 = vadd.f32 %v1952, %v2315
        %v2317 = vpop.f32.mrf.mxu0
        %v2318 = vadd.f32 %v1954, %v2317
        %2319 = vmatprep.mubr.f32.mxu0 0.0
        %2320 = vmatmul.mubr.f32.gmra.mxu0 %v2061
        %v2321 = vpop.f32.mrf.mxu0
        %v2322 = vadd.f32 %v1958, %v2321
        %v2323 = vpop.f32.mrf.mxu0
        %v2324 = vadd.f32 %v1960, %v2323
        %2325 = vmatprep.mubr.f32.mxu0 0.0
        %2326 = vmatmul.mubr.f32.gmra.mxu0 %v2063
        %v2327 = vpop.f32.mrf.mxu0
        %v2328 = vadd.f32 %v1964, %v2327
        %v2329 = vpop.f32.mrf.mxu0
        %v2330 = vadd.f32 %v1966, %v2329
        %2331 = vdwg.mxu0
        %2332 = vmatprep.subr.mxu0 0.0
        %2333 = vmatpush1.msra.mxu0 0.0
        %2334 = vmatprep.subr.mxu0 0.0
        %2335 = vmatpush1.msra.mxu0 0.0
        %2336 = vmatprep.subr.mxu0 0.0
        %2337 = vmatpush1.msra.mxu0 0.0
        %2338 = vmatprep.subr.mxu0 0.0
        %2339 = vmatpush1.msra.mxu0 0.0
        %2340 = vmatprep.subr.mxu0 0.0
        %2341 = vmatpush1.msra.mxu0 0.0
        %2342 = vmatprep.subr.mxu0 0.0
        %2343 = vmatpush1.msra.mxu0 0.0
        %2344 = vmatprep.subr.mxu0 0.0
        %2345 = vmatpush1.msra.mxu0 0.0
        %2346 = vmatprep.subr.mxu0 0.0
        %2347 = vmatpush1.msra.mxu0 0.0
        %2348 = vmatprep.subr.mxu0 0.0
        %2349 = vmatpush1.msra.mxu0 0.0
        %2350 = vmatprep.subr.mxu0 0.0
        %2351 = vmatpush1.msra.mxu0 0.0
        %2352 = vmatprep.subr.mxu0 0.0
        %2353 = vmatpush1.msra.mxu0 0.0
        %2354 = vmatprep.subr.mxu0 0.0
        %2355 = vmatpush1.msra.mxu0 0.0
        %2356 = vmatprep.subr.mxu0 %v1675
        %2357 = vmatpush1.msra.mxu0 %v1674
        %2358 = vmatprep.subr.mxu0 %v1667
        %2359 = vmatpush1.msra.mxu0 %v1666
        %2360 = vmatprep.subr.mxu0 %v1659
        %2361 = vmatpush1.msra.mxu0 %v1658
        %2362 = vmatprep.subr.mxu0 %v1651
        %2363 = vmatpush1.msra.mxu0 %v1650
        %2364 = vmatprep.subr.mxu0 0.0
        %2365 = vmatpush2.msra.mxu0 0.0
        %2366 = vmatprep.subr.mxu0 0.0
        %2367 = vmatpush2.msra.mxu0 0.0
        %2368 = vmatprep.subr.mxu0 0.0
        %2369 = vmatpush2.msra.mxu0 0.0
        %2370 = vmatprep.subr.mxu0 0.0
        %2371 = vmatpush2.msra.mxu0 0.0
        %2372 = vmatprep.subr.mxu0 0.0
        %2373 = vmatpush2.msra.mxu0 0.0
        %2374 = vmatprep.subr.mxu0 0.0
        %2375 = vmatpush2.msra.mxu0 0.0
        %2376 = vmatprep.subr.mxu0 0.0
        %2377 = vmatpush2.msra.mxu0 0.0
        %2378 = vmatprep.subr.mxu0 0.0
        %2379 = vmatpush2.msra.mxu0 0.0
        %2380 = vmatprep.subr.mxu0 0.0
        %2381 = vmatpush2.msra.mxu0 0.0
        %2382 = vmatprep.subr.mxu0 0.0
        %2383 = vmatpush2.msra.mxu0 0.0
        %2384 = vmatprep.subr.mxu0 0.0
        %2385 = vmatpush2.msra.mxu0 0.0
        %2386 = vmatprep.subr.mxu0 0.0
        %2387 = vmatpush2.msra.mxu0 0.0
        %2388 = vmatprep.subr.mxu0 0.0
        %2389 = vmatpush2.msra.mxu0 0.0
        %2390 = vmatprep.subr.mxu0 0.0
        %2391 = vmatpush2.msra.mxu0 0.0
        %2392 = vmatprep.subr.mxu0 0.0
        %2393 = vmatpush2.msra.mxu0 0.0
        %2394 = vmatprep.subr.mxu0 0.0
        %2395 = vmatpush2.msra.mxu0 0.0
        %2396 = vmatprep.mubr.f32.mxu0 0.0
        %2397 = vmatmul.mubr.f32.gmra.mxu0 %v2057
        %v2398 = vpop.f32.mrf.mxu0
        %v2399 = vadd.f32 %v2035, %v2398
        %v2400 = vpop.f32.mrf.mxu0
        %v2401 = vadd.f32 %v2037, %v2400
        %2402 = vmatprep.mubr.f32.mxu0 0.0
        %2403 = vmatmul.mubr.f32.gmra.mxu0 %v2059
        %v2404 = vpop.f32.mrf.mxu0
        %v2405 = vadd.f32 %v2041, %v2404
        %v2406 = vpop.f32.mrf.mxu0
        %v2407 = vadd.f32 %v2043, %v2406
        %2408 = vmatprep.mubr.f32.mxu0 0.0
        %2409 = vmatmul.mubr.f32.gmra.mxu0 %v2061
        %v2410 = vpop.f32.mrf.mxu0
        %v2411 = vadd.f32 %v2047, %v2410
        %v2412 = vpop.f32.mrf.mxu0
        %v2413 = vadd.f32 %v2049, %v2412
        %2414 = vmatprep.mubr.f32.mxu0 0.0
        %2415 = vmatmul.mubr.f32.gmra.mxu0 %v2063
        %v2416 = vpop.f32.mrf.mxu0
        %v2417 = vadd.f32 %v2053, %v2416
        %v2418 = vpop.f32.mrf.mxu0
        %v2419 = vadd.f32 %v2055, %v2418
        %2420 = vdwg.mxu0
        %2421 = vrot.lane.b32.xlu0 %v1677, 64
        %v2422 = vpop.permute.xlu0 %2421
        %2423 = vrot.lane.b32.xlu0 %v1678, 64
        %v2424 = vpop.permute.xlu0 %2423
        %2425 = vrot.lane.b32.xlu0 %v1679, 64
        %v2426 = vpop.permute.xlu0 %2425
        %2427 = vrot.lane.b32.xlu0 %v1680, 64
        %v2428 = vpop.permute.xlu0 %2427
        %v2429 = vsel %vm353, %v2422, 0
        %v2431 = vsel %vm353, %v2424, 0
        %v2433 = vsel %vm353, %v2426, 0
        %v2435 = vsel %vm353, %v2428, 0
        %2437 = vmatprep.subr.mxu0 0.0
        %2438 = vmatpush1.msra.mxu0 0.0
        %2439 = vmatprep.subr.mxu0 0.0
        %2440 = vmatpush1.msra.mxu0 0.0
        %2441 = vmatprep.subr.mxu0 0.0
        %2442 = vmatpush1.msra.mxu0 0.0
        %2443 = vmatprep.subr.mxu0 0.0
        %2444 = vmatpush1.msra.mxu0 0.0
        %2445 = vmatprep.subr.mxu0 0.0
        %2446 = vmatpush1.msra.mxu0 0.0
        %2447 = vmatprep.subr.mxu0 0.0
        %2448 = vmatpush1.msra.mxu0 0.0
        %2449 = vmatprep.subr.mxu0 0.0
        %2450 = vmatpush1.msra.mxu0 0.0
        %2451 = vmatprep.subr.mxu0 0.0
        %2452 = vmatpush1.msra.mxu0 0.0
        %2453 = vmatprep.subr.mxu0 0.0
        %2454 = vmatpush1.msra.mxu0 0.0
        %2455 = vmatprep.subr.mxu0 0.0
        %2456 = vmatpush1.msra.mxu0 0.0
        %2457 = vmatprep.subr.mxu0 0.0
        %2458 = vmatpush1.msra.mxu0 0.0
        %2459 = vmatprep.subr.mxu0 0.0
        %2460 = vmatpush1.msra.mxu0 0.0
        %2461 = vmatprep.subr.mxu0 0.0
        %2462 = vmatpush1.msra.mxu0 0.0
        %2463 = vmatprep.subr.mxu0 %v371
        %2464 = vmatpush1.msra.mxu0 %v368
        %2465 = vmatprep.subr.mxu0 %v310
        %2466 = vmatpush1.msra.mxu0 %v309
        %2467 = vmatprep.subr.mxu0 %v302
        %2468 = vmatpush1.msra.mxu0 %v301
        %2469 = vmatprep.subr.mxu0 0.0
        %2470 = vmatpush2.msra.mxu0 0.0
        %2471 = vmatprep.subr.mxu0 0.0
        %2472 = vmatpush2.msra.mxu0 0.0
        %2473 = vmatprep.subr.mxu0 0.0
        %2474 = vmatpush2.msra.mxu0 0.0
        %2475 = vmatprep.subr.mxu0 0.0
        %2476 = vmatpush2.msra.mxu0 0.0
        %2477 = vmatprep.subr.mxu0 0.0
        %2478 = vmatpush2.msra.mxu0 0.0
        %2479 = vmatprep.subr.mxu0 0.0
        %2480 = vmatpush2.msra.mxu0 0.0
        %2481 = vmatprep.subr.mxu0 0.0
        %2482 = vmatpush2.msra.mxu0 0.0
        %2483 = vmatprep.subr.mxu0 0.0
        %2484 = vmatpush2.msra.mxu0 0.0
        %2485 = vmatprep.subr.mxu0 0.0
        %2486 = vmatpush2.msra.mxu0 0.0
        %2487 = vmatprep.subr.mxu0 0.0
        %2488 = vmatpush2.msra.mxu0 0.0
        %2489 = vmatprep.subr.mxu0 0.0
        %2490 = vmatpush2.msra.mxu0 0.0
        %2491 = vmatprep.subr.mxu0 0.0
        %2492 = vmatpush2.msra.mxu0 0.0
        %2493 = vmatprep.subr.mxu0 0.0
        %2494 = vmatpush2.msra.mxu0 0.0
        %2495 = vmatprep.subr.mxu0 0.0
        %2496 = vmatpush2.msra.mxu0 0.0
        %2497 = vmatprep.subr.mxu0 0.0
        %2498 = vmatpush2.msra.mxu0 0.0
        %2499 = vmatprep.subr.mxu0 0.0
        %2500 = vmatpush2.msra.mxu0 0.0
        %2501 = vmatprep.mubr.f32.mxu0 0.0
        %2502 = vmatmul.mubr.f32.gmra.mxu0 %v2429
        %v2503 = vpop.f32.mrf.mxu0
        %v2504 = vadd.f32 0.0, %v2503
        %v2505 = vpop.f32.mrf.mxu0
        %v2506 = vadd.f32 0.0, %v2505
        %2507 = vmatprep.mubr.f32.mxu0 0.0
        %2508 = vmatmul.mubr.f32.gmra.mxu0 %v2431
        %v2509 = vpop.f32.mrf.mxu0
        %v2510 = vadd.f32 0.0, %v2509
        %v2511 = vpop.f32.mrf.mxu0
        %v2512 = vadd.f32 0.0, %v2511
        %2513 = vmatprep.mubr.f32.mxu0 0.0
        %2514 = vmatmul.mubr.f32.gmra.mxu0 %v2433
        %v2515 = vpop.f32.mrf.mxu0
        %v2516 = vadd.f32 0.0, %v2515
        %v2517 = vpop.f32.mrf.mxu0
        %v2518 = vadd.f32 0.0, %v2517
        %2519 = vmatprep.mubr.f32.mxu0 0.0
        %2520 = vmatmul.mubr.f32.gmra.mxu0 %v2435
        %v2521 = vpop.f32.mrf.mxu0
        %v2522 = vadd.f32 0.0, %v2521
        %v2523 = vpop.f32.mrf.mxu0
        %v2524 = vadd.f32 0.0, %v2523
        %2525 = vdwg.mxu0
        %2526 = vmatprep.subr.mxu0 0.0
        %2527 = vmatpush1.msra.mxu0 0.0
        %2528 = vmatprep.subr.mxu0 0.0
        %2529 = vmatpush1.msra.mxu0 0.0
        %2530 = vmatprep.subr.mxu0 0.0
        %2531 = vmatpush1.msra.mxu0 0.0
        %2532 = vmatprep.subr.mxu0 0.0
        %2533 = vmatpush1.msra.mxu0 0.0
        %2534 = vmatprep.subr.mxu0 0.0
        %2535 = vmatpush1.msra.mxu0 0.0
        %2536 = vmatprep.subr.mxu0 0.0
        %2537 = vmatpush1.msra.mxu0 0.0
        %2538 = vmatprep.subr.mxu0 0.0
        %2539 = vmatpush1.msra.mxu0 0.0
        %2540 = vmatprep.subr.mxu0 0.0
        %2541 = vmatpush1.msra.mxu0 0.0
        %2542 = vmatprep.subr.mxu0 0.0
        %2543 = vmatpush1.msra.mxu0 0.0
        %2544 = vmatprep.subr.mxu0 0.0
        %2545 = vmatpush1.msra.mxu0 0.0
        %2546 = vmatprep.subr.mxu0 0.0
        %2547 = vmatpush1.msra.mxu0 0.0
        %2548 = vmatprep.subr.mxu0 0.0
        %2549 = vmatpush1.msra.mxu0 0.0
        %2550 = vmatprep.subr.mxu0 0.0
        %2551 = vmatpush1.msra.mxu0 0.0
        %2552 = vmatprep.subr.mxu0 %v377
        %2553 = vmatpush1.msra.mxu0 %v374
        %2554 = vmatprep.subr.mxu0 %v312
        %2555 = vmatpush1.msra.mxu0 %v311
        %2556 = vmatprep.subr.mxu0 %v304
        %2557 = vmatpush1.msra.mxu0 %v303
        %2558 = vmatprep.subr.mxu0 0.0
        %2559 = vmatpush2.msra.mxu0 0.0
        %2560 = vmatprep.subr.mxu0 0.0
        %2561 = vmatpush2.msra.mxu0 0.0
        %2562 = vmatprep.subr.mxu0 0.0
        %2563 = vmatpush2.msra.mxu0 0.0
        %2564 = vmatprep.subr.mxu0 0.0
        %2565 = vmatpush2.msra.mxu0 0.0
        %2566 = vmatprep.subr.mxu0 0.0
        %2567 = vmatpush2.msra.mxu0 0.0
        %2568 = vmatprep.subr.mxu0 0.0
        %2569 = vmatpush2.msra.mxu0 0.0
        %2570 = vmatprep.subr.mxu0 0.0
        %2571 = vmatpush2.msra.mxu0 0.0
        %2572 = vmatprep.subr.mxu0 0.0
        %2573 = vmatpush2.msra.mxu0 0.0
        %2574 = vmatprep.subr.mxu0 0.0
        %2575 = vmatpush2.msra.mxu0 0.0
        %2576 = vmatprep.subr.mxu0 0.0
        %2577 = vmatpush2.msra.mxu0 0.0
        %2578 = vmatprep.subr.mxu0 0.0
        %2579 = vmatpush2.msra.mxu0 0.0
        %2580 = vmatprep.subr.mxu0 0.0
        %2581 = vmatpush2.msra.mxu0 0.0
        %2582 = vmatprep.subr.mxu0 0.0
        %2583 = vmatpush2.msra.mxu0 0.0
        %2584 = vmatprep.subr.mxu0 0.0
        %2585 = vmatpush2.msra.mxu0 0.0
        %2586 = vmatprep.subr.mxu0 0.0
        %2587 = vmatpush2.msra.mxu0 0.0
        %2588 = vmatprep.subr.mxu0 0.0
        %2589 = vmatpush2.msra.mxu0 0.0
        %2590 = vmatprep.mubr.f32.mxu0 0.0
        %2591 = vmatmul.mubr.f32.gmra.mxu0 %v2429
        %v2592 = vpop.f32.mrf.mxu0
        %v2593 = vadd.f32 0.0, %v2592
        %v2594 = vpop.f32.mrf.mxu0
        %v2595 = vadd.f32 0.0, %v2594
        %2596 = vmatprep.mubr.f32.mxu0 0.0
        %2597 = vmatmul.mubr.f32.gmra.mxu0 %v2431
        %v2598 = vpop.f32.mrf.mxu0
        %v2599 = vadd.f32 0.0, %v2598
        %v2600 = vpop.f32.mrf.mxu0
        %v2601 = vadd.f32 0.0, %v2600
        %2602 = vmatprep.mubr.f32.mxu0 0.0
        %2603 = vmatmul.mubr.f32.gmra.mxu0 %v2433
        %v2604 = vpop.f32.mrf.mxu0
        %v2605 = vadd.f32 0.0, %v2604
        %v2606 = vpop.f32.mrf.mxu0
        %v2607 = vadd.f32 0.0, %v2606
        %2608 = vmatprep.mubr.f32.mxu0 0.0
        %2609 = vmatmul.mubr.f32.gmra.mxu0 %v2435
        %v2610 = vpop.f32.mrf.mxu0
        %v2611 = vadd.f32 0.0, %v2610
        %v2612 = vpop.f32.mrf.mxu0
        %v2613 = vadd.f32 0.0, %v2612
        %2614 = vdwg.mxu0
        %2615 = vmatprep.subr.mxu0 0.0
        %2616 = vmatpush1.msra.mxu0 0.0
        %2617 = vmatprep.subr.mxu0 0.0
        %2618 = vmatpush1.msra.mxu0 0.0
        %2619 = vmatprep.subr.mxu0 0.0
        %2620 = vmatpush1.msra.mxu0 0.0
        %2621 = vmatprep.subr.mxu0 0.0
        %2622 = vmatpush1.msra.mxu0 0.0
        %2623 = vmatprep.subr.mxu0 0.0
        %2624 = vmatpush1.msra.mxu0 0.0
        %2625 = vmatprep.subr.mxu0 0.0
        %2626 = vmatpush1.msra.mxu0 0.0
        %2627 = vmatprep.subr.mxu0 0.0
        %2628 = vmatpush1.msra.mxu0 0.0
        %2629 = vmatprep.subr.mxu0 0.0
        %2630 = vmatpush1.msra.mxu0 0.0
        %2631 = vmatprep.subr.mxu0 0.0
        %2632 = vmatpush1.msra.mxu0 0.0
        %2633 = vmatprep.subr.mxu0 0.0
        %2634 = vmatpush1.msra.mxu0 0.0
        %2635 = vmatprep.subr.mxu0 0.0
        %2636 = vmatpush1.msra.mxu0 0.0
        %2637 = vmatprep.subr.mxu0 0.0
        %2638 = vmatpush1.msra.mxu0 0.0
        %2639 = vmatprep.subr.mxu0 0.0
        %2640 = vmatpush1.msra.mxu0 0.0
        %2641 = vmatprep.subr.mxu0 %v383
        %2642 = vmatpush1.msra.mxu0 %v380
        %2643 = vmatprep.subr.mxu0 %v314
        %2644 = vmatpush1.msra.mxu0 %v313
        %2645 = vmatprep.subr.mxu0 %v306
        %2646 = vmatpush1.msra.mxu0 %v305
        %2647 = vmatprep.subr.mxu0 0.0
        %2648 = vmatpush2.msra.mxu0 0.0
        %2649 = vmatprep.subr.mxu0 0.0
        %2650 = vmatpush2.msra.mxu0 0.0
        %2651 = vmatprep.subr.mxu0 0.0
        %2652 = vmatpush2.msra.mxu0 0.0
        %2653 = vmatprep.subr.mxu0 0.0
        %2654 = vmatpush2.msra.mxu0 0.0
        %2655 = vmatprep.subr.mxu0 0.0
        %2656 = vmatpush2.msra.mxu0 0.0
        %2657 = vmatprep.subr.mxu0 0.0
        %2658 = vmatpush2.msra.mxu0 0.0
        %2659 = vmatprep.subr.mxu0 0.0
        %2660 = vmatpush2.msra.mxu0 0.0
        %2661 = vmatprep.subr.mxu0 0.0
        %2662 = vmatpush2.msra.mxu0 0.0
        %2663 = vmatprep.subr.mxu0 0.0
        %2664 = vmatpush2.msra.mxu0 0.0
        %2665 = vmatprep.subr.mxu0 0.0
        %2666 = vmatpush2.msra.mxu0 0.0
        %2667 = vmatprep.subr.mxu0 0.0
        %2668 = vmatpush2.msra.mxu0 0.0
        %2669 = vmatprep.subr.mxu0 0.0
        %2670 = vmatpush2.msra.mxu0 0.0
        %2671 = vmatprep.subr.mxu0 0.0
        %2672 = vmatpush2.msra.mxu0 0.0
        %2673 = vmatprep.subr.mxu0 0.0
        %2674 = vmatpush2.msra.mxu0 0.0
        %2675 = vmatprep.subr.mxu0 0.0
        %2676 = vmatpush2.msra.mxu0 0.0
        %2677 = vmatprep.subr.mxu0 0.0
        %2678 = vmatpush2.msra.mxu0 0.0
        %2679 = vmatprep.mubr.f32.mxu0 0.0
        %2680 = vmatmul.mubr.f32.gmra.mxu0 %v2429
        %v2681 = vpop.f32.mrf.mxu0
        %v2682 = vadd.f32 0.0, %v2681
        %v2683 = vpop.f32.mrf.mxu0
        %v2684 = vadd.f32 0.0, %v2683
        %2685 = vmatprep.mubr.f32.mxu0 0.0
        %2686 = vmatmul.mubr.f32.gmra.mxu0 %v2431
        %v2687 = vpop.f32.mrf.mxu0
        %v2688 = vadd.f32 0.0, %v2687
        %v2689 = vpop.f32.mrf.mxu0
        %v2690 = vadd.f32 0.0, %v2689
        %2691 = vmatprep.mubr.f32.mxu0 0.0
        %2692 = vmatmul.mubr.f32.gmra.mxu0 %v2433
        %v2693 = vpop.f32.mrf.mxu0
        %v2694 = vadd.f32 0.0, %v2693
        %v2695 = vpop.f32.mrf.mxu0
        %v2696 = vadd.f32 0.0, %v2695
        %2697 = vmatprep.mubr.f32.mxu0 0.0
        %2698 = vmatmul.mubr.f32.gmra.mxu0 %v2435
        %v2699 = vpop.f32.mrf.mxu0
        %v2700 = vadd.f32 0.0, %v2699
        %v2701 = vpop.f32.mrf.mxu0
        %v2702 = vadd.f32 0.0, %v2701
        %2703 = vdwg.mxu0
        %2704 = vmatprep.subr.mxu0 0.0
        %2705 = vmatpush1.msra.mxu0 0.0
        %2706 = vmatprep.subr.mxu0 0.0
        %2707 = vmatpush1.msra.mxu0 0.0
        %2708 = vmatprep.subr.mxu0 0.0
        %2709 = vmatpush1.msra.mxu0 0.0
        %2710 = vmatprep.subr.mxu0 0.0
        %2711 = vmatpush1.msra.mxu0 0.0
        %2712 = vmatprep.subr.mxu0 0.0
        %2713 = vmatpush1.msra.mxu0 0.0
        %2714 = vmatprep.subr.mxu0 0.0
        %2715 = vmatpush1.msra.mxu0 0.0
        %2716 = vmatprep.subr.mxu0 0.0
        %2717 = vmatpush1.msra.mxu0 0.0
        %2718 = vmatprep.subr.mxu0 0.0
        %2719 = vmatpush1.msra.mxu0 0.0
        %2720 = vmatprep.subr.mxu0 0.0
        %2721 = vmatpush1.msra.mxu0 0.0
        %2722 = vmatprep.subr.mxu0 0.0
        %2723 = vmatpush1.msra.mxu0 0.0
        %2724 = vmatprep.subr.mxu0 0.0
        %2725 = vmatpush1.msra.mxu0 0.0
        %2726 = vmatprep.subr.mxu0 0.0
        %2727 = vmatpush1.msra.mxu0 0.0
        %2728 = vmatprep.subr.mxu0 0.0
        %2729 = vmatpush1.msra.mxu0 0.0
        %2730 = vmatprep.subr.mxu0 %v389
        %2731 = vmatpush1.msra.mxu0 %v386
        %2732 = vmatprep.subr.mxu0 %v316
        %2733 = vmatpush1.msra.mxu0 %v315
        %2734 = vmatprep.subr.mxu0 %v308
        %2735 = vmatpush1.msra.mxu0 %v307
        %2736 = vmatprep.subr.mxu0 0.0
        %2737 = vmatpush2.msra.mxu0 0.0
        %2738 = vmatprep.subr.mxu0 0.0
        %2739 = vmatpush2.msra.mxu0 0.0
        %2740 = vmatprep.subr.mxu0 0.0
        %2741 = vmatpush2.msra.mxu0 0.0
        %2742 = vmatprep.subr.mxu0 0.0
        %2743 = vmatpush2.msra.mxu0 0.0
        %2744 = vmatprep.subr.mxu0 0.0
        %2745 = vmatpush2.msra.mxu0 0.0
        %2746 = vmatprep.subr.mxu0 0.0
        %2747 = vmatpush2.msra.mxu0 0.0
        %2748 = vmatprep.subr.mxu0 0.0
        %2749 = vmatpush2.msra.mxu0 0.0
        %2750 = vmatprep.subr.mxu0 0.0
        %2751 = vmatpush2.msra.mxu0 0.0
        %2752 = vmatprep.subr.mxu0 0.0
        %2753 = vmatpush2.msra.mxu0 0.0
        %2754 = vmatprep.subr.mxu0 0.0
        %2755 = vmatpush2.msra.mxu0 0.0
        %2756 = vmatprep.subr.mxu0 0.0
        %2757 = vmatpush2.msra.mxu0 0.0
        %2758 = vmatprep.subr.mxu0 0.0
        %2759 = vmatpush2.msra.mxu0 0.0
        %2760 = vmatprep.subr.mxu0 0.0
        %2761 = vmatpush2.msra.mxu0 0.0
        %2762 = vmatprep.subr.mxu0 0.0
        %2763 = vmatpush2.msra.mxu0 0.0
        %2764 = vmatprep.subr.mxu0 0.0
        %2765 = vmatpush2.msra.mxu0 0.0
        %2766 = vmatprep.subr.mxu0 0.0
        %2767 = vmatpush2.msra.mxu0 0.0
        %2768 = vmatprep.mubr.f32.mxu0 0.0
        %2769 = vmatmul.mubr.f32.gmra.mxu0 %v2429
        %v2770 = vpop.f32.mrf.mxu0
        %v2771 = vadd.f32 0.0, %v2770
        %v2772 = vpop.f32.mrf.mxu0
        %v2773 = vadd.f32 0.0, %v2772
        %2774 = vmatprep.mubr.f32.mxu0 0.0
        %2775 = vmatmul.mubr.f32.gmra.mxu0 %v2431
        %v2776 = vpop.f32.mrf.mxu0
        %v2777 = vadd.f32 0.0, %v2776
        %v2778 = vpop.f32.mrf.mxu0
        %v2779 = vadd.f32 0.0, %v2778
        %2780 = vmatprep.mubr.f32.mxu0 0.0
        %2781 = vmatmul.mubr.f32.gmra.mxu0 %v2433
        %v2782 = vpop.f32.mrf.mxu0
        %v2783 = vadd.f32 0.0, %v2782
        %v2784 = vpop.f32.mrf.mxu0
        %v2785 = vadd.f32 0.0, %v2784
        %2786 = vmatprep.mubr.f32.mxu0 0.0
        %2787 = vmatmul.mubr.f32.gmra.mxu0 %v2435
        %v2788 = vpop.f32.mrf.mxu0
        %v2789 = vadd.f32 0.0, %v2788
        %v2790 = vpop.f32.mrf.mxu0
        %v2791 = vadd.f32 0.0, %v2790
        %2792 = vdwg.mxu0
        %v2793 = vadd.f32 %v2132, %v2504
        %v2794 = vadd.f32 %v2134, %v2506
        %v2795 = vadd.f32 %v2221, %v2593
        %v2796 = vadd.f32 %v2223, %v2595
        %v2797 = vadd.f32 %v2310, %v2682
        %v2798 = vadd.f32 %v2312, %v2684
        %v2799 = vadd.f32 %v2399, %v2771
        %v2800 = vadd.f32 %v2401, %v2773
        %v2801 = vadd.f32 %v2138, %v2510
        %v2802 = vadd.f32 %v2140, %v2512
        %v2803 = vadd.f32 %v2227, %v2599
        %v2804 = vadd.f32 %v2229, %v2601
        %v2805 = vadd.f32 %v2316, %v2688
        %v2806 = vadd.f32 %v2318, %v2690
        %v2807 = vadd.f32 %v2405, %v2777
        %v2808 = vadd.f32 %v2407, %v2779
        %v2809 = vadd.f32 %v2144, %v2516
        %v2810 = vadd.f32 %v2146, %v2518
        %v2811 = vadd.f32 %v2233, %v2605
        %v2812 = vadd.f32 %v2235, %v2607
        %v2813 = vadd.f32 %v2322, %v2694
        %v2814 = vadd.f32 %v2324, %v2696
        %v2815 = vadd.f32 %v2411, %v2783
        %v2816 = vadd.f32 %v2413, %v2785
        %v2817 = vadd.f32 %v2150, %v2522
        %v2818 = vadd.f32 %v2152, %v2524
        %v2819 = vadd.f32 %v2239, %v2611
        %v2820 = vadd.f32 %v2241, %v2613
        %v2821 = vadd.f32 %v2328, %v2700
        %v2822 = vadd.f32 %v2330, %v2702
        %v2823 = vadd.f32 %v2417, %v2789
        %v2824 = vadd.f32 %v2419, %v2791
        %s2825 = scalar_lea.vmem %s4, 32
        %v2826 = vld [vmem:[%s2825] sm:$0xff]
        %v2827 = vld [vmem:[%s2825 + $0x8] sm:$0xff]
        %v2828 = vld [vmem:[%s2825 + $0x10] sm:$0xff]
        %v2829 = vld [vmem:[%s2825 + $0x18] sm:$0xff]
        %2831 = vset.pattern.permute.xlu0 0
        %2832 = vperm.xlu0 %2831, %v2826
        %v2833 = vpop.permute.xlu0 %2832
        %2836 = vset.pattern.permute.xlu0 0
        %2837 = vperm.xlu0 %2836, %v2827
        %v2838 = vpop.permute.xlu0 %2837
        %2841 = vset.pattern.permute.xlu0 0
        %2842 = vperm.xlu0 %2841, %v2828
        %v2843 = vpop.permute.xlu0 %2842
        %2846 = vset.pattern.permute.xlu0 0
        %2847 = vperm.xlu0 %2846, %v2829
        %v2848 = vpop.permute.xlu0 %2847
        %v2850 = vadd.f32 %v2793, %v2833
        %v2851 = vadd.f32 %v2794, %v2833
        %v2852 = vadd.f32 %v2795, %v2833
        %v2853 = vadd.f32 %v2796, %v2833
        %v2854 = vadd.f32 %v2797, %v2833
        %v2855 = vadd.f32 %v2798, %v2833
        %v2856 = vadd.f32 %v2799, %v2833
        %v2857 = vadd.f32 %v2800, %v2833
        %v2858 = vadd.f32 %v2801, %v2838
        %v2859 = vadd.f32 %v2802, %v2838
        %v2860 = vadd.f32 %v2803, %v2838
        %v2861 = vadd.f32 %v2804, %v2838
        %v2862 = vadd.f32 %v2805, %v2838
        %v2863 = vadd.f32 %v2806, %v2838
        %v2864 = vadd.f32 %v2807, %v2838
        %v2865 = vadd.f32 %v2808, %v2838
        %v2866 = vadd.f32 %v2809, %v2843
        %v2867 = vadd.f32 %v2810, %v2843
        %v2868 = vadd.f32 %v2811, %v2843
        %v2869 = vadd.f32 %v2812, %v2843
        %v2870 = vadd.f32 %v2813, %v2843
        %v2871 = vadd.f32 %v2814, %v2843
        %v2872 = vadd.f32 %v2815, %v2843
        %v2873 = vadd.f32 %v2816, %v2843
        %v2874 = vadd.f32 %v2817, %v2848
        %v2875 = vadd.f32 %v2818, %v2848
        %v2876 = vadd.f32 %v2819, %v2848
        %v2877 = vadd.f32 %v2820, %v2848
        %v2878 = vadd.f32 %v2821, %v2848
        %v2879 = vadd.f32 %v2822, %v2848
        %v2880 = vadd.f32 %v2823, %v2848
        %v2881 = vadd.f32 %v2824, %v2848
        %v2882 = vmul.f32 %v2850, 0.01
        %v2883 = vmul.f32 %v2851, 0.01
        %v2884 = vmul.f32 %v2852, 0.01
        %v2885 = vmul.f32 %v2853, 0.01
        %v2886 = vmul.f32 %v2854, 0.01
        %v2887 = vmul.f32 %v2855, 0.01
        %v2888 = vmul.f32 %v2856, 0.01
        %v2889 = vmul.f32 %v2857, 0.01
        %v2890 = vmul.f32 %v2858, 0.01
        %v2891 = vmul.f32 %v2859, 0.01
        %v2892 = vmul.f32 %v2860, 0.01
        %v2893 = vmul.f32 %v2861, 0.01
        %v2894 = vmul.f32 %v2862, 0.01
        %v2895 = vmul.f32 %v2863, 0.01
        %v2896 = vmul.f32 %v2864, 0.01
        %v2897 = vmul.f32 %v2865, 0.01
        %v2898 = vmul.f32 %v2866, 0.01
        %v2899 = vmul.f32 %v2867, 0.01
        %v2900 = vmul.f32 %v2868, 0.01
        %v2901 = vmul.f32 %v2869, 0.01
        %v2902 = vmul.f32 %v2870, 0.01
        %v2903 = vmul.f32 %v2871, 0.01
        %v2904 = vmul.f32 %v2872, 0.01
        %v2905 = vmul.f32 %v2873, 0.01
        %v2906 = vmul.f32 %v2874, 0.01
        %v2907 = vmul.f32 %v2875, 0.01
        %v2908 = vmul.f32 %v2876, 0.01
        %v2909 = vmul.f32 %v2877, 0.01
        %v2910 = vmul.f32 %v2878, 0.01
        %v2911 = vmul.f32 %v2879, 0.01
        %v2912 = vmul.f32 %v2880, 0.01
        %v2913 = vmul.f32 %v2881, 0.01
        %v2914 = vmax.f32 %v2850, %v2882
        %v2915 = vmax.f32 %v2851, %v2883
        %v2916 = vmax.f32 %v2852, %v2884
        %v2917 = vmax.f32 %v2853, %v2885
        %v2918 = vmax.f32 %v2854, %v2886
        %v2919 = vmax.f32 %v2855, %v2887
        %v2920 = vmax.f32 %v2856, %v2888
        %v2921 = vmax.f32 %v2857, %v2889
        %v2922 = vmax.f32 %v2858, %v2890
        %v2923 = vmax.f32 %v2859, %v2891
        %v2924 = vmax.f32 %v2860, %v2892
        %v2925 = vmax.f32 %v2861, %v2893
        %v2926 = vmax.f32 %v2862, %v2894
        %v2927 = vmax.f32 %v2863, %v2895
        %v2928 = vmax.f32 %v2864, %v2896
        %v2929 = vmax.f32 %v2865, %v2897
        %v2930 = vmax.f32 %v2866, %v2898
        %v2931 = vmax.f32 %v2867, %v2899
        %v2932 = vmax.f32 %v2868, %v2900
        %v2933 = vmax.f32 %v2869, %v2901
        %v2934 = vmax.f32 %v2870, %v2902
        %v2935 = vmax.f32 %v2871, %v2903
        %v2936 = vmax.f32 %v2872, %v2904
        %v2937 = vmax.f32 %v2873, %v2905
        %v2938 = vmax.f32 %v2874, %v2906
        %v2939 = vmax.f32 %v2875, %v2907
        %v2940 = vmax.f32 %v2876, %v2908
        %v2941 = vmax.f32 %v2877, %v2909
        %v2942 = vmax.f32 %v2878, %v2910
        %v2943 = vmax.f32 %v2879, %v2911
        %v2944 = vmax.f32 %v2880, %v2912
        %v2945 = vmax.f32 %v2881, %v2913
        %s2946 = scalar_lea.vmem %s3, 64
        %v2947 = vld [vmem:[%s2946] sm:$0xff]
        %v2948 = vld [vmem:[%s2946 + $0x8] sm:$0xff]
        %v2949 = vld [vmem:[%s2946 + $0x10] sm:$0xff]
        %v2950 = vld [vmem:[%s2946 + $0x18] sm:$0xff]
        %2955 = vrot.lane.b32.xlu0 %v2947, 96
        %v2956 = vpop.permute.xlu0 %2955
        %2957 = vrot.lane.b32.xlu0 %v2948, 96
        %v2958 = vpop.permute.xlu0 %2957
        %2959 = vrot.lane.b32.xlu0 %v2949, 96
        %v2960 = vpop.permute.xlu0 %2959
        %2961 = vrot.lane.b32.xlu0 %v2950, 96
        %v2962 = vpop.permute.xlu0 %2961
        %v2963 = vsel %vm1191, %v2956, 0
        %v2965 = vsel %vm1191, %v2958, 0
        %v2967 = vsel %vm1191, %v2960, 0
        %v2969 = vsel %vm1191, %v2962, 0
        %2971 = vmatprep.subr.mxu0 0.0
        %2972 = vmatpush1.msra.mxu0 0.0
        %2973 = vmatprep.subr.mxu0 0.0
        %2974 = vmatpush1.msra.mxu0 0.0
        %2975 = vmatprep.subr.mxu0 0.0
        %2976 = vmatpush1.msra.mxu0 0.0
        %2977 = vmatprep.subr.mxu0 0.0
        %2978 = vmatpush1.msra.mxu0 0.0
        %2979 = vmatprep.subr.mxu0 0.0
        %2980 = vmatpush1.msra.mxu0 0.0
        %2981 = vmatprep.subr.mxu0 0.0
        %2982 = vmatpush1.msra.mxu0 0.0
        %2983 = vmatprep.subr.mxu0 0.0
        %2984 = vmatpush1.msra.mxu0 0.0
        %2985 = vmatprep.subr.mxu0 0.0
        %2986 = vmatpush1.msra.mxu0 0.0
        %2987 = vmatprep.subr.mxu0 0.0
        %2988 = vmatpush1.msra.mxu0 0.0
        %2989 = vmatprep.subr.mxu0 0.0
        %2990 = vmatpush1.msra.mxu0 0.0
        %2991 = vmatprep.subr.mxu0 0.0
        %2992 = vmatpush1.msra.mxu0 0.0
        %2993 = vmatprep.subr.mxu0 0.0
        %2994 = vmatpush1.msra.mxu0 0.0
        %2995 = vmatprep.subr.mxu0 %v1669
        %2996 = vmatpush1.msra.mxu0 %v1668
        %2997 = vmatprep.subr.mxu0 %v1661
        %2998 = vmatpush1.msra.mxu0 %v1660
        %2999 = vmatprep.subr.mxu0 %v1653
        %3000 = vmatpush1.msra.mxu0 %v1652
        %3001 = vmatprep.subr.mxu0 %v1645
        %3002 = vmatpush1.msra.mxu0 %v1644
        %3003 = vmatprep.subr.mxu0 0.0
        %3004 = vmatpush2.msra.mxu0 0.0
        %3005 = vmatprep.subr.mxu0 0.0
        %3006 = vmatpush2.msra.mxu0 0.0
        %3007 = vmatprep.subr.mxu0 0.0
        %3008 = vmatpush2.msra.mxu0 0.0
        %3009 = vmatprep.subr.mxu0 0.0
        %3010 = vmatpush2.msra.mxu0 0.0
        %3011 = vmatprep.subr.mxu0 0.0
        %3012 = vmatpush2.msra.mxu0 0.0
        %3013 = vmatprep.subr.mxu0 0.0
        %3014 = vmatpush2.msra.mxu0 0.0
        %3015 = vmatprep.subr.mxu0 0.0
        %3016 = vmatpush2.msra.mxu0 0.0
        %3017 = vmatprep.subr.mxu0 0.0
        %3018 = vmatpush2.msra.mxu0 0.0
        %3019 = vmatprep.subr.mxu0 0.0
        %3020 = vmatpush2.msra.mxu0 0.0
        %3021 = vmatprep.subr.mxu0 0.0
        %3022 = vmatpush2.msra.mxu0 0.0
        %3023 = vmatprep.subr.mxu0 0.0
        %3024 = vmatpush2.msra.mxu0 0.0
        %3025 = vmatprep.subr.mxu0 0.0
        %3026 = vmatpush2.msra.mxu0 0.0
        %3027 = vmatprep.subr.mxu0 0.0
        %3028 = vmatpush2.msra.mxu0 0.0
        %3029 = vmatprep.subr.mxu0 0.0
        %3030 = vmatpush2.msra.mxu0 0.0
        %3031 = vmatprep.subr.mxu0 0.0
        %3032 = vmatpush2.msra.mxu0 0.0
        %3033 = vmatprep.subr.mxu0 0.0
        %3034 = vmatpush2.msra.mxu0 0.0
        %3035 = vmatprep.mubr.f32.mxu0 0.0
        %3036 = vmatmul.mubr.f32.gmra.mxu0 %v2963
        %v3037 = vpop.f32.mrf.mxu0
        %v3038 = vadd.f32 0.0, %v3037
        %v3039 = vpop.f32.mrf.mxu0
        %v3040 = vadd.f32 0.0, %v3039
        %3041 = vmatprep.mubr.f32.mxu0 0.0
        %3042 = vmatmul.mubr.f32.gmra.mxu0 %v2965
        %v3043 = vpop.f32.mrf.mxu0
        %v3044 = vadd.f32 0.0, %v3043
        %v3045 = vpop.f32.mrf.mxu0
        %v3046 = vadd.f32 0.0, %v3045
        %3047 = vmatprep.mubr.f32.mxu0 0.0
        %3048 = vmatmul.mubr.f32.gmra.mxu0 %v2967
        %v3049 = vpop.f32.mrf.mxu0
        %v3050 = vadd.f32 0.0, %v3049
        %v3051 = vpop.f32.mrf.mxu0
        %v3052 = vadd.f32 0.0, %v3051
        %3053 = vmatprep.mubr.f32.mxu0 0.0
        %3054 = vmatmul.mubr.f32.gmra.mxu0 %v2969
        %v3055 = vpop.f32.mrf.mxu0
        %v3056 = vadd.f32 0.0, %v3055
        %v3057 = vpop.f32.mrf.mxu0
        %v3058 = vadd.f32 0.0, %v3057
        %3059 = vdwg.mxu0
        %3060 = vmatprep.subr.mxu0 0.0
        %3061 = vmatpush1.msra.mxu0 0.0
        %3062 = vmatprep.subr.mxu0 0.0
        %3063 = vmatpush1.msra.mxu0 0.0
        %3064 = vmatprep.subr.mxu0 0.0
        %3065 = vmatpush1.msra.mxu0 0.0
        %3066 = vmatprep.subr.mxu0 0.0
        %3067 = vmatpush1.msra.mxu0 0.0
        %3068 = vmatprep.subr.mxu0 0.0
        %3069 = vmatpush1.msra.mxu0 0.0
        %3070 = vmatprep.subr.mxu0 0.0
        %3071 = vmatpush1.msra.mxu0 0.0
        %3072 = vmatprep.subr.mxu0 0.0
        %3073 = vmatpush1.msra.mxu0 0.0
        %3074 = vmatprep.subr.mxu0 0.0
        %3075 = vmatpush1.msra.mxu0 0.0
        %3076 = vmatprep.subr.mxu0 0.0
        %3077 = vmatpush1.msra.mxu0 0.0
        %3078 = vmatprep.subr.mxu0 0.0
        %3079 = vmatpush1.msra.mxu0 0.0
        %3080 = vmatprep.subr.mxu0 0.0
        %3081 = vmatpush1.msra.mxu0 0.0
        %3082 = vmatprep.subr.mxu0 0.0
        %3083 = vmatpush1.msra.mxu0 0.0
        %3084 = vmatprep.subr.mxu0 %v1671
        %3085 = vmatpush1.msra.mxu0 %v1670
        %3086 = vmatprep.subr.mxu0 %v1663
        %3087 = vmatpush1.msra.mxu0 %v1662
        %3088 = vmatprep.subr.mxu0 %v1655
        %3089 = vmatpush1.msra.mxu0 %v1654
        %3090 = vmatprep.subr.mxu0 %v1647
        %3091 = vmatpush1.msra.mxu0 %v1646
        %3092 = vmatprep.subr.mxu0 0.0
        %3093 = vmatpush2.msra.mxu0 0.0
        %3094 = vmatprep.subr.mxu0 0.0
        %3095 = vmatpush2.msra.mxu0 0.0
        %3096 = vmatprep.subr.mxu0 0.0
        %3097 = vmatpush2.msra.mxu0 0.0
        %3098 = vmatprep.subr.mxu0 0.0
        %3099 = vmatpush2.msra.mxu0 0.0
        %3100 = vmatprep.subr.mxu0 0.0
        %3101 = vmatpush2.msra.mxu0 0.0
        %3102 = vmatprep.subr.mxu0 0.0
        %3103 = vmatpush2.msra.mxu0 0.0
        %3104 = vmatprep.subr.mxu0 0.0
        %3105 = vmatpush2.msra.mxu0 0.0
        %3106 = vmatprep.subr.mxu0 0.0
        %3107 = vmatpush2.msra.mxu0 0.0
        %3108 = vmatprep.subr.mxu0 0.0
        %3109 = vmatpush2.msra.mxu0 0.0
        %3110 = vmatprep.subr.mxu0 0.0
        %3111 = vmatpush2.msra.mxu0 0.0
        %3112 = vmatprep.subr.mxu0 0.0
        %3113 = vmatpush2.msra.mxu0 0.0
        %3114 = vmatprep.subr.mxu0 0.0
        %3115 = vmatpush2.msra.mxu0 0.0
        %3116 = vmatprep.subr.mxu0 0.0
        %3117 = vmatpush2.msra.mxu0 0.0
        %3118 = vmatprep.subr.mxu0 0.0
        %3119 = vmatpush2.msra.mxu0 0.0
        %3120 = vmatprep.subr.mxu0 0.0
        %3121 = vmatpush2.msra.mxu0 0.0
        %3122 = vmatprep.subr.mxu0 0.0
        %3123 = vmatpush2.msra.mxu0 0.0
        %3124 = vmatprep.mubr.f32.mxu0 0.0
        %3125 = vmatmul.mubr.f32.gmra.mxu0 %v2963
        %v3126 = vpop.f32.mrf.mxu0
        %v3127 = vadd.f32 0.0, %v3126
        %v3128 = vpop.f32.mrf.mxu0
        %v3129 = vadd.f32 0.0, %v3128
        %3130 = vmatprep.mubr.f32.mxu0 0.0
        %3131 = vmatmul.mubr.f32.gmra.mxu0 %v2965
        %v3132 = vpop.f32.mrf.mxu0
        %v3133 = vadd.f32 0.0, %v3132
        %v3134 = vpop.f32.mrf.mxu0
        %v3135 = vadd.f32 0.0, %v3134
        %3136 = vmatprep.mubr.f32.mxu0 0.0
        %3137 = vmatmul.mubr.f32.gmra.mxu0 %v2967
        %v3138 = vpop.f32.mrf.mxu0
        %v3139 = vadd.f32 0.0, %v3138
        %v3140 = vpop.f32.mrf.mxu0
        %v3141 = vadd.f32 0.0, %v3140
        %3142 = vmatprep.mubr.f32.mxu0 0.0
        %3143 = vmatmul.mubr.f32.gmra.mxu0 %v2969
        %v3144 = vpop.f32.mrf.mxu0
        %v3145 = vadd.f32 0.0, %v3144
        %v3146 = vpop.f32.mrf.mxu0
        %v3147 = vadd.f32 0.0, %v3146
        %3148 = vdwg.mxu0
        %3149 = vmatprep.subr.mxu0 0.0
        %3150 = vmatpush1.msra.mxu0 0.0
        %3151 = vmatprep.subr.mxu0 0.0
        %3152 = vmatpush1.msra.mxu0 0.0
        %3153 = vmatprep.subr.mxu0 0.0
        %3154 = vmatpush1.msra.mxu0 0.0
        %3155 = vmatprep.subr.mxu0 0.0
        %3156 = vmatpush1.msra.mxu0 0.0
        %3157 = vmatprep.subr.mxu0 0.0
        %3158 = vmatpush1.msra.mxu0 0.0
        %3159 = vmatprep.subr.mxu0 0.0
        %3160 = vmatpush1.msra.mxu0 0.0
        %3161 = vmatprep.subr.mxu0 0.0
        %3162 = vmatpush1.msra.mxu0 0.0
        %3163 = vmatprep.subr.mxu0 0.0
        %3164 = vmatpush1.msra.mxu0 0.0
        %3165 = vmatprep.subr.mxu0 0.0
        %3166 = vmatpush1.msra.mxu0 0.0
        %3167 = vmatprep.subr.mxu0 0.0
        %3168 = vmatpush1.msra.mxu0 0.0
        %3169 = vmatprep.subr.mxu0 0.0
        %3170 = vmatpush1.msra.mxu0 0.0
        %3171 = vmatprep.subr.mxu0 0.0
        %3172 = vmatpush1.msra.mxu0 0.0
        %3173 = vmatprep.subr.mxu0 %v1673
        %3174 = vmatpush1.msra.mxu0 %v1672
        %3175 = vmatprep.subr.mxu0 %v1665
        %3176 = vmatpush1.msra.mxu0 %v1664
        %3177 = vmatprep.subr.mxu0 %v1657
        %3178 = vmatpush1.msra.mxu0 %v1656
        %3179 = vmatprep.subr.mxu0 %v1649
        %3180 = vmatpush1.msra.mxu0 %v1648
        %3181 = vmatprep.subr.mxu0 0.0
        %3182 = vmatpush2.msra.mxu0 0.0
        %3183 = vmatprep.subr.mxu0 0.0
        %3184 = vmatpush2.msra.mxu0 0.0
        %3185 = vmatprep.subr.mxu0 0.0
        %3186 = vmatpush2.msra.mxu0 0.0
        %3187 = vmatprep.subr.mxu0 0.0
        %3188 = vmatpush2.msra.mxu0 0.0
        %3189 = vmatprep.subr.mxu0 0.0
        %3190 = vmatpush2.msra.mxu0 0.0
        %3191 = vmatprep.subr.mxu0 0.0
        %3192 = vmatpush2.msra.mxu0 0.0
        %3193 = vmatprep.subr.mxu0 0.0
        %3194 = vmatpush2.msra.mxu0 0.0
        %3195 = vmatprep.subr.mxu0 0.0
        %3196 = vmatpush2.msra.mxu0 0.0
        %3197 = vmatprep.subr.mxu0 0.0
        %3198 = vmatpush2.msra.mxu0 0.0
        %3199 = vmatprep.subr.mxu0 0.0
        %3200 = vmatpush2.msra.mxu0 0.0
        %3201 = vmatprep.subr.mxu0 0.0
        %3202 = vmatpush2.msra.mxu0 0.0
        %3203 = vmatprep.subr.mxu0 0.0
        %3204 = vmatpush2.msra.mxu0 0.0
        %3205 = vmatprep.subr.mxu0 0.0
        %3206 = vmatpush2.msra.mxu0 0.0
        %3207 = vmatprep.subr.mxu0 0.0
        %3208 = vmatpush2.msra.mxu0 0.0
        %3209 = vmatprep.subr.mxu0 0.0
        %3210 = vmatpush2.msra.mxu0 0.0
        %3211 = vmatprep.subr.mxu0 0.0
        %3212 = vmatpush2.msra.mxu0 0.0
        %3213 = vmatprep.mubr.f32.mxu0 0.0
        %3214 = vmatmul.mubr.f32.gmra.mxu0 %v2963
        %v3215 = vpop.f32.mrf.mxu0
        %v3216 = vadd.f32 0.0, %v3215
        %v3217 = vpop.f32.mrf.mxu0
        %v3218 = vadd.f32 0.0, %v3217
        %3219 = vmatprep.mubr.f32.mxu0 0.0
        %3220 = vmatmul.mubr.f32.gmra.mxu0 %v2965
        %v3221 = vpop.f32.mrf.mxu0
        %v3222 = vadd.f32 0.0, %v3221
        %v3223 = vpop.f32.mrf.mxu0
        %v3224 = vadd.f32 0.0, %v3223
        %3225 = vmatprep.mubr.f32.mxu0 0.0
        %3226 = vmatmul.mubr.f32.gmra.mxu0 %v2967
        %v3227 = vpop.f32.mrf.mxu0
        %v3228 = vadd.f32 0.0, %v3227
        %v3229 = vpop.f32.mrf.mxu0
        %v3230 = vadd.f32 0.0, %v3229
        %3231 = vmatprep.mubr.f32.mxu0 0.0
        %3232 = vmatmul.mubr.f32.gmra.mxu0 %v2969
        %v3233 = vpop.f32.mrf.mxu0
        %v3234 = vadd.f32 0.0, %v3233
        %v3235 = vpop.f32.mrf.mxu0
        %v3236 = vadd.f32 0.0, %v3235
        %3237 = vdwg.mxu0
        %3238 = vmatprep.subr.mxu0 0.0
        %3239 = vmatpush1.msra.mxu0 0.0
        %3240 = vmatprep.subr.mxu0 0.0
        %3241 = vmatpush1.msra.mxu0 0.0
        %3242 = vmatprep.subr.mxu0 0.0
        %3243 = vmatpush1.msra.mxu0 0.0
        %3244 = vmatprep.subr.mxu0 0.0
        %3245 = vmatpush1.msra.mxu0 0.0
        %3246 = vmatprep.subr.mxu0 0.0
        %3247 = vmatpush1.msra.mxu0 0.0
        %3248 = vmatprep.subr.mxu0 0.0
        %3249 = vmatpush1.msra.mxu0 0.0
        %3250 = vmatprep.subr.mxu0 0.0
        %3251 = vmatpush1.msra.mxu0 0.0
        %3252 = vmatprep.subr.mxu0 0.0
        %3253 = vmatpush1.msra.mxu0 0.0
        %3254 = vmatprep.subr.mxu0 0.0
        %3255 = vmatpush1.msra.mxu0 0.0
        %3256 = vmatprep.subr.mxu0 0.0
        %3257 = vmatpush1.msra.mxu0 0.0
        %3258 = vmatprep.subr.mxu0 0.0
        %3259 = vmatpush1.msra.mxu0 0.0
        %3260 = vmatprep.subr.mxu0 0.0
        %3261 = vmatpush1.msra.mxu0 0.0
        %3262 = vmatprep.subr.mxu0 %v1675
        %3263 = vmatpush1.msra.mxu0 %v1674
        %3264 = vmatprep.subr.mxu0 %v1667
        %3265 = vmatpush1.msra.mxu0 %v1666
        %3266 = vmatprep.subr.mxu0 %v1659
        %3267 = vmatpush1.msra.mxu0 %v1658
        %3268 = vmatprep.subr.mxu0 %v1651
        %3269 = vmatpush1.msra.mxu0 %v1650
        %3270 = vmatprep.subr.mxu0 0.0
        %3271 = vmatpush2.msra.mxu0 0.0
        %3272 = vmatprep.subr.mxu0 0.0
        %3273 = vmatpush2.msra.mxu0 0.0
        %3274 = vmatprep.subr.mxu0 0.0
        %3275 = vmatpush2.msra.mxu0 0.0
        %3276 = vmatprep.subr.mxu0 0.0
        %3277 = vmatpush2.msra.mxu0 0.0
        %3278 = vmatprep.subr.mxu0 0.0
        %3279 = vmatpush2.msra.mxu0 0.0
        %3280 = vmatprep.subr.mxu0 0.0
        %3281 = vmatpush2.msra.mxu0 0.0
        %3282 = vmatprep.subr.mxu0 0.0
        %3283 = vmatpush2.msra.mxu0 0.0
        %3284 = vmatprep.subr.mxu0 0.0
        %3285 = vmatpush2.msra.mxu0 0.0
        %3286 = vmatprep.subr.mxu0 0.0
        %3287 = vmatpush2.msra.mxu0 0.0
        %3288 = vmatprep.subr.mxu0 0.0
        %3289 = vmatpush2.msra.mxu0 0.0
        %3290 = vmatprep.subr.mxu0 0.0
        %3291 = vmatpush2.msra.mxu0 0.0
        %3292 = vmatprep.subr.mxu0 0.0
        %3293 = vmatpush2.msra.mxu0 0.0
        %3294 = vmatprep.subr.mxu0 0.0
        %3295 = vmatpush2.msra.mxu0 0.0
        %3296 = vmatprep.subr.mxu0 0.0
        %3297 = vmatpush2.msra.mxu0 0.0
        %3298 = vmatprep.subr.mxu0 0.0
        %3299 = vmatpush2.msra.mxu0 0.0
        %3300 = vmatprep.subr.mxu0 0.0
        %3301 = vmatpush2.msra.mxu0 0.0
        %3302 = vmatprep.mubr.f32.mxu0 0.0
        %3303 = vmatmul.mubr.f32.gmra.mxu0 %v2963
        %v3304 = vpop.f32.mrf.mxu0
        %v3305 = vadd.f32 0.0, %v3304
        %v3306 = vpop.f32.mrf.mxu0
        %v3307 = vadd.f32 0.0, %v3306
        %3308 = vmatprep.mubr.f32.mxu0 0.0
        %3309 = vmatmul.mubr.f32.gmra.mxu0 %v2965
        %v3310 = vpop.f32.mrf.mxu0
        %v3311 = vadd.f32 0.0, %v3310
        %v3312 = vpop.f32.mrf.mxu0
        %v3313 = vadd.f32 0.0, %v3312
        %3314 = vmatprep.mubr.f32.mxu0 0.0
        %3315 = vmatmul.mubr.f32.gmra.mxu0 %v2967
        %v3316 = vpop.f32.mrf.mxu0
        %v3317 = vadd.f32 0.0, %v3316
        %v3318 = vpop.f32.mrf.mxu0
        %v3319 = vadd.f32 0.0, %v3318
        %3320 = vmatprep.mubr.f32.mxu0 0.0
        %3321 = vmatmul.mubr.f32.gmra.mxu0 %v2969
        %v3322 = vpop.f32.mrf.mxu0
        %v3323 = vadd.f32 0.0, %v3322
        %v3324 = vpop.f32.mrf.mxu0
        %v3325 = vadd.f32 0.0, %v3324
        %3326 = vdwg.mxu0
        %v3327 = vsel %vm1191, %v2947, 0
        %v3329 = vsel %vm1191, %v2948, 0
        %v3331 = vsel %vm1191, %v2949, 0
        %v3333 = vsel %vm1191, %v2950, 0
        %3335 = vmatprep.subr.mxu0 0.0
        %3336 = vmatpush1.msra.mxu0 0.0
        %3337 = vmatprep.subr.mxu0 0.0
        %3338 = vmatpush1.msra.mxu0 0.0
        %3339 = vmatprep.subr.mxu0 0.0
        %3340 = vmatpush1.msra.mxu0 0.0
        %3341 = vmatprep.subr.mxu0 0.0
        %3342 = vmatpush1.msra.mxu0 0.0
        %3343 = vmatprep.subr.mxu0 0.0
        %3344 = vmatpush1.msra.mxu0 0.0
        %3345 = vmatprep.subr.mxu0 0.0
        %3346 = vmatpush1.msra.mxu0 0.0
        %3347 = vmatprep.subr.mxu0 0.0
        %3348 = vmatpush1.msra.mxu0 0.0
        %3349 = vmatprep.subr.mxu0 0.0
        %3350 = vmatpush1.msra.mxu0 0.0
        %3351 = vmatprep.subr.mxu0 0.0
        %3352 = vmatpush1.msra.mxu0 0.0
        %3353 = vmatprep.subr.mxu0 0.0
        %3354 = vmatpush1.msra.mxu0 0.0
        %3355 = vmatprep.subr.mxu0 0.0
        %3356 = vmatpush1.msra.mxu0 0.0
        %3357 = vmatprep.subr.mxu0 0.0
        %3358 = vmatpush1.msra.mxu0 0.0
        %3359 = vmatprep.subr.mxu0 %v2939
        %3360 = vmatpush1.msra.mxu0 %v2938
        %3361 = vmatprep.subr.mxu0 %v2931
        %3362 = vmatpush1.msra.mxu0 %v2930
        %3363 = vmatprep.subr.mxu0 %v2923
        %3364 = vmatpush1.msra.mxu0 %v2922
        %3365 = vmatprep.subr.mxu0 %v2915
        %3366 = vmatpush1.msra.mxu0 %v2914
        %3367 = vmatprep.subr.mxu0 0.0
        %3368 = vmatpush2.msra.mxu0 0.0
        %3369 = vmatprep.subr.mxu0 0.0
        %3370 = vmatpush2.msra.mxu0 0.0
        %3371 = vmatprep.subr.mxu0 0.0
        %3372 = vmatpush2.msra.mxu0 0.0
        %3373 = vmatprep.subr.mxu0 0.0
        %3374 = vmatpush2.msra.mxu0 0.0
        %3375 = vmatprep.subr.mxu0 0.0
        %3376 = vmatpush2.msra.mxu0 0.0
        %3377 = vmatprep.subr.mxu0 0.0
        %3378 = vmatpush2.msra.mxu0 0.0
        %3379 = vmatprep.subr.mxu0 0.0
        %3380 = vmatpush2.msra.mxu0 0.0
        %3381 = vmatprep.subr.mxu0 0.0
        %3382 = vmatpush2.msra.mxu0 0.0
        %3383 = vmatprep.subr.mxu0 0.0
        %3384 = vmatpush2.msra.mxu0 0.0
        %3385 = vmatprep.subr.mxu0 0.0
        %3386 = vmatpush2.msra.mxu0 0.0
        %3387 = vmatprep.subr.mxu0 0.0
        %3388 = vmatpush2.msra.mxu0 0.0
        %3389 = vmatprep.subr.mxu0 0.0
        %3390 = vmatpush2.msra.mxu0 0.0
        %3391 = vmatprep.subr.mxu0 0.0
        %3392 = vmatpush2.msra.mxu0 0.0
        %3393 = vmatprep.subr.mxu0 0.0
        %3394 = vmatpush2.msra.mxu0 0.0
        %3395 = vmatprep.subr.mxu0 0.0
        %3396 = vmatpush2.msra.mxu0 0.0
        %3397 = vmatprep.subr.mxu0 0.0
        %3398 = vmatpush2.msra.mxu0 0.0
        %3399 = vmatprep.mubr.f32.mxu0 0.0
        %3400 = vmatmul.mubr.f32.gmra.mxu0 %v3327
        %v3401 = vpop.f32.mrf.mxu0
        %v3402 = vadd.f32 %v3038, %v3401
        %v3403 = vpop.f32.mrf.mxu0
        %v3404 = vadd.f32 %v3040, %v3403
        %3405 = vmatprep.mubr.f32.mxu0 0.0
        %3406 = vmatmul.mubr.f32.gmra.mxu0 %v3329
        %v3407 = vpop.f32.mrf.mxu0
        %v3408 = vadd.f32 %v3044, %v3407
        %v3409 = vpop.f32.mrf.mxu0
        %v3410 = vadd.f32 %v3046, %v3409
        %3411 = vmatprep.mubr.f32.mxu0 0.0
        %3412 = vmatmul.mubr.f32.gmra.mxu0 %v3331
        %v3413 = vpop.f32.mrf.mxu0
        %v3414 = vadd.f32 %v3050, %v3413
        %v3415 = vpop.f32.mrf.mxu0
        %v3416 = vadd.f32 %v3052, %v3415
        %3417 = vmatprep.mubr.f32.mxu0 0.0
        %3418 = vmatmul.mubr.f32.gmra.mxu0 %v3333
        %v3419 = vpop.f32.mrf.mxu0
        %v3420 = vadd.f32 %v3056, %v3419
        %v3421 = vpop.f32.mrf.mxu0
        %v3422 = vadd.f32 %v3058, %v3421
        %3423 = vdwg.mxu0
        %3424 = vmatprep.subr.mxu0 0.0
        %3425 = vmatpush1.msra.mxu0 0.0
        %3426 = vmatprep.subr.mxu0 0.0
        %3427 = vmatpush1.msra.mxu0 0.0
        %3428 = vmatprep.subr.mxu0 0.0
        %3429 = vmatpush1.msra.mxu0 0.0
        %3430 = vmatprep.subr.mxu0 0.0
        %3431 = vmatpush1.msra.mxu0 0.0
        %3432 = vmatprep.subr.mxu0 0.0
        %3433 = vmatpush1.msra.mxu0 0.0
        %3434 = vmatprep.subr.mxu0 0.0
        %3435 = vmatpush1.msra.mxu0 0.0
        %3436 = vmatprep.subr.mxu0 0.0
        %3437 = vmatpush1.msra.mxu0 0.0
        %3438 = vmatprep.subr.mxu0 0.0
        %3439 = vmatpush1.msra.mxu0 0.0
        %3440 = vmatprep.subr.mxu0 0.0
        %3441 = vmatpush1.msra.mxu0 0.0
        %3442 = vmatprep.subr.mxu0 0.0
        %3443 = vmatpush1.msra.mxu0 0.0
        %3444 = vmatprep.subr.mxu0 0.0
        %3445 = vmatpush1.msra.mxu0 0.0
        %3446 = vmatprep.subr.mxu0 0.0
        %3447 = vmatpush1.msra.mxu0 0.0
        %3448 = vmatprep.subr.mxu0 %v2941
        %3449 = vmatpush1.msra.mxu0 %v2940
        %3450 = vmatprep.subr.mxu0 %v2933
        %3451 = vmatpush1.msra.mxu0 %v2932
        %3452 = vmatprep.subr.mxu0 %v2925
        %3453 = vmatpush1.msra.mxu0 %v2924
        %3454 = vmatprep.subr.mxu0 %v2917
        %3455 = vmatpush1.msra.mxu0 %v2916
        %3456 = vmatprep.subr.mxu0 0.0
        %3457 = vmatpush2.msra.mxu0 0.0
        %3458 = vmatprep.subr.mxu0 0.0
        %3459 = vmatpush2.msra.mxu0 0.0
        %3460 = vmatprep.subr.mxu0 0.0
        %3461 = vmatpush2.msra.mxu0 0.0
        %3462 = vmatprep.subr.mxu0 0.0
        %3463 = vmatpush2.msra.mxu0 0.0
        %3464 = vmatprep.subr.mxu0 0.0
        %3465 = vmatpush2.msra.mxu0 0.0
        %3466 = vmatprep.subr.mxu0 0.0
        %3467 = vmatpush2.msra.mxu0 0.0
        %3468 = vmatprep.subr.mxu0 0.0
        %3469 = vmatpush2.msra.mxu0 0.0
        %3470 = vmatprep.subr.mxu0 0.0
        %3471 = vmatpush2.msra.mxu0 0.0
        %3472 = vmatprep.subr.mxu0 0.0
        %3473 = vmatpush2.msra.mxu0 0.0
        %3474 = vmatprep.subr.mxu0 0.0
        %3475 = vmatpush2.msra.mxu0 0.0
        %3476 = vmatprep.subr.mxu0 0.0
        %3477 = vmatpush2.msra.mxu0 0.0
        %3478 = vmatprep.subr.mxu0 0.0
        %3479 = vmatpush2.msra.mxu0 0.0
        %3480 = vmatprep.subr.mxu0 0.0
        %3481 = vmatpush2.msra.mxu0 0.0
        %3482 = vmatprep.subr.mxu0 0.0
        %3483 = vmatpush2.msra.mxu0 0.0
        %3484 = vmatprep.subr.mxu0 0.0
        %3485 = vmatpush2.msra.mxu0 0.0
        %3486 = vmatprep.subr.mxu0 0.0
        %3487 = vmatpush2.msra.mxu0 0.0
        %3488 = vmatprep.mubr.f32.mxu0 0.0
        %3489 = vmatmul.mubr.f32.gmra.mxu0 %v3327
        %v3490 = vpop.f32.mrf.mxu0
        %v3491 = vadd.f32 %v3127, %v3490
        %v3492 = vpop.f32.mrf.mxu0
        %v3493 = vadd.f32 %v3129, %v3492
        %3494 = vmatprep.mubr.f32.mxu0 0.0
        %3495 = vmatmul.mubr.f32.gmra.mxu0 %v3329
        %v3496 = vpop.f32.mrf.mxu0
        %v3497 = vadd.f32 %v3133, %v3496
        %v3498 = vpop.f32.mrf.mxu0
        %v3499 = vadd.f32 %v3135, %v3498
        %3500 = vmatprep.mubr.f32.mxu0 0.0
        %3501 = vmatmul.mubr.f32.gmra.mxu0 %v3331
        %v3502 = vpop.f32.mrf.mxu0
        %v3503 = vadd.f32 %v3139, %v3502
        %v3504 = vpop.f32.mrf.mxu0
        %v3505 = vadd.f32 %v3141, %v3504
        %3506 = vmatprep.mubr.f32.mxu0 0.0
        %3507 = vmatmul.mubr.f32.gmra.mxu0 %v3333
        %v3508 = vpop.f32.mrf.mxu0
        %v3509 = vadd.f32 %v3145, %v3508
        %v3510 = vpop.f32.mrf.mxu0
        %v3511 = vadd.f32 %v3147, %v3510
        %3512 = vdwg.mxu0
        %3513 = vmatprep.subr.mxu0 0.0
        %3514 = vmatpush1.msra.mxu0 0.0
        %3515 = vmatprep.subr.mxu0 0.0
        %3516 = vmatpush1.msra.mxu0 0.0
        %3517 = vmatprep.subr.mxu0 0.0
        %3518 = vmatpush1.msra.mxu0 0.0
        %3519 = vmatprep.subr.mxu0 0.0
        %3520 = vmatpush1.msra.mxu0 0.0
        %3521 = vmatprep.subr.mxu0 0.0
        %3522 = vmatpush1.msra.mxu0 0.0
        %3523 = vmatprep.subr.mxu0 0.0
        %3524 = vmatpush1.msra.mxu0 0.0
        %3525 = vmatprep.subr.mxu0 0.0
        %3526 = vmatpush1.msra.mxu0 0.0
        %3527 = vmatprep.subr.mxu0 0.0
        %3528 = vmatpush1.msra.mxu0 0.0
        %3529 = vmatprep.subr.mxu0 0.0
        %3530 = vmatpush1.msra.mxu0 0.0
        %3531 = vmatprep.subr.mxu0 0.0
        %3532 = vmatpush1.msra.mxu0 0.0
        %3533 = vmatprep.subr.mxu0 0.0
        %3534 = vmatpush1.msra.mxu0 0.0
        %3535 = vmatprep.subr.mxu0 0.0
        %3536 = vmatpush1.msra.mxu0 0.0
        %3537 = vmatprep.subr.mxu0 %v2943
        %3538 = vmatpush1.msra.mxu0 %v2942
        %3539 = vmatprep.subr.mxu0 %v2935
        %3540 = vmatpush1.msra.mxu0 %v2934
        %3541 = vmatprep.subr.mxu0 %v2927
        %3542 = vmatpush1.msra.mxu0 %v2926
        %3543 = vmatprep.subr.mxu0 %v2919
        %3544 = vmatpush1.msra.mxu0 %v2918
        %3545 = vmatprep.subr.mxu0 0.0
        %3546 = vmatpush2.msra.mxu0 0.0
        %3547 = vmatprep.subr.mxu0 0.0
        %3548 = vmatpush2.msra.mxu0 0.0
        %3549 = vmatprep.subr.mxu0 0.0
        %3550 = vmatpush2.msra.mxu0 0.0
        %3551 = vmatprep.subr.mxu0 0.0
        %3552 = vmatpush2.msra.mxu0 0.0
        %3553 = vmatprep.subr.mxu0 0.0
        %3554 = vmatpush2.msra.mxu0 0.0
        %3555 = vmatprep.subr.mxu0 0.0
        %3556 = vmatpush2.msra.mxu0 0.0
        %3557 = vmatprep.subr.mxu0 0.0
        %3558 = vmatpush2.msra.mxu0 0.0
        %3559 = vmatprep.subr.mxu0 0.0
        %3560 = vmatpush2.msra.mxu0 0.0
        %3561 = vmatprep.subr.mxu0 0.0
        %3562 = vmatpush2.msra.mxu0 0.0
        %3563 = vmatprep.subr.mxu0 0.0
        %3564 = vmatpush2.msra.mxu0 0.0
        %3565 = vmatprep.subr.mxu0 0.0
        %3566 = vmatpush2.msra.mxu0 0.0
        %3567 = vmatprep.subr.mxu0 0.0
        %3568 = vmatpush2.msra.mxu0 0.0
        %3569 = vmatprep.subr.mxu0 0.0
        %3570 = vmatpush2.msra.mxu0 0.0
        %3571 = vmatprep.subr.mxu0 0.0
        %3572 = vmatpush2.msra.mxu0 0.0
        %3573 = vmatprep.subr.mxu0 0.0
        %3574 = vmatpush2.msra.mxu0 0.0
        %3575 = vmatprep.subr.mxu0 0.0
        %3576 = vmatpush2.msra.mxu0 0.0
        %3577 = vmatprep.mubr.f32.mxu0 0.0
        %3578 = vmatmul.mubr.f32.gmra.mxu0 %v3327
        %v3579 = vpop.f32.mrf.mxu0
        %v3580 = vadd.f32 %v3216, %v3579
        %v3581 = vpop.f32.mrf.mxu0
        %v3582 = vadd.f32 %v3218, %v3581
        %3583 = vmatprep.mubr.f32.mxu0 0.0
        %3584 = vmatmul.mubr.f32.gmra.mxu0 %v3329
        %v3585 = vpop.f32.mrf.mxu0
        %v3586 = vadd.f32 %v3222, %v3585
        %v3587 = vpop.f32.mrf.mxu0
        %v3588 = vadd.f32 %v3224, %v3587
        %3589 = vmatprep.mubr.f32.mxu0 0.0
        %3590 = vmatmul.mubr.f32.gmra.mxu0 %v3331
        %v3591 = vpop.f32.mrf.mxu0
        %v3592 = vadd.f32 %v3228, %v3591
        %v3593 = vpop.f32.mrf.mxu0
        %v3594 = vadd.f32 %v3230, %v3593
        %3595 = vmatprep.mubr.f32.mxu0 0.0
        %3596 = vmatmul.mubr.f32.gmra.mxu0 %v3333
        %v3597 = vpop.f32.mrf.mxu0
        %v3598 = vadd.f32 %v3234, %v3597
        %v3599 = vpop.f32.mrf.mxu0
        %v3600 = vadd.f32 %v3236, %v3599
        %3601 = vdwg.mxu0
        %3602 = vmatprep.subr.mxu0 0.0
        %3603 = vmatpush1.msra.mxu0 0.0
        %3604 = vmatprep.subr.mxu0 0.0
        %3605 = vmatpush1.msra.mxu0 0.0
        %3606 = vmatprep.subr.mxu0 0.0
        %3607 = vmatpush1.msra.mxu0 0.0
        %3608 = vmatprep.subr.mxu0 0.0
        %3609 = vmatpush1.msra.mxu0 0.0
        %3610 = vmatprep.subr.mxu0 0.0
        %3611 = vmatpush1.msra.mxu0 0.0
        %3612 = vmatprep.subr.mxu0 0.0
        %3613 = vmatpush1.msra.mxu0 0.0
        %3614 = vmatprep.subr.mxu0 0.0
        %3615 = vmatpush1.msra.mxu0 0.0
        %3616 = vmatprep.subr.mxu0 0.0
        %3617 = vmatpush1.msra.mxu0 0.0
        %3618 = vmatprep.subr.mxu0 0.0
        %3619 = vmatpush1.msra.mxu0 0.0
        %3620 = vmatprep.subr.mxu0 0.0
        %3621 = vmatpush1.msra.mxu0 0.0
        %3622 = vmatprep.subr.mxu0 0.0
        %3623 = vmatpush1.msra.mxu0 0.0
        %3624 = vmatprep.subr.mxu0 0.0
        %3625 = vmatpush1.msra.mxu0 0.0
        %3626 = vmatprep.subr.mxu0 %v2945
        %3627 = vmatpush1.msra.mxu0 %v2944
        %3628 = vmatprep.subr.mxu0 %v2937
        %3629 = vmatpush1.msra.mxu0 %v2936
        %3630 = vmatprep.subr.mxu0 %v2929
        %3631 = vmatpush1.msra.mxu0 %v2928
        %3632 = vmatprep.subr.mxu0 %v2921
        %3633 = vmatpush1.msra.mxu0 %v2920
        %3634 = vmatprep.subr.mxu0 0.0
        %3635 = vmatpush2.msra.mxu0 0.0
        %3636 = vmatprep.subr.mxu0 0.0
        %3637 = vmatpush2.msra.mxu0 0.0
        %3638 = vmatprep.subr.mxu0 0.0
        %3639 = vmatpush2.msra.mxu0 0.0
        %3640 = vmatprep.subr.mxu0 0.0
        %3641 = vmatpush2.msra.mxu0 0.0
        %3642 = vmatprep.subr.mxu0 0.0
        %3643 = vmatpush2.msra.mxu0 0.0
        %3644 = vmatprep.subr.mxu0 0.0
        %3645 = vmatpush2.msra.mxu0 0.0
        %3646 = vmatprep.subr.mxu0 0.0
        %3647 = vmatpush2.msra.mxu0 0.0
        %3648 = vmatprep.subr.mxu0 0.0
        %3649 = vmatpush2.msra.mxu0 0.0
        %3650 = vmatprep.subr.mxu0 0.0
        %3651 = vmatpush2.msra.mxu0 0.0
        %3652 = vmatprep.subr.mxu0 0.0
        %3653 = vmatpush2.msra.mxu0 0.0
        %3654 = vmatprep.subr.mxu0 0.0
        %3655 = vmatpush2.msra.mxu0 0.0
        %3656 = vmatprep.subr.mxu0 0.0
        %3657 = vmatpush2.msra.mxu0 0.0
        %3658 = vmatprep.subr.mxu0 0.0
        %3659 = vmatpush2.msra.mxu0 0.0
        %3660 = vmatprep.subr.mxu0 0.0
        %3661 = vmatpush2.msra.mxu0 0.0
        %3662 = vmatprep.subr.mxu0 0.0
        %3663 = vmatpush2.msra.mxu0 0.0
        %3664 = vmatprep.subr.mxu0 0.0
        %3665 = vmatpush2.msra.mxu0 0.0
        %3666 = vmatprep.mubr.f32.mxu0 0.0
        %3667 = vmatmul.mubr.f32.gmra.mxu0 %v3327
        %v3668 = vpop.f32.mrf.mxu0
        %v3669 = vadd.f32 %v3305, %v3668
        %v3670 = vpop.f32.mrf.mxu0
        %v3671 = vadd.f32 %v3307, %v3670
        %3672 = vmatprep.mubr.f32.mxu0 0.0
        %3673 = vmatmul.mubr.f32.gmra.mxu0 %v3329
        %v3674 = vpop.f32.mrf.mxu0
        %v3675 = vadd.f32 %v3311, %v3674
        %v3676 = vpop.f32.mrf.mxu0
        %v3677 = vadd.f32 %v3313, %v3676
        %3678 = vmatprep.mubr.f32.mxu0 0.0
        %3679 = vmatmul.mubr.f32.gmra.mxu0 %v3331
        %v3680 = vpop.f32.mrf.mxu0
        %v3681 = vadd.f32 %v3317, %v3680
        %v3682 = vpop.f32.mrf.mxu0
        %v3683 = vadd.f32 %v3319, %v3682
        %3684 = vmatprep.mubr.f32.mxu0 0.0
        %3685 = vmatmul.mubr.f32.gmra.mxu0 %v3333
        %v3686 = vpop.f32.mrf.mxu0
        %v3687 = vadd.f32 %v3323, %v3686
        %v3688 = vpop.f32.mrf.mxu0
        %v3689 = vadd.f32 %v3325, %v3688
        %3690 = vdwg.mxu0
        %3691 = vrot.lane.b32.xlu0 %v2947, 64
        %v3692 = vpop.permute.xlu0 %3691
        %3693 = vrot.lane.b32.xlu0 %v2948, 64
        %v3694 = vpop.permute.xlu0 %3693
        %3695 = vrot.lane.b32.xlu0 %v2949, 64
        %v3696 = vpop.permute.xlu0 %3695
        %3697 = vrot.lane.b32.xlu0 %v2950, 64
        %v3698 = vpop.permute.xlu0 %3697
        %v3699 = vsel %vm353, %v3692, 0
        %v3701 = vsel %vm353, %v3694, 0
        %v3703 = vsel %vm353, %v3696, 0
        %v3705 = vsel %vm353, %v3698, 0
        %3707 = vmatprep.subr.mxu0 0.0
        %3708 = vmatpush1.msra.mxu0 0.0
        %3709 = vmatprep.subr.mxu0 0.0
        %3710 = vmatpush1.msra.mxu0 0.0
        %3711 = vmatprep.subr.mxu0 0.0
        %3712 = vmatpush1.msra.mxu0 0.0
        %3713 = vmatprep.subr.mxu0 0.0
        %3714 = vmatpush1.msra.mxu0 0.0
        %3715 = vmatprep.subr.mxu0 0.0
        %3716 = vmatpush1.msra.mxu0 0.0
        %3717 = vmatprep.subr.mxu0 0.0
        %3718 = vmatpush1.msra.mxu0 0.0
        %3719 = vmatprep.subr.mxu0 0.0
        %3720 = vmatpush1.msra.mxu0 0.0
        %3721 = vmatprep.subr.mxu0 0.0
        %3722 = vmatpush1.msra.mxu0 0.0
        %3723 = vmatprep.subr.mxu0 0.0
        %3724 = vmatpush1.msra.mxu0 0.0
        %3725 = vmatprep.subr.mxu0 0.0
        %3726 = vmatpush1.msra.mxu0 0.0
        %3727 = vmatprep.subr.mxu0 0.0
        %3728 = vmatpush1.msra.mxu0 0.0
        %3729 = vmatprep.subr.mxu0 0.0
        %3730 = vmatpush1.msra.mxu0 0.0
        %3731 = vmatprep.subr.mxu0 0.0
        %3732 = vmatpush1.msra.mxu0 0.0
        %3733 = vmatprep.subr.mxu0 %v371
        %3734 = vmatpush1.msra.mxu0 %v368
        %3735 = vmatprep.subr.mxu0 %v310
        %3736 = vmatpush1.msra.mxu0 %v309
        %3737 = vmatprep.subr.mxu0 %v302
        %3738 = vmatpush1.msra.mxu0 %v301
        %3739 = vmatprep.subr.mxu0 0.0
        %3740 = vmatpush2.msra.mxu0 0.0
        %3741 = vmatprep.subr.mxu0 0.0
        %3742 = vmatpush2.msra.mxu0 0.0
        %3743 = vmatprep.subr.mxu0 0.0
        %3744 = vmatpush2.msra.mxu0 0.0
        %3745 = vmatprep.subr.mxu0 0.0
        %3746 = vmatpush2.msra.mxu0 0.0
        %3747 = vmatprep.subr.mxu0 0.0
        %3748 = vmatpush2.msra.mxu0 0.0
        %3749 = vmatprep.subr.mxu0 0.0
        %3750 = vmatpush2.msra.mxu0 0.0
        %3751 = vmatprep.subr.mxu0 0.0
        %3752 = vmatpush2.msra.mxu0 0.0
        %3753 = vmatprep.subr.mxu0 0.0
        %3754 = vmatpush2.msra.mxu0 0.0
        %3755 = vmatprep.subr.mxu0 0.0
        %3756 = vmatpush2.msra.mxu0 0.0
        %3757 = vmatprep.subr.mxu0 0.0
        %3758 = vmatpush2.msra.mxu0 0.0
        %3759 = vmatprep.subr.mxu0 0.0
        %3760 = vmatpush2.msra.mxu0 0.0
        %3761 = vmatprep.subr.mxu0 0.0
        %3762 = vmatpush2.msra.mxu0 0.0
        %3763 = vmatprep.subr.mxu0 0.0
        %3764 = vmatpush2.msra.mxu0 0.0
        %3765 = vmatprep.subr.mxu0 0.0
        %3766 = vmatpush2.msra.mxu0 0.0
        %3767 = vmatprep.subr.mxu0 0.0
        %3768 = vmatpush2.msra.mxu0 0.0
        %3769 = vmatprep.subr.mxu0 0.0
        %3770 = vmatpush2.msra.mxu0 0.0
        %3771 = vmatprep.mubr.f32.mxu0 0.0
        %3772 = vmatmul.mubr.f32.gmra.mxu0 %v3699
        %v3773 = vpop.f32.mrf.mxu0
        %v3774 = vadd.f32 0.0, %v3773
        %v3775 = vpop.f32.mrf.mxu0
        %v3776 = vadd.f32 0.0, %v3775
        %3777 = vmatprep.mubr.f32.mxu0 0.0
        %3778 = vmatmul.mubr.f32.gmra.mxu0 %v3701
        %v3779 = vpop.f32.mrf.mxu0
        %v3780 = vadd.f32 0.0, %v3779
        %v3781 = vpop.f32.mrf.mxu0
        %v3782 = vadd.f32 0.0, %v3781
        %3783 = vmatprep.mubr.f32.mxu0 0.0
        %3784 = vmatmul.mubr.f32.gmra.mxu0 %v3703
        %v3785 = vpop.f32.mrf.mxu0
        %v3786 = vadd.f32 0.0, %v3785
        %v3787 = vpop.f32.mrf.mxu0
        %v3788 = vadd.f32 0.0, %v3787
        %3789 = vmatprep.mubr.f32.mxu0 0.0
        %3790 = vmatmul.mubr.f32.gmra.mxu0 %v3705
        %v3791 = vpop.f32.mrf.mxu0
        %v3792 = vadd.f32 0.0, %v3791
        %v3793 = vpop.f32.mrf.mxu0
        %v3794 = vadd.f32 0.0, %v3793
        %3795 = vdwg.mxu0
        %3796 = vmatprep.subr.mxu0 0.0
        %3797 = vmatpush1.msra.mxu0 0.0
        %3798 = vmatprep.subr.mxu0 0.0
        %3799 = vmatpush1.msra.mxu0 0.0
        %3800 = vmatprep.subr.mxu0 0.0
        %3801 = vmatpush1.msra.mxu0 0.0
        %3802 = vmatprep.subr.mxu0 0.0
        %3803 = vmatpush1.msra.mxu0 0.0
        %3804 = vmatprep.subr.mxu0 0.0
        %3805 = vmatpush1.msra.mxu0 0.0
        %3806 = vmatprep.subr.mxu0 0.0
        %3807 = vmatpush1.msra.mxu0 0.0
        %3808 = vmatprep.subr.mxu0 0.0
        %3809 = vmatpush1.msra.mxu0 0.0
        %3810 = vmatprep.subr.mxu0 0.0
        %3811 = vmatpush1.msra.mxu0 0.0
        %3812 = vmatprep.subr.mxu0 0.0
        %3813 = vmatpush1.msra.mxu0 0.0
        %3814 = vmatprep.subr.mxu0 0.0
        %3815 = vmatpush1.msra.mxu0 0.0
        %3816 = vmatprep.subr.mxu0 0.0
        %3817 = vmatpush1.msra.mxu0 0.0
        %3818 = vmatprep.subr.mxu0 0.0
        %3819 = vmatpush1.msra.mxu0 0.0
        %3820 = vmatprep.subr.mxu0 0.0
        %3821 = vmatpush1.msra.mxu0 0.0
        %3822 = vmatprep.subr.mxu0 %v377
        %3823 = vmatpush1.msra.mxu0 %v374
        %3824 = vmatprep.subr.mxu0 %v312
        %3825 = vmatpush1.msra.mxu0 %v311
        %3826 = vmatprep.subr.mxu0 %v304
        %3827 = vmatpush1.msra.mxu0 %v303
        %3828 = vmatprep.subr.mxu0 0.0
        %3829 = vmatpush2.msra.mxu0 0.0
        %3830 = vmatprep.subr.mxu0 0.0
        %3831 = vmatpush2.msra.mxu0 0.0
        %3832 = vmatprep.subr.mxu0 0.0
        %3833 = vmatpush2.msra.mxu0 0.0
        %3834 = vmatprep.subr.mxu0 0.0
        %3835 = vmatpush2.msra.mxu0 0.0
        %3836 = vmatprep.subr.mxu0 0.0
        %3837 = vmatpush2.msra.mxu0 0.0
        %3838 = vmatprep.subr.mxu0 0.0
        %3839 = vmatpush2.msra.mxu0 0.0
        %3840 = vmatprep.subr.mxu0 0.0
        %3841 = vmatpush2.msra.mxu0 0.0
        %3842 = vmatprep.subr.mxu0 0.0
        %3843 = vmatpush2.msra.mxu0 0.0
        %3844 = vmatprep.subr.mxu0 0.0
        %3845 = vmatpush2.msra.mxu0 0.0
        %3846 = vmatprep.subr.mxu0 0.0
        %3847 = vmatpush2.msra.mxu0 0.0
        %3848 = vmatprep.subr.mxu0 0.0
        %3849 = vmatpush2.msra.mxu0 0.0
        %3850 = vmatprep.subr.mxu0 0.0
        %3851 = vmatpush2.msra.mxu0 0.0
        %3852 = vmatprep.subr.mxu0 0.0
        %3853 = vmatpush2.msra.mxu0 0.0
        %3854 = vmatprep.subr.mxu0 0.0
        %3855 = vmatpush2.msra.mxu0 0.0
        %3856 = vmatprep.subr.mxu0 0.0
        %3857 = vmatpush2.msra.mxu0 0.0
        %3858 = vmatprep.subr.mxu0 0.0
        %3859 = vmatpush2.msra.mxu0 0.0
        %3860 = vmatprep.mubr.f32.mxu0 0.0
        %3861 = vmatmul.mubr.f32.gmra.mxu0 %v3699
        %v3862 = vpop.f32.mrf.mxu0
        %v3863 = vadd.f32 0.0, %v3862
        %v3864 = vpop.f32.mrf.mxu0
        %v3865 = vadd.f32 0.0, %v3864
        %3866 = vmatprep.mubr.f32.mxu0 0.0
        %3867 = vmatmul.mubr.f32.gmra.mxu0 %v3701
        %v3868 = vpop.f32.mrf.mxu0
        %v3869 = vadd.f32 0.0, %v3868
        %v3870 = vpop.f32.mrf.mxu0
        %v3871 = vadd.f32 0.0, %v3870
        %3872 = vmatprep.mubr.f32.mxu0 0.0
        %3873 = vmatmul.mubr.f32.gmra.mxu0 %v3703
        %v3874 = vpop.f32.mrf.mxu0
        %v3875 = vadd.f32 0.0, %v3874
        %v3876 = vpop.f32.mrf.mxu0
        %v3877 = vadd.f32 0.0, %v3876
        %3878 = vmatprep.mubr.f32.mxu0 0.0
        %3879 = vmatmul.mubr.f32.gmra.mxu0 %v3705
        %v3880 = vpop.f32.mrf.mxu0
        %v3881 = vadd.f32 0.0, %v3880
        %v3882 = vpop.f32.mrf.mxu0
        %v3883 = vadd.f32 0.0, %v3882
        %3884 = vdwg.mxu0
        %3885 = vmatprep.subr.mxu0 0.0
        %3886 = vmatpush1.msra.mxu0 0.0
        %3887 = vmatprep.subr.mxu0 0.0
        %3888 = vmatpush1.msra.mxu0 0.0
        %3889 = vmatprep.subr.mxu0 0.0
        %3890 = vmatpush1.msra.mxu0 0.0
        %3891 = vmatprep.subr.mxu0 0.0
        %3892 = vmatpush1.msra.mxu0 0.0
        %3893 = vmatprep.subr.mxu0 0.0
        %3894 = vmatpush1.msra.mxu0 0.0
        %3895 = vmatprep.subr.mxu0 0.0
        %3896 = vmatpush1.msra.mxu0 0.0
        %3897 = vmatprep.subr.mxu0 0.0
        %3898 = vmatpush1.msra.mxu0 0.0
        %3899 = vmatprep.subr.mxu0 0.0
        %3900 = vmatpush1.msra.mxu0 0.0
        %3901 = vmatprep.subr.mxu0 0.0
        %3902 = vmatpush1.msra.mxu0 0.0
        %3903 = vmatprep.subr.mxu0 0.0
        %3904 = vmatpush1.msra.mxu0 0.0
        %3905 = vmatprep.subr.mxu0 0.0
        %3906 = vmatpush1.msra.mxu0 0.0
        %3907 = vmatprep.subr.mxu0 0.0
        %3908 = vmatpush1.msra.mxu0 0.0
        %3909 = vmatprep.subr.mxu0 0.0
        %3910 = vmatpush1.msra.mxu0 0.0
        %3911 = vmatprep.subr.mxu0 %v383
        %3912 = vmatpush1.msra.mxu0 %v380
        %3913 = vmatprep.subr.mxu0 %v314
        %3914 = vmatpush1.msra.mxu0 %v313
        %3915 = vmatprep.subr.mxu0 %v306
        %3916 = vmatpush1.msra.mxu0 %v305
        %3917 = vmatprep.subr.mxu0 0.0
        %3918 = vmatpush2.msra.mxu0 0.0
        %3919 = vmatprep.subr.mxu0 0.0
        %3920 = vmatpush2.msra.mxu0 0.0
        %3921 = vmatprep.subr.mxu0 0.0
        %3922 = vmatpush2.msra.mxu0 0.0
        %3923 = vmatprep.subr.mxu0 0.0
        %3924 = vmatpush2.msra.mxu0 0.0
        %3925 = vmatprep.subr.mxu0 0.0
        %3926 = vmatpush2.msra.mxu0 0.0
        %3927 = vmatprep.subr.mxu0 0.0
        %3928 = vmatpush2.msra.mxu0 0.0
        %3929 = vmatprep.subr.mxu0 0.0
        %3930 = vmatpush2.msra.mxu0 0.0
        %3931 = vmatprep.subr.mxu0 0.0
        %3932 = vmatpush2.msra.mxu0 0.0
        %3933 = vmatprep.subr.mxu0 0.0
        %3934 = vmatpush2.msra.mxu0 0.0
        %3935 = vmatprep.subr.mxu0 0.0
        %3936 = vmatpush2.msra.mxu0 0.0
        %3937 = vmatprep.subr.mxu0 0.0
        %3938 = vmatpush2.msra.mxu0 0.0
        %3939 = vmatprep.subr.mxu0 0.0
        %3940 = vmatpush2.msra.mxu0 0.0
        %3941 = vmatprep.subr.mxu0 0.0
        %3942 = vmatpush2.msra.mxu0 0.0
        %3943 = vmatprep.subr.mxu0 0.0
        %3944 = vmatpush2.msra.mxu0 0.0
        %3945 = vmatprep.subr.mxu0 0.0
        %3946 = vmatpush2.msra.mxu0 0.0
        %3947 = vmatprep.subr.mxu0 0.0
        %3948 = vmatpush2.msra.mxu0 0.0
        %3949 = vmatprep.mubr.f32.mxu0 0.0
        %3950 = vmatmul.mubr.f32.gmra.mxu0 %v3699
        %v3951 = vpop.f32.mrf.mxu0
        %v3952 = vadd.f32 0.0, %v3951
        %v3953 = vpop.f32.mrf.mxu0
        %v3954 = vadd.f32 0.0, %v3953
        %3955 = vmatprep.mubr.f32.mxu0 0.0
        %3956 = vmatmul.mubr.f32.gmra.mxu0 %v3701
        %v3957 = vpop.f32.mrf.mxu0
        %v3958 = vadd.f32 0.0, %v3957
        %v3959 = vpop.f32.mrf.mxu0
        %v3960 = vadd.f32 0.0, %v3959
        %3961 = vmatprep.mubr.f32.mxu0 0.0
        %3962 = vmatmul.mubr.f32.gmra.mxu0 %v3703
        %v3963 = vpop.f32.mrf.mxu0
        %v3964 = vadd.f32 0.0, %v3963
        %v3965 = vpop.f32.mrf.mxu0
        %v3966 = vadd.f32 0.0, %v3965
        %3967 = vmatprep.mubr.f32.mxu0 0.0
        %3968 = vmatmul.mubr.f32.gmra.mxu0 %v3705
        %v3969 = vpop.f32.mrf.mxu0
        %v3970 = vadd.f32 0.0, %v3969
        %v3971 = vpop.f32.mrf.mxu0
        %v3972 = vadd.f32 0.0, %v3971
        %3973 = vdwg.mxu0
        %3974 = vmatprep.subr.mxu0 0.0
        %3975 = vmatpush1.msra.mxu0 0.0
        %3976 = vmatprep.subr.mxu0 0.0
        %3977 = vmatpush1.msra.mxu0 0.0
        %3978 = vmatprep.subr.mxu0 0.0
        %3979 = vmatpush1.msra.mxu0 0.0
        %3980 = vmatprep.subr.mxu0 0.0
        %3981 = vmatpush1.msra.mxu0 0.0
        %3982 = vmatprep.subr.mxu0 0.0
        %3983 = vmatpush1.msra.mxu0 0.0
        %3984 = vmatprep.subr.mxu0 0.0
        %3985 = vmatpush1.msra.mxu0 0.0
        %3986 = vmatprep.subr.mxu0 0.0
        %3987 = vmatpush1.msra.mxu0 0.0
        %3988 = vmatprep.subr.mxu0 0.0
        %3989 = vmatpush1.msra.mxu0 0.0
        %3990 = vmatprep.subr.mxu0 0.0
        %3991 = vmatpush1.msra.mxu0 0.0
        %3992 = vmatprep.subr.mxu0 0.0
        %3993 = vmatpush1.msra.mxu0 0.0
        %3994 = vmatprep.subr.mxu0 0.0
        %3995 = vmatpush1.msra.mxu0 0.0
        %3996 = vmatprep.subr.mxu0 0.0
        %3997 = vmatpush1.msra.mxu0 0.0
        %3998 = vmatprep.subr.mxu0 0.0
        %3999 = vmatpush1.msra.mxu0 0.0
        %4000 = vmatprep.subr.mxu0 %v389
        %4001 = vmatpush1.msra.mxu0 %v386
        %4002 = vmatprep.subr.mxu0 %v316
        %4003 = vmatpush1.msra.mxu0 %v315
        %4004 = vmatprep.subr.mxu0 %v308
        %4005 = vmatpush1.msra.mxu0 %v307
        %4006 = vmatprep.subr.mxu0 0.0
        %4007 = vmatpush2.msra.mxu0 0.0
        %4008 = vmatprep.subr.mxu0 0.0
        %4009 = vmatpush2.msra.mxu0 0.0
        %4010 = vmatprep.subr.mxu0 0.0
        %4011 = vmatpush2.msra.mxu0 0.0
        %4012 = vmatprep.subr.mxu0 0.0
        %4013 = vmatpush2.msra.mxu0 0.0
        %4014 = vmatprep.subr.mxu0 0.0
        %4015 = vmatpush2.msra.mxu0 0.0
        %4016 = vmatprep.subr.mxu0 0.0
        %4017 = vmatpush2.msra.mxu0 0.0
        %4018 = vmatprep.subr.mxu0 0.0
        %4019 = vmatpush2.msra.mxu0 0.0
        %4020 = vmatprep.subr.mxu0 0.0
        %4021 = vmatpush2.msra.mxu0 0.0
        %4022 = vmatprep.subr.mxu0 0.0
        %4023 = vmatpush2.msra.mxu0 0.0
        %4024 = vmatprep.subr.mxu0 0.0
        %4025 = vmatpush2.msra.mxu0 0.0
        %4026 = vmatprep.subr.mxu0 0.0
        %4027 = vmatpush2.msra.mxu0 0.0
        %4028 = vmatprep.subr.mxu0 0.0
        %4029 = vmatpush2.msra.mxu0 0.0
        %4030 = vmatprep.subr.mxu0 0.0
        %4031 = vmatpush2.msra.mxu0 0.0
        %4032 = vmatprep.subr.mxu0 0.0
        %4033 = vmatpush2.msra.mxu0 0.0
        %4034 = vmatprep.subr.mxu0 0.0
        %4035 = vmatpush2.msra.mxu0 0.0
        %4036 = vmatprep.subr.mxu0 0.0
        %4037 = vmatpush2.msra.mxu0 0.0
        %4038 = vmatprep.mubr.f32.mxu0 0.0
        %4039 = vmatmul.mubr.f32.gmra.mxu0 %v3699
        %v4040 = vpop.f32.mrf.mxu0
        %v4041 = vadd.f32 0.0, %v4040
        %v4042 = vpop.f32.mrf.mxu0
        %v4043 = vadd.f32 0.0, %v4042
        %4044 = vmatprep.mubr.f32.mxu0 0.0
        %4045 = vmatmul.mubr.f32.gmra.mxu0 %v3701
        %v4046 = vpop.f32.mrf.mxu0
        %v4047 = vadd.f32 0.0, %v4046
        %v4048 = vpop.f32.mrf.mxu0
        %v4049 = vadd.f32 0.0, %v4048
        %4050 = vmatprep.mubr.f32.mxu0 0.0
        %4051 = vmatmul.mubr.f32.gmra.mxu0 %v3703
        %v4052 = vpop.f32.mrf.mxu0
        %v4053 = vadd.f32 0.0, %v4052
        %v4054 = vpop.f32.mrf.mxu0
        %v4055 = vadd.f32 0.0, %v4054
        %4056 = vmatprep.mubr.f32.mxu0 0.0
        %4057 = vmatmul.mubr.f32.gmra.mxu0 %v3705
        %v4058 = vpop.f32.mrf.mxu0
        %v4059 = vadd.f32 0.0, %v4058
        %v4060 = vpop.f32.mrf.mxu0
        %v4061 = vadd.f32 0.0, %v4060
        %4062 = vdwg.mxu0
        %v4063 = vadd.f32 %v3402, %v3774
        %v4064 = vadd.f32 %v3404, %v3776
        %v4065 = vadd.f32 %v3491, %v3863
        %v4066 = vadd.f32 %v3493, %v3865
        %v4067 = vadd.f32 %v3580, %v3952
        %v4068 = vadd.f32 %v3582, %v3954
        %v4069 = vadd.f32 %v3669, %v4041
        %v4070 = vadd.f32 %v3671, %v4043
        %v4071 = vadd.f32 %v3408, %v3780
        %v4072 = vadd.f32 %v3410, %v3782
        %v4073 = vadd.f32 %v3497, %v3869
        %v4074 = vadd.f32 %v3499, %v3871
        %v4075 = vadd.f32 %v3586, %v3958
        %v4076 = vadd.f32 %v3588, %v3960
        %v4077 = vadd.f32 %v3675, %v4047
        %v4078 = vadd.f32 %v3677, %v4049
        %v4079 = vadd.f32 %v3414, %v3786
        %v4080 = vadd.f32 %v3416, %v3788
        %v4081 = vadd.f32 %v3503, %v3875
        %v4082 = vadd.f32 %v3505, %v3877
        %v4083 = vadd.f32 %v3592, %v3964
        %v4084 = vadd.f32 %v3594, %v3966
        %v4085 = vadd.f32 %v3681, %v4053
        %v4086 = vadd.f32 %v3683, %v4055
        %v4087 = vadd.f32 %v3420, %v3792
        %v4088 = vadd.f32 %v3422, %v3794
        %v4089 = vadd.f32 %v3509, %v3881
        %v4090 = vadd.f32 %v3511, %v3883
        %v4091 = vadd.f32 %v3598, %v3970
        %v4092 = vadd.f32 %v3600, %v3972
        %v4093 = vadd.f32 %v3687, %v4059
        %v4094 = vadd.f32 %v3689, %v4061
        %s4095 = scalar_lea.vmem %s4, 64
        %v4096 = vld [vmem:[%s4095] sm:$0xff]
        %v4097 = vld [vmem:[%s4095 + $0x8] sm:$0xff]
        %v4098 = vld [vmem:[%s4095 + $0x10] sm:$0xff]
        %v4099 = vld [vmem:[%s4095 + $0x18] sm:$0xff]
        %4101 = vset.pattern.permute.xlu0 0
        %4102 = vperm.xlu0 %4101, %v4096
        %v4103 = vpop.permute.xlu0 %4102
        %4106 = vset.pattern.permute.xlu0 0
        %4107 = vperm.xlu0 %4106, %v4097
        %v4108 = vpop.permute.xlu0 %4107
        %4111 = vset.pattern.permute.xlu0 0
        %4112 = vperm.xlu0 %4111, %v4098
        %v4113 = vpop.permute.xlu0 %4112
        %4116 = vset.pattern.permute.xlu0 0
        %4117 = vperm.xlu0 %4116, %v4099
        %v4118 = vpop.permute.xlu0 %4117
        %v4120 = vadd.f32 %v4063, %v4103
        %v4121 = vadd.f32 %v4064, %v4103
        %v4122 = vadd.f32 %v4065, %v4103
        %v4123 = vadd.f32 %v4066, %v4103
        %v4124 = vadd.f32 %v4067, %v4103
        %v4125 = vadd.f32 %v4068, %v4103
        %v4126 = vadd.f32 %v4069, %v4103
        %v4127 = vadd.f32 %v4070, %v4103
        %v4128 = vadd.f32 %v4071, %v4108
        %v4129 = vadd.f32 %v4072, %v4108
        %v4130 = vadd.f32 %v4073, %v4108
        %v4131 = vadd.f32 %v4074, %v4108
        %v4132 = vadd.f32 %v4075, %v4108
        %v4133 = vadd.f32 %v4076, %v4108
        %v4134 = vadd.f32 %v4077, %v4108
        %v4135 = vadd.f32 %v4078, %v4108
        %v4136 = vadd.f32 %v4079, %v4113
        %v4137 = vadd.f32 %v4080, %v4113
        %v4138 = vadd.f32 %v4081, %v4113
        %v4139 = vadd.f32 %v4082, %v4113
        %v4140 = vadd.f32 %v4083, %v4113
        %v4141 = vadd.f32 %v4084, %v4113
        %v4142 = vadd.f32 %v4085, %v4113
        %v4143 = vadd.f32 %v4086, %v4113
        %v4144 = vadd.f32 %v4087, %v4118
        %v4145 = vadd.f32 %v4088, %v4118
        %v4146 = vadd.f32 %v4089, %v4118
        %v4147 = vadd.f32 %v4090, %v4118
        %v4148 = vadd.f32 %v4091, %v4118
        %v4149 = vadd.f32 %v4092, %v4118
        %v4150 = vadd.f32 %v4093, %v4118
        %v4151 = vadd.f32 %v4094, %v4118
        %v4152 = vmul.f32 %v4120, 0.01
        %v4153 = vmul.f32 %v4121, 0.01
        %v4154 = vmul.f32 %v4122, 0.01
        %v4155 = vmul.f32 %v4123, 0.01
        %v4156 = vmul.f32 %v4124, 0.01
        %v4157 = vmul.f32 %v4125, 0.01
        %v4158 = vmul.f32 %v4126, 0.01
        %v4159 = vmul.f32 %v4127, 0.01
        %v4160 = vmul.f32 %v4128, 0.01
        %v4161 = vmul.f32 %v4129, 0.01
        %v4162 = vmul.f32 %v4130, 0.01
        %v4163 = vmul.f32 %v4131, 0.01
        %v4164 = vmul.f32 %v4132, 0.01
        %v4165 = vmul.f32 %v4133, 0.01
        %v4166 = vmul.f32 %v4134, 0.01
        %v4167 = vmul.f32 %v4135, 0.01
        %v4168 = vmul.f32 %v4136, 0.01
        %v4169 = vmul.f32 %v4137, 0.01
        %v4170 = vmul.f32 %v4138, 0.01
        %v4171 = vmul.f32 %v4139, 0.01
        %v4172 = vmul.f32 %v4140, 0.01
        %v4173 = vmul.f32 %v4141, 0.01
        %v4174 = vmul.f32 %v4142, 0.01
        %v4175 = vmul.f32 %v4143, 0.01
        %v4176 = vmul.f32 %v4144, 0.01
        %v4177 = vmul.f32 %v4145, 0.01
        %v4178 = vmul.f32 %v4146, 0.01
        %v4179 = vmul.f32 %v4147, 0.01
        %v4180 = vmul.f32 %v4148, 0.01
        %v4181 = vmul.f32 %v4149, 0.01
        %v4182 = vmul.f32 %v4150, 0.01
        %v4183 = vmul.f32 %v4151, 0.01
        %v4184 = vmax.f32 %v4120, %v4152
        %v4185 = vmax.f32 %v4121, %v4153
        %v4186 = vmax.f32 %v4122, %v4154
        %v4187 = vmax.f32 %v4123, %v4155
        %v4188 = vmax.f32 %v4124, %v4156
        %v4189 = vmax.f32 %v4125, %v4157
        %v4190 = vmax.f32 %v4126, %v4158
        %v4191 = vmax.f32 %v4127, %v4159
        %v4192 = vmax.f32 %v4128, %v4160
        %v4193 = vmax.f32 %v4129, %v4161
        %v4194 = vmax.f32 %v4130, %v4162
        %v4195 = vmax.f32 %v4131, %v4163
        %v4196 = vmax.f32 %v4132, %v4164
        %v4197 = vmax.f32 %v4133, %v4165
        %v4198 = vmax.f32 %v4134, %v4166
        %v4199 = vmax.f32 %v4135, %v4167
        %v4200 = vmax.f32 %v4136, %v4168
        %v4201 = vmax.f32 %v4137, %v4169
        %v4202 = vmax.f32 %v4138, %v4170
        %v4203 = vmax.f32 %v4139, %v4171
        %v4204 = vmax.f32 %v4140, %v4172
        %v4205 = vmax.f32 %v4141, %v4173
        %v4206 = vmax.f32 %v4142, %v4174
        %v4207 = vmax.f32 %v4143, %v4175
        %v4208 = vmax.f32 %v4144, %v4176
        %v4209 = vmax.f32 %v4145, %v4177
        %v4210 = vmax.f32 %v4146, %v4178
        %v4211 = vmax.f32 %v4147, %v4179
        %v4212 = vmax.f32 %v4148, %v4180
        %v4213 = vmax.f32 %v4149, %v4181
        %v4214 = vmax.f32 %v4150, %v4182
        %v4215 = vmax.f32 %v4151, %v4183
        %v4216 = vld [vmem:[%s5] sm:$0x1]
        %v4218 = vlaneseq
        %v4219 = vshrl.u32 %v4218, 7
        %v4220 = vsub.s32 0, %v4219
        %v4221 = vrot.slane %v4216, %v4220
        %4222 = vrot.lane.b32.xlu0 %v4221, 96
        %v4223 = vpop.permute.xlu0 %4222
        %v4224 = vsel %vm1191, %v4223, 0
        %4226 = vmatprep.subr.mxu0 0.0
        %4227 = vmatpush1.msra.mxu0 0.0
        %4228 = vmatprep.subr.mxu0 0.0
        %4229 = vmatpush1.msra.mxu0 0.0
        %4230 = vmatprep.subr.mxu0 0.0
        %4231 = vmatpush1.msra.mxu0 0.0
        %4232 = vmatprep.subr.mxu0 0.0
        %4233 = vmatpush1.msra.mxu0 0.0
        %4234 = vmatprep.subr.mxu0 0.0
        %4235 = vmatpush1.msra.mxu0 0.0
        %4236 = vmatprep.subr.mxu0 0.0
        %4237 = vmatpush1.msra.mxu0 0.0
        %4238 = vmatprep.subr.mxu0 0.0
        %4239 = vmatpush1.msra.mxu0 0.0
        %4240 = vmatprep.subr.mxu0 0.0
        %4241 = vmatpush1.msra.mxu0 0.0
        %4242 = vmatprep.subr.mxu0 0.0
        %4243 = vmatpush1.msra.mxu0 0.0
        %4244 = vmatprep.subr.mxu0 0.0
        %4245 = vmatpush1.msra.mxu0 0.0
        %4246 = vmatprep.subr.mxu0 0.0
        %4247 = vmatpush1.msra.mxu0 0.0
        %4248 = vmatprep.subr.mxu0 0.0
        %4249 = vmatpush1.msra.mxu0 0.0
        %4250 = vmatprep.subr.mxu0 %v2939
        %4251 = vmatpush1.msra.mxu0 %v2938
        %4252 = vmatprep.subr.mxu0 %v2931
        %4253 = vmatpush1.msra.mxu0 %v2930
        %4254 = vmatprep.subr.mxu0 %v2923
        %4255 = vmatpush1.msra.mxu0 %v2922
        %4256 = vmatprep.subr.mxu0 %v2915
        %4257 = vmatpush1.msra.mxu0 %v2914
        %4258 = vmatprep.subr.mxu0 0.0
        %4259 = vmatpush2.msra.mxu0 0.0
        %4260 = vmatprep.subr.mxu0 0.0
        %4261 = vmatpush2.msra.mxu0 0.0
        %4262 = vmatprep.subr.mxu0 0.0
        %4263 = vmatpush2.msra.mxu0 0.0
        %4264 = vmatprep.subr.mxu0 0.0
        %4265 = vmatpush2.msra.mxu0 0.0
        %4266 = vmatprep.subr.mxu0 0.0
        %4267 = vmatpush2.msra.mxu0 0.0
        %4268 = vmatprep.subr.mxu0 0.0
        %4269 = vmatpush2.msra.mxu0 0.0
        %4270 = vmatprep.subr.mxu0 0.0
        %4271 = vmatpush2.msra.mxu0 0.0
        %4272 = vmatprep.subr.mxu0 0.0
        %4273 = vmatpush2.msra.mxu0 0.0
        %4274 = vmatprep.subr.mxu0 0.0
        %4275 = vmatpush2.msra.mxu0 0.0
        %4276 = vmatprep.subr.mxu0 0.0
        %4277 = vmatpush2.msra.mxu0 0.0
        %4278 = vmatprep.subr.mxu0 0.0
        %4279 = vmatpush2.msra.mxu0 0.0
        %4280 = vmatprep.subr.mxu0 0.0
        %4281 = vmatpush2.msra.mxu0 0.0
        %4282 = vmatprep.subr.mxu0 0.0
        %4283 = vmatpush2.msra.mxu0 0.0
        %4284 = vmatprep.subr.mxu0 0.0
        %4285 = vmatpush2.msra.mxu0 0.0
        %4286 = vmatprep.subr.mxu0 0.0
        %4287 = vmatpush2.msra.mxu0 0.0
        %4288 = vmatprep.subr.mxu0 0.0
        %4289 = vmatpush2.msra.mxu0 0.0
        %4290 = vmatprep.mubr.f32.mxu0 0.0
        %4291 = vmatmul.mubr.f32.gmra.mxu0 %v4224
        %v4292 = vpop.f32.mrf.mxu0
        %v4293 = vadd.f32 0.0, %v4292
        %v4294 = vpop.f32.mrf.mxu0
        %v4295 = vadd.f32 0.0, %v4294
        %4296 = vdwg.mxu0
        %4297 = vmatprep.subr.mxu0 0.0
        %4298 = vmatpush1.msra.mxu0 0.0
        %4299 = vmatprep.subr.mxu0 0.0
        %4300 = vmatpush1.msra.mxu0 0.0
        %4301 = vmatprep.subr.mxu0 0.0
        %4302 = vmatpush1.msra.mxu0 0.0
        %4303 = vmatprep.subr.mxu0 0.0
        %4304 = vmatpush1.msra.mxu0 0.0
        %4305 = vmatprep.subr.mxu0 0.0
        %4306 = vmatpush1.msra.mxu0 0.0
        %4307 = vmatprep.subr.mxu0 0.0
        %4308 = vmatpush1.msra.mxu0 0.0
        %4309 = vmatprep.subr.mxu0 0.0
        %4310 = vmatpush1.msra.mxu0 0.0
        %4311 = vmatprep.subr.mxu0 0.0
        %4312 = vmatpush1.msra.mxu0 0.0
        %4313 = vmatprep.subr.mxu0 0.0
        %4314 = vmatpush1.msra.mxu0 0.0
        %4315 = vmatprep.subr.mxu0 0.0
        %4316 = vmatpush1.msra.mxu0 0.0
        %4317 = vmatprep.subr.mxu0 0.0
        %4318 = vmatpush1.msra.mxu0 0.0
        %4319 = vmatprep.subr.mxu0 0.0
        %4320 = vmatpush1.msra.mxu0 0.0
        %4321 = vmatprep.subr.mxu0 %v2941
        %4322 = vmatpush1.msra.mxu0 %v2940
        %4323 = vmatprep.subr.mxu0 %v2933
        %4324 = vmatpush1.msra.mxu0 %v2932
        %4325 = vmatprep.subr.mxu0 %v2925
        %4326 = vmatpush1.msra.mxu0 %v2924
        %4327 = vmatprep.subr.mxu0 %v2917
        %4328 = vmatpush1.msra.mxu0 %v2916
        %4329 = vmatprep.subr.mxu0 0.0
        %4330 = vmatpush2.msra.mxu0 0.0
        %4331 = vmatprep.subr.mxu0 0.0
        %4332 = vmatpush2.msra.mxu0 0.0
        %4333 = vmatprep.subr.mxu0 0.0
        %4334 = vmatpush2.msra.mxu0 0.0
        %4335 = vmatprep.subr.mxu0 0.0
        %4336 = vmatpush2.msra.mxu0 0.0
        %4337 = vmatprep.subr.mxu0 0.0
        %4338 = vmatpush2.msra.mxu0 0.0
        %4339 = vmatprep.subr.mxu0 0.0
        %4340 = vmatpush2.msra.mxu0 0.0
        %4341 = vmatprep.subr.mxu0 0.0
        %4342 = vmatpush2.msra.mxu0 0.0
        %4343 = vmatprep.subr.mxu0 0.0
        %4344 = vmatpush2.msra.mxu0 0.0
        %4345 = vmatprep.subr.mxu0 0.0
        %4346 = vmatpush2.msra.mxu0 0.0
        %4347 = vmatprep.subr.mxu0 0.0
        %4348 = vmatpush2.msra.mxu0 0.0
        %4349 = vmatprep.subr.mxu0 0.0
        %4350 = vmatpush2.msra.mxu0 0.0
        %4351 = vmatprep.subr.mxu0 0.0
        %4352 = vmatpush2.msra.mxu0 0.0
        %4353 = vmatprep.subr.mxu0 0.0
        %4354 = vmatpush2.msra.mxu0 0.0
        %4355 = vmatprep.subr.mxu0 0.0
        %4356 = vmatpush2.msra.mxu0 0.0
        %4357 = vmatprep.subr.mxu0 0.0
        %4358 = vmatpush2.msra.mxu0 0.0
        %4359 = vmatprep.subr.mxu0 0.0
        %4360 = vmatpush2.msra.mxu0 0.0
        %4361 = vmatprep.mubr.f32.mxu0 0.0
        %4362 = vmatmul.mubr.f32.gmra.mxu0 %v4224
        %v4363 = vpop.f32.mrf.mxu0
        %v4364 = vadd.f32 0.0, %v4363
        %v4365 = vpop.f32.mrf.mxu0
        %v4366 = vadd.f32 0.0, %v4365
        %4367 = vdwg.mxu0
        %4368 = vmatprep.subr.mxu0 0.0
        %4369 = vmatpush1.msra.mxu0 0.0
        %4370 = vmatprep.subr.mxu0 0.0
        %4371 = vmatpush1.msra.mxu0 0.0
        %4372 = vmatprep.subr.mxu0 0.0
        %4373 = vmatpush1.msra.mxu0 0.0
        %4374 = vmatprep.subr.mxu0 0.0
        %4375 = vmatpush1.msra.mxu0 0.0
        %4376 = vmatprep.subr.mxu0 0.0
        %4377 = vmatpush1.msra.mxu0 0.0
        %4378 = vmatprep.subr.mxu0 0.0
        %4379 = vmatpush1.msra.mxu0 0.0
        %4380 = vmatprep.subr.mxu0 0.0
        %4381 = vmatpush1.msra.mxu0 0.0
        %4382 = vmatprep.subr.mxu0 0.0
        %4383 = vmatpush1.msra.mxu0 0.0
        %4384 = vmatprep.subr.mxu0 0.0
        %4385 = vmatpush1.msra.mxu0 0.0
        %4386 = vmatprep.subr.mxu0 0.0
        %4387 = vmatpush1.msra.mxu0 0.0
        %4388 = vmatprep.subr.mxu0 0.0
        %4389 = vmatpush1.msra.mxu0 0.0
        %4390 = vmatprep.subr.mxu0 0.0
        %4391 = vmatpush1.msra.mxu0 0.0
        %4392 = vmatprep.subr.mxu0 %v2943
        %4393 = vmatpush1.msra.mxu0 %v2942
        %4394 = vmatprep.subr.mxu0 %v2935
        %4395 = vmatpush1.msra.mxu0 %v2934
        %4396 = vmatprep.subr.mxu0 %v2927
        %4397 = vmatpush1.msra.mxu0 %v2926
        %4398 = vmatprep.subr.mxu0 %v2919
        %4399 = vmatpush1.msra.mxu0 %v2918
        %4400 = vmatprep.subr.mxu0 0.0
        %4401 = vmatpush2.msra.mxu0 0.0
        %4402 = vmatprep.subr.mxu0 0.0
        %4403 = vmatpush2.msra.mxu0 0.0
        %4404 = vmatprep.subr.mxu0 0.0
        %4405 = vmatpush2.msra.mxu0 0.0
        %4406 = vmatprep.subr.mxu0 0.0
        %4407 = vmatpush2.msra.mxu0 0.0
        %4408 = vmatprep.subr.mxu0 0.0
        %4409 = vmatpush2.msra.mxu0 0.0
        %4410 = vmatprep.subr.mxu0 0.0
        %4411 = vmatpush2.msra.mxu0 0.0
        %4412 = vmatprep.subr.mxu0 0.0
        %4413 = vmatpush2.msra.mxu0 0.0
        %4414 = vmatprep.subr.mxu0 0.0
        %4415 = vmatpush2.msra.mxu0 0.0
        %4416 = vmatprep.subr.mxu0 0.0
        %4417 = vmatpush2.msra.mxu0 0.0
        %4418 = vmatprep.subr.mxu0 0.0
        %4419 = vmatpush2.msra.mxu0 0.0
        %4420 = vmatprep.subr.mxu0 0.0
        %4421 = vmatpush2.msra.mxu0 0.0
        %4422 = vmatprep.subr.mxu0 0.0
        %4423 = vmatpush2.msra.mxu0 0.0
        %4424 = vmatprep.subr.mxu0 0.0
        %4425 = vmatpush2.msra.mxu0 0.0
        %4426 = vmatprep.subr.mxu0 0.0
        %4427 = vmatpush2.msra.mxu0 0.0
        %4428 = vmatprep.subr.mxu0 0.0
        %4429 = vmatpush2.msra.mxu0 0.0
        %4430 = vmatprep.subr.mxu0 0.0
        %4431 = vmatpush2.msra.mxu0 0.0
        %4432 = vmatprep.mubr.f32.mxu0 0.0
        %4433 = vmatmul.mubr.f32.gmra.mxu0 %v4224
        %v4434 = vpop.f32.mrf.mxu0
        %v4435 = vadd.f32 0.0, %v4434
        %v4436 = vpop.f32.mrf.mxu0
        %v4437 = vadd.f32 0.0, %v4436
        %4438 = vdwg.mxu0
        %4439 = vmatprep.subr.mxu0 0.0
        %4440 = vmatpush1.msra.mxu0 0.0
        %4441 = vmatprep.subr.mxu0 0.0
        %4442 = vmatpush1.msra.mxu0 0.0
        %4443 = vmatprep.subr.mxu0 0.0
        %4444 = vmatpush1.msra.mxu0 0.0
        %4445 = vmatprep.subr.mxu0 0.0
        %4446 = vmatpush1.msra.mxu0 0.0
        %4447 = vmatprep.subr.mxu0 0.0
        %4448 = vmatpush1.msra.mxu0 0.0
        %4449 = vmatprep.subr.mxu0 0.0
        %4450 = vmatpush1.msra.mxu0 0.0
        %4451 = vmatprep.subr.mxu0 0.0
        %4452 = vmatpush1.msra.mxu0 0.0
        %4453 = vmatprep.subr.mxu0 0.0
        %4454 = vmatpush1.msra.mxu0 0.0
        %4455 = vmatprep.subr.mxu0 0.0
        %4456 = vmatpush1.msra.mxu0 0.0
        %4457 = vmatprep.subr.mxu0 0.0
        %4458 = vmatpush1.msra.mxu0 0.0
        %4459 = vmatprep.subr.mxu0 0.0
        %4460 = vmatpush1.msra.mxu0 0.0
        %4461 = vmatprep.subr.mxu0 0.0
        %4462 = vmatpush1.msra.mxu0 0.0
        %4463 = vmatprep.subr.mxu0 %v2945
        %4464 = vmatpush1.msra.mxu0 %v2944
        %4465 = vmatprep.subr.mxu0 %v2937
        %4466 = vmatpush1.msra.mxu0 %v2936
        %4467 = vmatprep.subr.mxu0 %v2929
        %4468 = vmatpush1.msra.mxu0 %v2928
        %4469 = vmatprep.subr.mxu0 %v2921
        %4470 = vmatpush1.msra.mxu0 %v2920
        %4471 = vmatprep.subr.mxu0 0.0
        %4472 = vmatpush2.msra.mxu0 0.0
        %4473 = vmatprep.subr.mxu0 0.0
        %4474 = vmatpush2.msra.mxu0 0.0
        %4475 = vmatprep.subr.mxu0 0.0
        %4476 = vmatpush2.msra.mxu0 0.0
        %4477 = vmatprep.subr.mxu0 0.0
        %4478 = vmatpush2.msra.mxu0 0.0
        %4479 = vmatprep.subr.mxu0 0.0
        %4480 = vmatpush2.msra.mxu0 0.0
        %4481 = vmatprep.subr.mxu0 0.0
        %4482 = vmatpush2.msra.mxu0 0.0
        %4483 = vmatprep.subr.mxu0 0.0
        %4484 = vmatpush2.msra.mxu0 0.0
        %4485 = vmatprep.subr.mxu0 0.0
        %4486 = vmatpush2.msra.mxu0 0.0
        %4487 = vmatprep.subr.mxu0 0.0
        %4488 = vmatpush2.msra.mxu0 0.0
        %4489 = vmatprep.subr.mxu0 0.0
        %4490 = vmatpush2.msra.mxu0 0.0
        %4491 = vmatprep.subr.mxu0 0.0
        %4492 = vmatpush2.msra.mxu0 0.0
        %4493 = vmatprep.subr.mxu0 0.0
        %4494 = vmatpush2.msra.mxu0 0.0
        %4495 = vmatprep.subr.mxu0 0.0
        %4496 = vmatpush2.msra.mxu0 0.0
        %4497 = vmatprep.subr.mxu0 0.0
        %4498 = vmatpush2.msra.mxu0 0.0
        %4499 = vmatprep.subr.mxu0 0.0
        %4500 = vmatpush2.msra.mxu0 0.0
        %4501 = vmatprep.subr.mxu0 0.0
        %4502 = vmatpush2.msra.mxu0 0.0
        %4503 = vmatprep.mubr.f32.mxu0 0.0
        %4504 = vmatmul.mubr.f32.gmra.mxu0 %v4224
        %v4505 = vpop.f32.mrf.mxu0
        %v4506 = vadd.f32 0.0, %v4505
        %v4507 = vpop.f32.mrf.mxu0
        %v4508 = vadd.f32 0.0, %v4507
        %4509 = vdwg.mxu0
        %v4510 = vsel %vm1191, %v4216, 0
        %4512 = vmatprep.subr.mxu0 0.0
        %4513 = vmatpush1.msra.mxu0 0.0
        %4514 = vmatprep.subr.mxu0 0.0
        %4515 = vmatpush1.msra.mxu0 0.0
        %4516 = vmatprep.subr.mxu0 0.0
        %4517 = vmatpush1.msra.mxu0 0.0
        %4518 = vmatprep.subr.mxu0 0.0
        %4519 = vmatpush1.msra.mxu0 0.0
        %4520 = vmatprep.subr.mxu0 0.0
        %4521 = vmatpush1.msra.mxu0 0.0
        %4522 = vmatprep.subr.mxu0 0.0
        %4523 = vmatpush1.msra.mxu0 0.0
        %4524 = vmatprep.subr.mxu0 0.0
        %4525 = vmatpush1.msra.mxu0 0.0
        %4526 = vmatprep.subr.mxu0 0.0
        %4527 = vmatpush1.msra.mxu0 0.0
        %4528 = vmatprep.subr.mxu0 0.0
        %4529 = vmatpush1.msra.mxu0 0.0
        %4530 = vmatprep.subr.mxu0 0.0
        %4531 = vmatpush1.msra.mxu0 0.0
        %4532 = vmatprep.subr.mxu0 0.0
        %4533 = vmatpush1.msra.mxu0 0.0
        %4534 = vmatprep.subr.mxu0 0.0
        %4535 = vmatpush1.msra.mxu0 0.0
        %4536 = vmatprep.subr.mxu0 %v4209
        %4537 = vmatpush1.msra.mxu0 %v4208
        %4538 = vmatprep.subr.mxu0 %v4201
        %4539 = vmatpush1.msra.mxu0 %v4200
        %4540 = vmatprep.subr.mxu0 %v4193
        %4541 = vmatpush1.msra.mxu0 %v4192
        %4542 = vmatprep.subr.mxu0 %v4185
        %4543 = vmatpush1.msra.mxu0 %v4184
        %4544 = vmatprep.subr.mxu0 0.0
        %4545 = vmatpush2.msra.mxu0 0.0
        %4546 = vmatprep.subr.mxu0 0.0
        %4547 = vmatpush2.msra.mxu0 0.0
        %4548 = vmatprep.subr.mxu0 0.0
        %4549 = vmatpush2.msra.mxu0 0.0
        %4550 = vmatprep.subr.mxu0 0.0
        %4551 = vmatpush2.msra.mxu0 0.0
        %4552 = vmatprep.subr.mxu0 0.0
        %4553 = vmatpush2.msra.mxu0 0.0
        %4554 = vmatprep.subr.mxu0 0.0
        %4555 = vmatpush2.msra.mxu0 0.0
        %4556 = vmatprep.subr.mxu0 0.0
        %4557 = vmatpush2.msra.mxu0 0.0
        %4558 = vmatprep.subr.mxu0 0.0
        %4559 = vmatpush2.msra.mxu0 0.0
        %4560 = vmatprep.subr.mxu0 0.0
        %4561 = vmatpush2.msra.mxu0 0.0
        %4562 = vmatprep.subr.mxu0 0.0
        %4563 = vmatpush2.msra.mxu0 0.0
        %4564 = vmatprep.subr.mxu0 0.0
        %4565 = vmatpush2.msra.mxu0 0.0
        %4566 = vmatprep.subr.mxu0 0.0
        %4567 = vmatpush2.msra.mxu0 0.0
        %4568 = vmatprep.subr.mxu0 0.0
        %4569 = vmatpush2.msra.mxu0 0.0
        %4570 = vmatprep.subr.mxu0 0.0
        %4571 = vmatpush2.msra.mxu0 0.0
        %4572 = vmatprep.subr.mxu0 0.0
        %4573 = vmatpush2.msra.mxu0 0.0
        %4574 = vmatprep.subr.mxu0 0.0
        %4575 = vmatpush2.msra.mxu0 0.0
        %4576 = vmatprep.mubr.f32.mxu0 0.0
        %4577 = vmatmul.mubr.f32.gmra.mxu0 %v4510
        %v4578 = vpop.f32.mrf.mxu0
        %v4579 = vadd.f32 %v4293, %v4578
        %v4580 = vpop.f32.mrf.mxu0
        %v4581 = vadd.f32 %v4295, %v4580
        %4582 = vdwg.mxu0
        %4583 = vmatprep.subr.mxu0 0.0
        %4584 = vmatpush1.msra.mxu0 0.0
        %4585 = vmatprep.subr.mxu0 0.0
        %4586 = vmatpush1.msra.mxu0 0.0
        %4587 = vmatprep.subr.mxu0 0.0
        %4588 = vmatpush1.msra.mxu0 0.0
        %4589 = vmatprep.subr.mxu0 0.0
        %4590 = vmatpush1.msra.mxu0 0.0
        %4591 = vmatprep.subr.mxu0 0.0
        %4592 = vmatpush1.msra.mxu0 0.0
        %4593 = vmatprep.subr.mxu0 0.0
        %4594 = vmatpush1.msra.mxu0 0.0
        %4595 = vmatprep.subr.mxu0 0.0
        %4596 = vmatpush1.msra.mxu0 0.0
        %4597 = vmatprep.subr.mxu0 0.0
        %4598 = vmatpush1.msra.mxu0 0.0
        %4599 = vmatprep.subr.mxu0 0.0
        %4600 = vmatpush1.msra.mxu0 0.0
        %4601 = vmatprep.subr.mxu0 0.0
        %4602 = vmatpush1.msra.mxu0 0.0
        %4603 = vmatprep.subr.mxu0 0.0
        %4604 = vmatpush1.msra.mxu0 0.0
        %4605 = vmatprep.subr.mxu0 0.0
        %4606 = vmatpush1.msra.mxu0 0.0
        %4607 = vmatprep.subr.mxu0 %v4211
        %4608 = vmatpush1.msra.mxu0 %v4210
        %4609 = vmatprep.subr.mxu0 %v4203
        %4610 = vmatpush1.msra.mxu0 %v4202
        %4611 = vmatprep.subr.mxu0 %v4195
        %4612 = vmatpush1.msra.mxu0 %v4194
        %4613 = vmatprep.subr.mxu0 %v4187
        %4614 = vmatpush1.msra.mxu0 %v4186
        %4615 = vmatprep.subr.mxu0 0.0
        %4616 = vmatpush2.msra.mxu0 0.0
        %4617 = vmatprep.subr.mxu0 0.0
        %4618 = vmatpush2.msra.mxu0 0.0
        %4619 = vmatprep.subr.mxu0 0.0
        %4620 = vmatpush2.msra.mxu0 0.0
        %4621 = vmatprep.subr.mxu0 0.0
        %4622 = vmatpush2.msra.mxu0 0.0
        %4623 = vmatprep.subr.mxu0 0.0
        %4624 = vmatpush2.msra.mxu0 0.0
        %4625 = vmatprep.subr.mxu0 0.0
        %4626 = vmatpush2.msra.mxu0 0.0
        %4627 = vmatprep.subr.mxu0 0.0
        %4628 = vmatpush2.msra.mxu0 0.0
        %4629 = vmatprep.subr.mxu0 0.0
        %4630 = vmatpush2.msra.mxu0 0.0
        %4631 = vmatprep.subr.mxu0 0.0
        %4632 = vmatpush2.msra.mxu0 0.0
        %4633 = vmatprep.subr.mxu0 0.0
        %4634 = vmatpush2.msra.mxu0 0.0
        %4635 = vmatprep.subr.mxu0 0.0
        %4636 = vmatpush2.msra.mxu0 0.0
        %4637 = vmatprep.subr.mxu0 0.0
        %4638 = vmatpush2.msra.mxu0 0.0
        %4639 = vmatprep.subr.mxu0 0.0
        %4640 = vmatpush2.msra.mxu0 0.0
        %4641 = vmatprep.subr.mxu0 0.0
        %4642 = vmatpush2.msra.mxu0 0.0
        %4643 = vmatprep.subr.mxu0 0.0
        %4644 = vmatpush2.msra.mxu0 0.0
        %4645 = vmatprep.subr.mxu0 0.0
        %4646 = vmatpush2.msra.mxu0 0.0
        %4647 = vmatprep.mubr.f32.mxu0 0.0
        %4648 = vmatmul.mubr.f32.gmra.mxu0 %v4510
        %v4649 = vpop.f32.mrf.mxu0
        %v4650 = vadd.f32 %v4364, %v4649
        %v4651 = vpop.f32.mrf.mxu0
        %v4652 = vadd.f32 %v4366, %v4651
        %4653 = vdwg.mxu0
        %4654 = vmatprep.subr.mxu0 0.0
        %4655 = vmatpush1.msra.mxu0 0.0
        %4656 = vmatprep.subr.mxu0 0.0
        %4657 = vmatpush1.msra.mxu0 0.0
        %4658 = vmatprep.subr.mxu0 0.0
        %4659 = vmatpush1.msra.mxu0 0.0
        %4660 = vmatprep.subr.mxu0 0.0
        %4661 = vmatpush1.msra.mxu0 0.0
        %4662 = vmatprep.subr.mxu0 0.0
        %4663 = vmatpush1.msra.mxu0 0.0
        %4664 = vmatprep.subr.mxu0 0.0
        %4665 = vmatpush1.msra.mxu0 0.0
        %4666 = vmatprep.subr.mxu0 0.0
        %4667 = vmatpush1.msra.mxu0 0.0
        %4668 = vmatprep.subr.mxu0 0.0
        %4669 = vmatpush1.msra.mxu0 0.0
        %4670 = vmatprep.subr.mxu0 0.0
        %4671 = vmatpush1.msra.mxu0 0.0
        %4672 = vmatprep.subr.mxu0 0.0
        %4673 = vmatpush1.msra.mxu0 0.0
        %4674 = vmatprep.subr.mxu0 0.0
        %4675 = vmatpush1.msra.mxu0 0.0
        %4676 = vmatprep.subr.mxu0 0.0
        %4677 = vmatpush1.msra.mxu0 0.0
        %4678 = vmatprep.subr.mxu0 %v4213
        %4679 = vmatpush1.msra.mxu0 %v4212
        %4680 = vmatprep.subr.mxu0 %v4205
        %4681 = vmatpush1.msra.mxu0 %v4204
        %4682 = vmatprep.subr.mxu0 %v4197
        %4683 = vmatpush1.msra.mxu0 %v4196
        %4684 = vmatprep.subr.mxu0 %v4189
        %4685 = vmatpush1.msra.mxu0 %v4188
        %4686 = vmatprep.subr.mxu0 0.0
        %4687 = vmatpush2.msra.mxu0 0.0
        %4688 = vmatprep.subr.mxu0 0.0
        %4689 = vmatpush2.msra.mxu0 0.0
        %4690 = vmatprep.subr.mxu0 0.0
        %4691 = vmatpush2.msra.mxu0 0.0
        %4692 = vmatprep.subr.mxu0 0.0
        %4693 = vmatpush2.msra.mxu0 0.0
        %4694 = vmatprep.subr.mxu0 0.0
        %4695 = vmatpush2.msra.mxu0 0.0
        %4696 = vmatprep.subr.mxu0 0.0
        %4697 = vmatpush2.msra.mxu0 0.0
        %4698 = vmatprep.subr.mxu0 0.0
        %4699 = vmatpush2.msra.mxu0 0.0
        %4700 = vmatprep.subr.mxu0 0.0
        %4701 = vmatpush2.msra.mxu0 0.0
        %4702 = vmatprep.subr.mxu0 0.0
        %4703 = vmatpush2.msra.mxu0 0.0
        %4704 = vmatprep.subr.mxu0 0.0
        %4705 = vmatpush2.msra.mxu0 0.0
        %4706 = vmatprep.subr.mxu0 0.0
        %4707 = vmatpush2.msra.mxu0 0.0
        %4708 = vmatprep.subr.mxu0 0.0
        %4709 = vmatpush2.msra.mxu0 0.0
        %4710 = vmatprep.subr.mxu0 0.0
        %4711 = vmatpush2.msra.mxu0 0.0
        %4712 = vmatprep.subr.mxu0 0.0
        %4713 = vmatpush2.msra.mxu0 0.0
        %4714 = vmatprep.subr.mxu0 0.0
        %4715 = vmatpush2.msra.mxu0 0.0
        %4716 = vmatprep.subr.mxu0 0.0
        %4717 = vmatpush2.msra.mxu0 0.0
        %4718 = vmatprep.mubr.f32.mxu0 0.0
        %4719 = vmatmul.mubr.f32.gmra.mxu0 %v4510
        %v4720 = vpop.f32.mrf.mxu0
        %v4721 = vadd.f32 %v4435, %v4720
        %v4722 = vpop.f32.mrf.mxu0
        %v4723 = vadd.f32 %v4437, %v4722
        %4724 = vdwg.mxu0
        %4725 = vmatprep.subr.mxu0 0.0
        %4726 = vmatpush1.msra.mxu0 0.0
        %4727 = vmatprep.subr.mxu0 0.0
        %4728 = vmatpush1.msra.mxu0 0.0
        %4729 = vmatprep.subr.mxu0 0.0
        %4730 = vmatpush1.msra.mxu0 0.0
        %4731 = vmatprep.subr.mxu0 0.0
        %4732 = vmatpush1.msra.mxu0 0.0
        %4733 = vmatprep.subr.mxu0 0.0
        %4734 = vmatpush1.msra.mxu0 0.0
        %4735 = vmatprep.subr.mxu0 0.0
        %4736 = vmatpush1.msra.mxu0 0.0
        %4737 = vmatprep.subr.mxu0 0.0
        %4738 = vmatpush1.msra.mxu0 0.0
        %4739 = vmatprep.subr.mxu0 0.0
        %4740 = vmatpush1.msra.mxu0 0.0
        %4741 = vmatprep.subr.mxu0 0.0
        %4742 = vmatpush1.msra.mxu0 0.0
        %4743 = vmatprep.subr.mxu0 0.0
        %4744 = vmatpush1.msra.mxu0 0.0
        %4745 = vmatprep.subr.mxu0 0.0
        %4746 = vmatpush1.msra.mxu0 0.0
        %4747 = vmatprep.subr.mxu0 0.0
        %4748 = vmatpush1.msra.mxu0 0.0
        %4749 = vmatprep.subr.mxu0 %v4215
        %4750 = vmatpush1.msra.mxu0 %v4214
        %4751 = vmatprep.subr.mxu0 %v4207
        %4752 = vmatpush1.msra.mxu0 %v4206
        %4753 = vmatprep.subr.mxu0 %v4199
        %4754 = vmatpush1.msra.mxu0 %v4198
        %4755 = vmatprep.subr.mxu0 %v4191
        %4756 = vmatpush1.msra.mxu0 %v4190
        %4757 = vmatprep.subr.mxu0 0.0
        %4758 = vmatpush2.msra.mxu0 0.0
        %4759 = vmatprep.subr.mxu0 0.0
        %4760 = vmatpush2.msra.mxu0 0.0
        %4761 = vmatprep.subr.mxu0 0.0
        %4762 = vmatpush2.msra.mxu0 0.0
        %4763 = vmatprep.subr.mxu0 0.0
        %4764 = vmatpush2.msra.mxu0 0.0
        %4765 = vmatprep.subr.mxu0 0.0
        %4766 = vmatpush2.msra.mxu0 0.0
        %4767 = vmatprep.subr.mxu0 0.0
        %4768 = vmatpush2.msra.mxu0 0.0
        %4769 = vmatprep.subr.mxu0 0.0
        %4770 = vmatpush2.msra.mxu0 0.0
        %4771 = vmatprep.subr.mxu0 0.0
        %4772 = vmatpush2.msra.mxu0 0.0
        %4773 = vmatprep.subr.mxu0 0.0
        %4774 = vmatpush2.msra.mxu0 0.0
        %4775 = vmatprep.subr.mxu0 0.0
        %4776 = vmatpush2.msra.mxu0 0.0
        %4777 = vmatprep.subr.mxu0 0.0
        %4778 = vmatpush2.msra.mxu0 0.0
        %4779 = vmatprep.subr.mxu0 0.0
        %4780 = vmatpush2.msra.mxu0 0.0
        %4781 = vmatprep.subr.mxu0 0.0
        %4782 = vmatpush2.msra.mxu0 0.0
        %4783 = vmatprep.subr.mxu0 0.0
        %4784 = vmatpush2.msra.mxu0 0.0
        %4785 = vmatprep.subr.mxu0 0.0
        %4786 = vmatpush2.msra.mxu0 0.0
        %4787 = vmatprep.subr.mxu0 0.0
        %4788 = vmatpush2.msra.mxu0 0.0
        %4789 = vmatprep.mubr.f32.mxu0 0.0
        %4790 = vmatmul.mubr.f32.gmra.mxu0 %v4510
        %v4791 = vpop.f32.mrf.mxu0
        %v4792 = vadd.f32 %v4506, %v4791
        %v4793 = vpop.f32.mrf.mxu0
        %v4794 = vadd.f32 %v4508, %v4793
        %4795 = vdwg.mxu0
        %4796 = vrot.lane.b32.xlu0 %v4221, 64
        %v4797 = vpop.permute.xlu0 %4796
        %v4798 = vsel %vm353, %v4797, 0
        %4800 = vmatprep.subr.mxu0 0.0
        %4801 = vmatpush1.msra.mxu0 0.0
        %4802 = vmatprep.subr.mxu0 0.0
        %4803 = vmatpush1.msra.mxu0 0.0
        %4804 = vmatprep.subr.mxu0 0.0
        %4805 = vmatpush1.msra.mxu0 0.0
        %4806 = vmatprep.subr.mxu0 0.0
        %4807 = vmatpush1.msra.mxu0 0.0
        %4808 = vmatprep.subr.mxu0 0.0
        %4809 = vmatpush1.msra.mxu0 0.0
        %4810 = vmatprep.subr.mxu0 0.0
        %4811 = vmatpush1.msra.mxu0 0.0
        %4812 = vmatprep.subr.mxu0 0.0
        %4813 = vmatpush1.msra.mxu0 0.0
        %4814 = vmatprep.subr.mxu0 0.0
        %4815 = vmatpush1.msra.mxu0 0.0
        %4816 = vmatprep.subr.mxu0 0.0
        %4817 = vmatpush1.msra.mxu0 0.0
        %4818 = vmatprep.subr.mxu0 0.0
        %4819 = vmatpush1.msra.mxu0 0.0
        %4820 = vmatprep.subr.mxu0 0.0
        %4821 = vmatpush1.msra.mxu0 0.0
        %4822 = vmatprep.subr.mxu0 0.0
        %4823 = vmatpush1.msra.mxu0 0.0
        %4824 = vmatprep.subr.mxu0 0.0
        %4825 = vmatpush1.msra.mxu0 0.0
        %4826 = vmatprep.subr.mxu0 %v371
        %4827 = vmatpush1.msra.mxu0 %v368
        %4828 = vmatprep.subr.mxu0 %v310
        %4829 = vmatpush1.msra.mxu0 %v309
        %4830 = vmatprep.subr.mxu0 %v302
        %4831 = vmatpush1.msra.mxu0 %v301
        %4832 = vmatprep.subr.mxu0 0.0
        %4833 = vmatpush2.msra.mxu0 0.0
        %4834 = vmatprep.subr.mxu0 0.0
        %4835 = vmatpush2.msra.mxu0 0.0
        %4836 = vmatprep.subr.mxu0 0.0
        %4837 = vmatpush2.msra.mxu0 0.0
        %4838 = vmatprep.subr.mxu0 0.0
        %4839 = vmatpush2.msra.mxu0 0.0
        %4840 = vmatprep.subr.mxu0 0.0
        %4841 = vmatpush2.msra.mxu0 0.0
        %4842 = vmatprep.subr.mxu0 0.0
        %4843 = vmatpush2.msra.mxu0 0.0
        %4844 = vmatprep.subr.mxu0 0.0
        %4845 = vmatpush2.msra.mxu0 0.0
        %4846 = vmatprep.subr.mxu0 0.0
        %4847 = vmatpush2.msra.mxu0 0.0
        %4848 = vmatprep.subr.mxu0 0.0
        %4849 = vmatpush2.msra.mxu0 0.0
        %4850 = vmatprep.subr.mxu0 0.0
        %4851 = vmatpush2.msra.mxu0 0.0
        %4852 = vmatprep.subr.mxu0 0.0
        %4853 = vmatpush2.msra.mxu0 0.0
        %4854 = vmatprep.subr.mxu0 0.0
        %4855 = vmatpush2.msra.mxu0 0.0
        %4856 = vmatprep.subr.mxu0 0.0
        %4857 = vmatpush2.msra.mxu0 0.0
        %4858 = vmatprep.subr.mxu0 0.0
        %4859 = vmatpush2.msra.mxu0 0.0
        %4860 = vmatprep.subr.mxu0 0.0
        %4861 = vmatpush2.msra.mxu0 0.0
        %4862 = vmatprep.subr.mxu0 0.0
        %4863 = vmatpush2.msra.mxu0 0.0
        %4864 = vmatprep.mubr.f32.mxu0 0.0
        %4865 = vmatmul.mubr.f32.gmra.mxu0 %v4798
        %v4866 = vpop.f32.mrf.mxu0
        %v4867 = vadd.f32 0.0, %v4866
        %v4868 = vpop.f32.mrf.mxu0
        %v4869 = vadd.f32 0.0, %v4868
        %4870 = vdwg.mxu0
        %4871 = vmatprep.subr.mxu0 0.0
        %4872 = vmatpush1.msra.mxu0 0.0
        %4873 = vmatprep.subr.mxu0 0.0
        %4874 = vmatpush1.msra.mxu0 0.0
        %4875 = vmatprep.subr.mxu0 0.0
        %4876 = vmatpush1.msra.mxu0 0.0
        %4877 = vmatprep.subr.mxu0 0.0
        %4878 = vmatpush1.msra.mxu0 0.0
        %4879 = vmatprep.subr.mxu0 0.0
        %4880 = vmatpush1.msra.mxu0 0.0
        %4881 = vmatprep.subr.mxu0 0.0
        %4882 = vmatpush1.msra.mxu0 0.0
        %4883 = vmatprep.subr.mxu0 0.0
        %4884 = vmatpush1.msra.mxu0 0.0
        %4885 = vmatprep.subr.mxu0 0.0
        %4886 = vmatpush1.msra.mxu0 0.0
        %4887 = vmatprep.subr.mxu0 0.0
        %4888 = vmatpush1.msra.mxu0 0.0
        %4889 = vmatprep.subr.mxu0 0.0
        %4890 = vmatpush1.msra.mxu0 0.0
        %4891 = vmatprep.subr.mxu0 0.0
        %4892 = vmatpush1.msra.mxu0 0.0
        %4893 = vmatprep.subr.mxu0 0.0
        %4894 = vmatpush1.msra.mxu0 0.0
        %4895 = vmatprep.subr.mxu0 0.0
        %4896 = vmatpush1.msra.mxu0 0.0
        %4897 = vmatprep.subr.mxu0 %v377
        %4898 = vmatpush1.msra.mxu0 %v374
        %4899 = vmatprep.subr.mxu0 %v312
        %4900 = vmatpush1.msra.mxu0 %v311
        %4901 = vmatprep.subr.mxu0 %v304
        %4902 = vmatpush1.msra.mxu0 %v303
        %4903 = vmatprep.subr.mxu0 0.0
        %4904 = vmatpush2.msra.mxu0 0.0
        %4905 = vmatprep.subr.mxu0 0.0
        %4906 = vmatpush2.msra.mxu0 0.0
        %4907 = vmatprep.subr.mxu0 0.0
        %4908 = vmatpush2.msra.mxu0 0.0
        %4909 = vmatprep.subr.mxu0 0.0
        %4910 = vmatpush2.msra.mxu0 0.0
        %4911 = vmatprep.subr.mxu0 0.0
        %4912 = vmatpush2.msra.mxu0 0.0
        %4913 = vmatprep.subr.mxu0 0.0
        %4914 = vmatpush2.msra.mxu0 0.0
        %4915 = vmatprep.subr.mxu0 0.0
        %4916 = vmatpush2.msra.mxu0 0.0
        %4917 = vmatprep.subr.mxu0 0.0
        %4918 = vmatpush2.msra.mxu0 0.0
        %4919 = vmatprep.subr.mxu0 0.0
        %4920 = vmatpush2.msra.mxu0 0.0
        %4921 = vmatprep.subr.mxu0 0.0
        %4922 = vmatpush2.msra.mxu0 0.0
        %4923 = vmatprep.subr.mxu0 0.0
        %4924 = vmatpush2.msra.mxu0 0.0
        %4925 = vmatprep.subr.mxu0 0.0
        %4926 = vmatpush2.msra.mxu0 0.0
        %4927 = vmatprep.subr.mxu0 0.0
        %4928 = vmatpush2.msra.mxu0 0.0
        %4929 = vmatprep.subr.mxu0 0.0
        %4930 = vmatpush2.msra.mxu0 0.0
        %4931 = vmatprep.subr.mxu0 0.0
        %4932 = vmatpush2.msra.mxu0 0.0
        %4933 = vmatprep.subr.mxu0 0.0
        %4934 = vmatpush2.msra.mxu0 0.0
        %4935 = vmatprep.mubr.f32.mxu0 0.0
        %4936 = vmatmul.mubr.f32.gmra.mxu0 %v4798
        %v4937 = vpop.f32.mrf.mxu0
        %v4938 = vadd.f32 0.0, %v4937
        %v4939 = vpop.f32.mrf.mxu0
        %v4940 = vadd.f32 0.0, %v4939
        %4941 = vdwg.mxu0
        %4942 = vmatprep.subr.mxu0 0.0
        %4943 = vmatpush1.msra.mxu0 0.0
        %4944 = vmatprep.subr.mxu0 0.0
        %4945 = vmatpush1.msra.mxu0 0.0
        %4946 = vmatprep.subr.mxu0 0.0
        %4947 = vmatpush1.msra.mxu0 0.0
        %4948 = vmatprep.subr.mxu0 0.0
        %4949 = vmatpush1.msra.mxu0 0.0
        %4950 = vmatprep.subr.mxu0 0.0
        %4951 = vmatpush1.msra.mxu0 0.0
        %4952 = vmatprep.subr.mxu0 0.0
        %4953 = vmatpush1.msra.mxu0 0.0
        %4954 = vmatprep.subr.mxu0 0.0
        %4955 = vmatpush1.msra.mxu0 0.0
        %4956 = vmatprep.subr.mxu0 0.0
        %4957 = vmatpush1.msra.mxu0 0.0
        %4958 = vmatprep.subr.mxu0 0.0
        %4959 = vmatpush1.msra.mxu0 0.0
        %4960 = vmatprep.subr.mxu0 0.0
        %4961 = vmatpush1.msra.mxu0 0.0
        %4962 = vmatprep.subr.mxu0 0.0
        %4963 = vmatpush1.msra.mxu0 0.0
        %4964 = vmatprep.subr.mxu0 0.0
        %4965 = vmatpush1.msra.mxu0 0.0
        %4966 = vmatprep.subr.mxu0 0.0
        %4967 = vmatpush1.msra.mxu0 0.0
        %4968 = vmatprep.subr.mxu0 %v383
        %4969 = vmatpush1.msra.mxu0 %v380
        %4970 = vmatprep.subr.mxu0 %v314
        %4971 = vmatpush1.msra.mxu0 %v313
        %4972 = vmatprep.subr.mxu0 %v306
        %4973 = vmatpush1.msra.mxu0 %v305
        %4974 = vmatprep.subr.mxu0 0.0
        %4975 = vmatpush2.msra.mxu0 0.0
        %4976 = vmatprep.subr.mxu0 0.0
        %4977 = vmatpush2.msra.mxu0 0.0
        %4978 = vmatprep.subr.mxu0 0.0
        %4979 = vmatpush2.msra.mxu0 0.0
        %4980 = vmatprep.subr.mxu0 0.0
        %4981 = vmatpush2.msra.mxu0 0.0
        %4982 = vmatprep.subr.mxu0 0.0
        %4983 = vmatpush2.msra.mxu0 0.0
        %4984 = vmatprep.subr.mxu0 0.0
        %4985 = vmatpush2.msra.mxu0 0.0
        %4986 = vmatprep.subr.mxu0 0.0
        %4987 = vmatpush2.msra.mxu0 0.0
        %4988 = vmatprep.subr.mxu0 0.0
        %4989 = vmatpush2.msra.mxu0 0.0
        %4990 = vmatprep.subr.mxu0 0.0
        %4991 = vmatpush2.msra.mxu0 0.0
        %4992 = vmatprep.subr.mxu0 0.0
        %4993 = vmatpush2.msra.mxu0 0.0
        %4994 = vmatprep.subr.mxu0 0.0
        %4995 = vmatpush2.msra.mxu0 0.0
        %4996 = vmatprep.subr.mxu0 0.0
        %4997 = vmatpush2.msra.mxu0 0.0
        %4998 = vmatprep.subr.mxu0 0.0
        %4999 = vmatpush2.msra.mxu0 0.0
        %5000 = vmatprep.subr.mxu0 0.0
        %5001 = vmatpush2.msra.mxu0 0.0
        %5002 = vmatprep.subr.mxu0 0.0
        %5003 = vmatpush2.msra.mxu0 0.0
        %5004 = vmatprep.subr.mxu0 0.0
        %5005 = vmatpush2.msra.mxu0 0.0
        %5006 = vmatprep.mubr.f32.mxu0 0.0
        %5007 = vmatmul.mubr.f32.gmra.mxu0 %v4798
        %v5008 = vpop.f32.mrf.mxu0
        %v5009 = vadd.f32 0.0, %v5008
        %v5010 = vpop.f32.mrf.mxu0
        %v5011 = vadd.f32 0.0, %v5010
        %5012 = vdwg.mxu0
        %5013 = vmatprep.subr.mxu0 0.0
        %5014 = vmatpush1.msra.mxu0 0.0
        %5015 = vmatprep.subr.mxu0 0.0
        %5016 = vmatpush1.msra.mxu0 0.0
        %5017 = vmatprep.subr.mxu0 0.0
        %5018 = vmatpush1.msra.mxu0 0.0
        %5019 = vmatprep.subr.mxu0 0.0
        %5020 = vmatpush1.msra.mxu0 0.0
        %5021 = vmatprep.subr.mxu0 0.0
        %5022 = vmatpush1.msra.mxu0 0.0
        %5023 = vmatprep.subr.mxu0 0.0
        %5024 = vmatpush1.msra.mxu0 0.0
        %5025 = vmatprep.subr.mxu0 0.0
        %5026 = vmatpush1.msra.mxu0 0.0
        %5027 = vmatprep.subr.mxu0 0.0
        %5028 = vmatpush1.msra.mxu0 0.0
        %5029 = vmatprep.subr.mxu0 0.0
        %5030 = vmatpush1.msra.mxu0 0.0
        %5031 = vmatprep.subr.mxu0 0.0
        %5032 = vmatpush1.msra.mxu0 0.0
        %5033 = vmatprep.subr.mxu0 0.0
        %5034 = vmatpush1.msra.mxu0 0.0
        %5035 = vmatprep.subr.mxu0 0.0
        %5036 = vmatpush1.msra.mxu0 0.0
        %5037 = vmatprep.subr.mxu0 0.0
        %5038 = vmatpush1.msra.mxu0 0.0
        %5039 = vmatprep.subr.mxu0 %v389
        %5040 = vmatpush1.msra.mxu0 %v386
        %5041 = vmatprep.subr.mxu0 %v316
        %5042 = vmatpush1.msra.mxu0 %v315
        %5043 = vmatprep.subr.mxu0 %v308
        %5044 = vmatpush1.msra.mxu0 %v307
        %5045 = vmatprep.subr.mxu0 0.0
        %5046 = vmatpush2.msra.mxu0 0.0
        %5047 = vmatprep.subr.mxu0 0.0
        %5048 = vmatpush2.msra.mxu0 0.0
        %5049 = vmatprep.subr.mxu0 0.0
        %5050 = vmatpush2.msra.mxu0 0.0
        %5051 = vmatprep.subr.mxu0 0.0
        %5052 = vmatpush2.msra.mxu0 0.0
        %5053 = vmatprep.subr.mxu0 0.0
        %5054 = vmatpush2.msra.mxu0 0.0
        %5055 = vmatprep.subr.mxu0 0.0
        %5056 = vmatpush2.msra.mxu0 0.0
        %5057 = vmatprep.subr.mxu0 0.0
        %5058 = vmatpush2.msra.mxu0 0.0
        %5059 = vmatprep.subr.mxu0 0.0
        %5060 = vmatpush2.msra.mxu0 0.0
        %5061 = vmatprep.subr.mxu0 0.0
        %5062 = vmatpush2.msra.mxu0 0.0
        %5063 = vmatprep.subr.mxu0 0.0
        %5064 = vmatpush2.msra.mxu0 0.0
        %5065 = vmatprep.subr.mxu0 0.0
        %5066 = vmatpush2.msra.mxu0 0.0
        %5067 = vmatprep.subr.mxu0 0.0
        %5068 = vmatpush2.msra.mxu0 0.0
        %5069 = vmatprep.subr.mxu0 0.0
        %5070 = vmatpush2.msra.mxu0 0.0
        %5071 = vmatprep.subr.mxu0 0.0
        %5072 = vmatpush2.msra.mxu0 0.0
        %5073 = vmatprep.subr.mxu0 0.0
        %5074 = vmatpush2.msra.mxu0 0.0
        %5075 = vmatprep.subr.mxu0 0.0
        %5076 = vmatpush2.msra.mxu0 0.0
        %5077 = vmatprep.mubr.f32.mxu0 0.0
        %5078 = vmatmul.mubr.f32.gmra.mxu0 %v4798
        %v5079 = vpop.f32.mrf.mxu0
        %v5080 = vadd.f32 0.0, %v5079
        %v5081 = vpop.f32.mrf.mxu0
        %v5082 = vadd.f32 0.0, %v5081
        %5083 = vdwg.mxu0
        %v5084 = vadd.f32 %v4579, %v4867
        %v5085 = vadd.f32 %v4581, %v4869
        %v5086 = vadd.f32 %v4650, %v4938
        %v5087 = vadd.f32 %v4652, %v4940
        %v5088 = vadd.f32 %v4721, %v5009
        %v5089 = vadd.f32 %v4723, %v5011
        %v5090 = vadd.f32 %v4792, %v5080
        %v5091 = vadd.f32 %v4794, %v5082
        %v5092 = vld [vmem:[#allocation2] sm:$0x1]
        %5094 = vset.pattern.permute.xlu0 0
        %5095 = vperm.xlu0 %5094, %v5092
        %v5096 = vpop.permute.xlu0 %5095
        %v5098 = vlaneseq
        %v5099 = vshrl.u32 %v5098, 7
        %v5100 = vsub.s32 0, %v5099
        %v5101 = vrot.slane %v5096, %v5100
        %v5102 = vadd.f32 %v5084, %v5101
        %v5103 = vadd.f32 %v5085, %v5101
        %v5104 = vadd.f32 %v5086, %v5101
        %v5105 = vadd.f32 %v5087, %v5101
        %v5106 = vadd.f32 %v5088, %v5101
        %v5107 = vadd.f32 %v5089, %v5101
        %v5108 = vadd.f32 %v5090, %v5101
        %v5109 = vadd.f32 %v5091, %v5101
        %v5110 = vtanh.pop %v5102
        %v5111 = vtanh.pop %v5103
        %v5112 = vtanh.pop %v5104
        %v5113 = vtanh.pop %v5105
        %v5114 = vtanh.pop %v5106
        %v5115 = vtanh.pop %v5107
        %v5116 = vtanh.pop %v5108
        %v5117 = vtanh.pop %v5109
        %v5118 = vadd.f32 %v5110, 1.0
        %v5119 = vadd.f32 %v5111, 1.0
        %v5120 = vadd.f32 %v5112, 1.0
        %v5121 = vadd.f32 %v5113, 1.0
        %v5122 = vadd.f32 %v5114, 1.0
        %v5123 = vadd.f32 %v5115, 1.0
        %v5124 = vadd.f32 %v5116, 1.0
        %v5125 = vadd.f32 %v5117, 1.0
        %v5126 = vmul.f32 %v5118, 0.5
        %v5127 = vmul.f32 %v5119, 0.5
        %v5128 = vmul.f32 %v5120, 0.5
        %v5129 = vmul.f32 %v5121, 0.5
        %v5130 = vmul.f32 %v5122, 0.5
        %v5131 = vmul.f32 %v5123, 0.5
        %v5132 = vmul.f32 %v5124, 0.5
        %v5133 = vmul.f32 %v5125, 0.5
        %v5142 = vcombine.low %v5126, %v5127
        %v5143 = vcombine.low %v5128, %v5129
        %v5144 = vcombine.low %v5130, %v5131
        %v5145 = vcombine.low %v5132, %v5133
        %v5147 = vunpack.c.l.s4 1966171168
        %v5148 = vunpack.c.0.s8 %v5147
        %v5149 = vlaneseq
        %v5150 = vshrl.u32 %v5149, 7
        %v5151 = vsub.s32 %v5148, %v5150
        %v5152 = vrot.slane %v5142, %v5151
        %v5154 = vunpack.c.l.s4 1966171168
        %v5155 = vunpack.c.0.s8 %v5154
        %v5156 = vlaneseq
        %v5157 = vshrl.u32 %v5156, 7
        %v5158 = vsub.s32 %v5155, %v5157
        %v5159 = vrot.slane %v5143, %v5158
        %v5161 = vunpack.c.l.s4 1966171168
        %v5162 = vunpack.c.0.s8 %v5161
        %v5163 = vlaneseq
        %v5164 = vshrl.u32 %v5163, 7
        %v5165 = vsub.s32 %v5162, %v5164
        %v5166 = vrot.slane %v5144, %v5165
        %v5168 = vunpack.c.l.s4 1966171168
        %v5169 = vunpack.c.0.s8 %v5168
        %v5170 = vlaneseq
        %v5171 = vshrl.u32 %v5170, 7
        %v5172 = vsub.s32 %v5169, %v5171
        %v5173 = vrot.slane %v5145, %v5172
        %v5174 = vcombine.low %v5152, %v5159
        %v5175 = vcombine.low %v5166, %v5173
        %v5177 = vunpack.c.l.s4 1966171168
        %v5178 = vunpack.c.0.s8 %v5177
        %v5179 = vlaneseq
        %v5180 = vshrl.u32 %v5179, 7
        %v5181 = vsub.s32 %v5178, %v5180
        %v5182 = vrot.slane %v5174, %v5181
        %v5184 = vunpack.c.l.s4 1966171168
        %v5185 = vunpack.c.0.s8 %v5184
        %v5186 = vlaneseq
        %v5187 = vshrl.u32 %v5186, 7
        %v5188 = vsub.s32 %v5185, %v5187
        %v5189 = vrot.slane %v5175, %v5188
        %v5190 = vcombine.low %v5182, %v5189
        %5192 = vst [vmem:[%s298] sm:$0xff] %v5190
        %s5193 = sand.u32 %s186, 1
        %s5194 = scalar_lea.sflag [#allocation5], %s5193
        %s5195 = sand.u32 %s186, 1
        %s5196 = smul.addr %s5195, 8
        %s5197 = scalar_lea.vmem [#allocation6], %s5196
        // Predicated region
        $region53: #{tpu_custom_call.1} parent=47 // pred_check
          %p5198 = pneg %p196
        $region54: #{tpu_custom_call.1} parent=47 // pred_check_branch
          %5200 = sbr.rel (%p5198) target = $region56
        $region55: #{tpu_custom_call.1} parent=47 // pred_region
          %s5201 = smul.u32 8, %s26
          %s5203 = ssub.s32 128, 128
          %5204 = vsyncadd %s5194, %s5203
          %s5205 = smul.addr %s5201, 16
          %s5206 = scalar_lea.hbm %s7, %s5205
          %s5208 = sshll.u32 %s5197, 4
          %s5209 = int_to_ptr.vmem [resolvable:$true] %s5208
          %5211 = dma.vmem_to_hbm [thread:$0]  %s5209, 128, %s5206, %s5194
        $region56: #{tpu_custom_call.1} parent=47 // pred_fallthru
          _
      $region48: #{tpu_custom_call.1} parent=5 // pred_fallthru
        _
      %p5212 = scmp.le.s32.totalorder 2, %s21
      // Predicated region
      $region57: #{tpu_custom_call.1} parent=5 // pred_check
        %p5213 = pneg %p5212
      $region58: #{tpu_custom_call.1} parent=5 // pred_check_branch
        %5215 = sbr.rel (%p5213) target = $region60
      $region59: #{tpu_custom_call.1} parent=5 // pred_region
        %s5216 = ssub.s32 %s21, 2
        // Predicated region
        $region61: #{tpu_custom_call.1} parent=59 // pred_check
          %p5217 = pneg %p202
        $region62: #{tpu_custom_call.1} parent=59 // pred_check_branch
          %5219 = sbr.rel (%p5217) target = $region64
        $region63: #{tpu_custom_call.1} parent=59 // pred_region
          %s5220 = sand.u32 %s187, 1
          %s5221 = scalar_lea.sflag [#allocation5], %s5220
          %s5222 = sand.u32 %s187, 1
          %s5223 = smul.addr %s5222, 8
          %s5224 = scalar_lea.vmem [#allocation6], %s5223
          %5225 = dma.done %s5221, 128
        $region64: #{tpu_custom_call.1} parent=59 // pred_fallthru
          _
      $region60: #{tpu_custom_call.1} parent=5 // pred_fallthru
        _
    $region6: #{tpu_custom_call.1} parent=1 // loop_footer
      %s25 = sadd.s32 1, %s21
    $region7: #{tpu_custom_call.1} parent=1 // loop_footer_branch
      %20 = sbr.rel target = $region3
    $region8: #{tpu_custom_call.1} parent=1 // loop_exit
      _
    %5226 = vsyncpa [#allocation4], 1
    %s5227 = scalar_lea.sflag [#allocation4], 1
    %5228 = vsyncpa %s5227, 1
    %5229 = vsyncpa [#allocation5], 1
    %s5230 = scalar_lea.sflag [#allocation5], 1
    %5231 = vsyncpa %s5230, 1

</llo_original>
